<compile_context>
chip_gen: v7x
topology: tpu7x:2x2x1
jax: 0.10.0
libtpu: 0.0.40
codegen_flags: <defaults>
</compile_context>

<pallas_src>
import functools

import jax
import jax.numpy as jnp
import numpy as np
from jax import lax
from jax.experimental import pallas as pl
from jax.experimental.pallas import tpu as pltpu

LN_EPS = 1e-5  # nn.TransformerEncoderLayer default layer_norm_eps


def _round_up(x, m):
    return ((x + m - 1) // m) * m


# ----------------------------- shared math helpers -----------------------------
def _mm(x, w):
    """MXU matmul; weights may be pre-cast (bf16) in the wrapper, f32 accumulation."""
    return jnp.dot(x.astype(w.dtype), w, preferred_element_type=jnp.float32)


def _layernorm(x, g, b):
    # Single-pass LN: one reduction pass computing E[x] and E[x^2].
    mu = jnp.mean(x, axis=-1, keepdims=True)
    mu2 = jnp.mean(x * x, axis=-1, keepdims=True)
    var = jnp.maximum(mu2 - mu * mu, 0.0)
    return (x - mu) * lax.rsqrt(var + LN_EPS) * g + b


# --------------------------------- Pallas kernel --------------------------------
def fusion_kernel(num_layers,
                  text_ref, img_ref, clip_ref, sim_ref,
                  wt_ref, bt_ref, wi_ref, bi_ref, wc_ref, bc_ref, ws_ref, bs_ref,
                  pe_ref,
                  wsa_ref, bsa_ref,
                  ln1w_ref, ln1b_ref, w1_ref, b1_ref, w2_ref, b2_ref,
                  ln2w_ref, ln2b_ref,
                  fc1w_ref, fc1b_ref, fc2w_ref, fc2b_ref,
                  out_ref):
    TB = text_ref.shape[0]
    H = pe_ref.shape[1]

    # --- input projections (different contraction dim per stream) ---
    t = _mm(text_ref[...], wt_ref[...]) + bt_ref[...]
    i = _mm(img_ref[...], wi_ref[...]) + bi_ref[...]
    c = _mm(clip_ref[...], wc_ref[...]) + bc_ref[...]
    # similarity_proj: Linear(1, H) on (TB, 1) == broadcasted outer product (VPU, f32).
    s = sim_ref[...] * ws_ref[...] + bs_ref[...]

    # --- stack the 4 streams along the sublane/batch axis: ONE encoder pass ---
    # pe row 0 is added once here (hoisted out of the layer loop).
    x = jnp.concatenate([t, i, c, s], axis=0) + pe_ref[...]          # (4*TB, H), f32

    def layer_step(l, x):
        # seq_len == 1  =>  MHA(x) == x @ (wv @ wo) + (bv @ wo + bo), folded in wrapper.
        sa = _mm(x, wsa_ref[l]) + bsa_ref[l]
        x = _layernorm(x + sa, ln1w_ref[l], ln1b_ref[l])             # f32
        h = jnp.maximum(_mm(x, w1_ref[l]) + b1_ref[l], 0.0)
        ff = _mm(h, w2_ref[l]) + b2_ref[l]
        return _layernorm(x + ff, ln2w_ref[l], ln2b_ref[l])          # f32

    # Full unroll only for small L; larger L would inflate code size / vreg pressure.
    unroll = num_layers if num_layers <= 4 else 2
    x = lax.fori_loop(0, num_layers, layer_step, x, unroll=unroll)

    # --- classifier head ---
    if H >= 128:
        # Lane-dense K=4H dot on the re-concatenated features.
        fused = jnp.concatenate(
            [x[0 * TB:1 * TB], x[1 * TB:2 * TB], x[2 * TB:3 * TB], x[3 * TB:4 * TB]],
            axis=-1)                                                 # (TB, 4H)
        pre = _mm(fused, fc1w_ref[...]) + fc1b_ref[...]
    else:
        # Small H: avoid sub-vreg lane concat; accumulate 4 partial K=H dots in f32.
        pre = fc1b_ref[...].astype(jnp.float32)                      # (1, FC_H) -> bcast
        for sidx in range(4):
            pre = pre + _mm(x[sidx * TB:(sidx + 1) * TB, :],
                            fc1w_ref[sidx * H:(sidx + 1) * H, :])
    h = jnp.maximum(pre, 0.0)
    # fc2 weights/bias were zero-padded to a lane-dense width in the wrapper, so this
    # is a full, unmasked (TB, 128k) store.
    out_ref[...] = (_mm(h, fc2w_ref[...]) + fc2b_ref[...]).astype(out_ref.dtype)


# ----------------------------------- wrapper ------------------------------------
def _const_index_map(nd):
    return lambda b: (0,) * nd


def transformer_fusion(text, img, clip, sim, params, *, num_layers, num_classes,
                       matmul_dtype=jnp.float32):
    (wt, bt, wi, bi, wc, bc, ws, bs, pe0,
     wv, bv, wo, bo, ln1w, ln1b, w1, b1, w2, b2, ln2w, ln2b,
     fc1w, fc1b, fc2w, fc2b) = params

    B = text.shape[0]
    Dt, Di, Dc = text.shape[1], img.shape[1], clip.shape[1]
    H = wt.shape[1]
    FF = w1.shape[2]
    FC_H = fc1w.shape[1]

    # --- fold the seq_len==1 attention (in f32, before any bf16 cast) ---
    wsa = jnp.einsum('lij,ljk->lik', wv, wo)                 # (L, H, H)
    bsa = jnp.einsum('lxj,ljk->lxk', bv, wo) + bo            # (L, 1, H)

    # Sublane-aligned batch tile; >= 2 "parallel" grid tiles when batch permits
    # (v7x has 2 TensorCores), capped at 64 (4*TB = 256-row MXU passes on v6e/v7x).
    B8 = _round_up(B, 8)
    TB = min(B8, 64)
    if B8 >= 16:
        TB = min(TB, max(8, _round_up(B8 // 2, 8)))
    B_pad = _round_up(B, TB)
    OUT_PAD = _round_up(num_classes, 128)   # lane-dense output slab

    def pad_rows(x):
        return x if B_pad == B else jnp.pad(x, ((0, B_pad - B), (0, 0)))

    text_p = pad_rows(text)
    img_p = pad_rows(img)
    clip_p = pad_rows(clip)
    sim_p = pad_rows(sim.reshape(B, 1))

    fc2w_p = jnp.pad(fc2w, ((0, 0), (0, OUT_PAD - num_classes)))
    fc2b_p = jnp.pad(fc2b, ((0, 0), (0, OUT_PAD - num_classes)))

    # --- optional bf16 pre-cast of matmul weight matrices (biases/LN/pe stay f32) ---
    use_lowp = np.dtype(matmul_dtype) != np.dtype(jnp.float32)
    mm_cast = (lambda a: a.astype(matmul_dtype)) if use_lowp else (lambda a: a)
    wt_c, wi_c, wc_c = mm_cast(wt), mm_cast(wi), mm_cast(wc)
    wsa_c, w1_c, w2_c = mm_cast(wsa), mm_cast(w1), mm_cast(w2)
    fc1w_c, fc2w_c = mm_cast(fc1w), mm_cast(fc2w_p)

    weights = (wt_c, bt, wi_c, bi, wc_c, bc, ws, bs, pe0,
               wsa_c, bsa, ln1w, ln1b, w1_c, b1, w2_c, b2, ln2w, ln2b,
               fc1w_c, fc1b, fc2w_c, fc2b_p)

    act_specs = [
        pl.BlockSpec((TB, Dt), lambda b: (b, 0)),
        pl.BlockSpec((TB, Di), lambda b: (b, 0)),
        pl.BlockSpec((TB, Dc), lambda b: (b, 0)),
        pl.BlockSpec((TB, 1), lambda b: (b, 0)),
    ]
    # Whole-array weight blocks with constant index_maps, single-buffered (block index
    # never changes across batch tiles -> no need for the default 2 pipeline buffers).
    weight_specs = [
        pl.BlockSpec(w.shape, _const_index_map(w.ndim), pipeline_mode=pl.Buffered(1))
        for w in weights
    ]

    # --- cost estimate (folded attention; actual weight dtypes for bytes) ---
    n_rows = 4 * B_pad
    flops = int(
        2 * B_pad * H * (Dt + Di + Dc)
        + num_layers * 2 * n_rows * (H * H + 2 * H * FF)
        + 2 * B_pad * (4 * H * FC_H + FC_H * OUT_PAD))
    transcendentals = int(num_layers * 2 * n_rows)   # one rsqrt per LN row
    weight_bytes = int(sum(int(np.prod(w.shape)) * w.dtype.itemsize for w in weights))
    bytes_accessed = int(
        sum(int(np.prod(a.shape)) * a.dtype.itemsize
            for a in (text_p, img_p, clip_p, sim_p))
        + weight_bytes + B_pad * OUT_PAD * 4)

    # --- explicit VMEM limit from the footprint (weights single-buffered) ---
    act_bytes = (TB * (Dt + Di + Dc + 1) * 4
                 + TB * OUT_PAD * 4
                 + 4 * TB * max(H, FF, FC_H) * 4 * 4)   # rough working-set estimate
    footprint = weight_bytes + 2 * act_bytes
    # 56 MiB cap is safe on v7x (64 MiB physical); raise toward ~100 MiB on v5e/v6e.
    vmem_limit = int(min(max(footprint * 1.3, 32 * 1024 * 1024), 56 * 1024 * 1024))

    out = pl.pallas_call(
        functools.partial(fusion_kernel, num_layers),
        grid=(B_pad // TB,),
        in_specs=act_specs + weight_specs,
        out_specs=pl.BlockSpec((TB, OUT_PAD), lambda b: (b, 0)),
        out_shape=jax.ShapeDtypeStruct((B_pad, OUT_PAD), jnp.float32),
        compiler_params=pltpu.CompilerParams(
            dimension_semantics=("parallel",),
            vmem_limit_bytes=vmem_limit),
        cost_estimate=pl.CostEstimate(
            flops=flops, transcendentals=transcendentals,
            bytes_accessed=bytes_accessed),
    )(text_p, img_p, clip_p, sim_p, *weights)

    return out[:B, :num_classes]


# ------------------------------ parameter creation -------------------------------
def _linear_params(key, fan_in, fan_out):
    kw, kb = jax.random.split(key)
    bound = 1.0 / np.sqrt(fan_in)
    w = jax.random.uniform(kw, (fan_in, fan_out), jnp.float32, -bound, bound)
    b = jax.random.uniform(kb, (1, fan_out), jnp.float32, -bound, bound)
    return w, b


def _positional_encoding_row0(dim):
    # PositionalEncoding.pe[0, :] (position = 0): sin terms 0, cos terms 1.
    pe = np.zeros((1, dim), dtype=np.float32)
    div_term = np.exp(np.arange(0, dim, 2, dtype=np.float32) * (-np.log(10000.0) / dim))
    pe[0, 0::2] = np.sin(0.0 * div_term)
    pe[0, 1::2] = np.cos(0.0 * div_term)
    return jnp.asarray(pe)


def make_params(key, text_dim, img_dim, clip_dim, hidden, num_layers, ff_dim,
                fc_hidden, num_classes):
    keys = iter(jax.random.split(key, 6 + 4 * num_layers))
    wt, bt = _linear_params(next(keys), text_dim, hidden)
    wi, bi = _linear_params(next(keys), img_dim, hidden)
    wc, bc = _linear_params(next(keys), clip_dim, hidden)
    ws, bs = _linear_params(next(keys), 1, hidden)
    pe0 = _positional_encoding_row0(hidden)

    per_layer = {k: [] for k in ("wv", "bv", "wo", "bo", "w1", "b1", "w2", "b2",
                                 "ln1w", "ln1b", "ln2w", "ln2b")}
    ones = jnp.ones((1, hidden), jnp.float32)
    zeros = jnp.zeros((1, hidden), jnp.float32)
    for _ in range(num_layers):
        wv, bv = _linear_params(next(keys), hidden, hidden)   # value slice of in_proj
        wo, bo = _linear_params(next(keys), hidden, hidden)
        w1, b1 = _linear_params(next(keys), hidden, ff_dim)
        w2, b2 = _linear_params(next(keys), ff_dim, hidden)
        for name, val in (("wv", wv), ("bv", bv), ("wo", wo), ("bo", bo),
                          ("w1", w1), ("b1", b1), ("w2", w2), ("b2", b2),
                          ("ln1w", ones), ("ln1b", zeros),
                          ("ln2w", ones), ("ln2b", zeros)):
            per_layer[name].append(val)

    stack = lambda name: jnp.stack(per_layer[name], axis=0)
    fc1w, fc1b = _linear_params(next(keys), 4 * hidden, fc_hidden)
    fc2w, fc2b = _linear_params(next(keys), fc_hidden, num_classes)

    return (wt, bt, wi, bi, wc, bc, ws, bs, pe0,
            stack("wv"), stack("bv"), stack("wo"), stack("bo"),
            stack("ln1w"), stack("ln1b"), stack("w1"), stack("b1"),
            stack("w2"), stack("b2"), stack("ln2w"), stack("ln2b"),
            fc1w, fc1b, fc2w, fc2b)


# ------------------------------ pure-JAX reference --------------------------------
def reference(text, img, clip, sim, params, num_layers):
    (wt, bt, wi, bi, wc, bc, ws, bs, pe0,
     wv, bv, wo, bo, ln1w, ln1b, w1, b1, w2, b2, ln2w, ln2b,
     fc1w, fc1b, fc2w, fc2b) = params

    def ln(x, g, b):
        mu = jnp.mean(x, axis=-1, keepdims=True)
        var = jnp.mean((x - mu) ** 2, axis=-1, keepdims=True)
        return (x - mu) / jnp.sqrt(var + LN_EPS) * g + b

    def encode(x):
        x = x + pe0
        for l in range(num_layers):
            v = x @ wv[l] + bv[l]
            sa = v @ wo[l] + bo[l]
            x = ln(x + sa, ln1w[l], ln1b[l])
            h = jnp.maximum(x @ w1[l] + b1[l], 0.0)
            ff = h @ w2[l] + b2[l]
            x = ln(x + ff, ln2w[l], ln2b[l])
        return x

    t = encode(text @ wt + bt)
    i = encode(img @ wi + bi)
    c = encode(clip @ wc + bc)
    s = encode(sim.reshape(-1, 1) * ws + bs)
    fused = jnp.concatenate([t, i, c, s], axis=-1)
    h = jnp.maximum(fused @ fc1w + fc1b, 0.0)
    return h @ fc2w + fc2b


# ------------------------------------- main ---------------------------------------
if __name__ == "__main__":
    # small shapes consistent with the module's forward
    TEXT_DIM, IMG_DIM, CLIP_DIM = 64, 48, 96
    HIDDEN, NUM_LAYERS, FF_DIM = 32, 4, 64
    FC_HIDDEN, NUM_CLASSES = 256, 2  # fc hidden width is hardcoded to 256 in the module

    root = jax.random.PRNGKey(0)
    k_params, k_data = jax.random.split(root)
    params = make_params(k_params, TEXT_DIM, IMG_DIM, CLIP_DIM, HIDDEN,
                         NUM_LAYERS, FF_DIM, FC_HIDDEN, NUM_CLASSES)

    def make_inputs(B):
        kt, ki, kc, ks = jax.random.split(jax.random.fold_in(k_data, B), 4)
        return (jax.random.normal(kt, (B, TEXT_DIM), jnp.float32),
                jax.random.normal(ki, (B, IMG_DIM), jnp.float32),
                jax.random.normal(kc, (B, CLIP_DIM), jnp.float32),
                jax.random.normal(ks, (B,), jnp.float32))

    # f32 matmul path — strict correctness check; two batch sizes exercise the
    # single-tile and multi-tile ("parallel" grid) paths plus batch padding.
    for B in (4, 20):
        text, img, clip, sim = make_inputs(B)
        ref = jax.block_until_ready(reference(text, img, clip, sim, params, NUM_LAYERS))
        out = transformer_fusion(text, img, clip, sim, params,
                                 num_layers=NUM_LAYERS, num_classes=NUM_CLASSES)
        out = jax.block_until_ready(out)
        assert out.shape == (B, NUM_CLASSES)
        assert bool(jnp.all(jnp.isfinite(out)))
        assert bool(jnp.allclose(out, ref, rtol=2e-2, atol=2e-2)), (B, out, ref)

    # bf16 matmul-operand path (weights pre-cast in the wrapper; f32 accumulation,
    # f32 LayerNorm/residuals). Loose sanity check against the f32 reference.
    text, img, clip, sim = make_inputs(4)
    ref = jax.block_until_ready(reference(text, img, clip, sim, params, NUM_LAYERS))
    out_bf16 = transformer_fusion(text, img, clip, sim, params,
                                  num_layers=NUM_LAYERS, num_classes=NUM_CLASSES,
                                  matmul_dtype=jnp.bfloat16)
    out_bf16 = jax.block_until_ready(out_bf16)
    assert bool(jnp.all(jnp.isfinite(out_bf16)))
    assert bool(jnp.allclose(out_bf16, ref, rtol=1e-1, atol=1e-1)), (out_bf16, ref)

    print("KERNEL_OK")
</pallas_src>

<mosaic_0001>
module attributes {stable_mosaic.version = 11 : i64} {
  func.func @fusion_kernel(%arg0: i32, %arg1: memref<8x64xf32, #tpu.memory_space<vmem>>, %arg2: memref<8x48xf32, #tpu.memory_space<vmem>>, %arg3: memref<8x96xf32, #tpu.memory_space<vmem>>, %arg4: memref<8x1xf32, #tpu.memory_space<vmem>>, %arg5: memref<64x32xf32, #tpu.memory_space<vmem>>, %arg6: memref<1x32xf32, #tpu.memory_space<vmem>>, %arg7: memref<48x32xf32, #tpu.memory_space<vmem>>, %arg8: memref<1x32xf32, #tpu.memory_space<vmem>>, %arg9: memref<96x32xf32, #tpu.memory_space<vmem>>, %arg10: memref<1x32xf32, #tpu.memory_space<vmem>>, %arg11: memref<1x32xf32, #tpu.memory_space<vmem>>, %arg12: memref<1x32xf32, #tpu.memory_space<vmem>>, %arg13: memref<1x32xf32, #tpu.memory_space<vmem>>, %arg14: memref<4x32x32xf32, #tpu.memory_space<vmem>>, %arg15: memref<4x1x32xf32, #tpu.memory_space<vmem>>, %arg16: memref<4x1x32xf32, #tpu.memory_space<vmem>>, %arg17: memref<4x1x32xf32, #tpu.memory_space<vmem>>, %arg18: memref<4x32x64xf32, #tpu.memory_space<vmem>>, %arg19: memref<4x1x64xf32, #tpu.memory_space<vmem>>, %arg20: memref<4x64x32xf32, #tpu.memory_space<vmem>>, %arg21: memref<4x1x32xf32, #tpu.memory_space<vmem>>, %arg22: memref<4x1x32xf32, #tpu.memory_space<vmem>>, %arg23: memref<4x1x32xf32, #tpu.memory_space<vmem>>, %arg24: memref<128x256xf32, #tpu.memory_space<vmem>>, %arg25: memref<1x256xf32, #tpu.memory_space<vmem>>, %arg26: memref<256x128xf32, #tpu.memory_space<vmem>>, %arg27: memref<1x128xf32, #tpu.memory_space<vmem>>, %arg28: memref<8x128xf32, #tpu.memory_space<vmem>>) attributes {dimension_semantics = [#tpu.dimension_semantics<parallel>], iteration_bounds = array<i64: 1>, scalar_prefetch = 0 : i64, scratch_operands = 0 : i64, tpu.core_type = #tpu.core_type<tc>, window_params = [{transform_indices = @transform_0, window_bounds = array<i64: 8, 64>}, {transform_indices = @transform_1, window_bounds = array<i64: 8, 48>}, {transform_indices = @transform_2, window_bounds = array<i64: 8, 96>}, {transform_indices = @transform_3, window_bounds = array<i64: 8, 1>}, {pipeline_mode = #tpu.pipeline_mode<synchronous>, transform_indices = @transform_4, window_bounds = array<i64: 64, 32>}, {pipeline_mode = #tpu.pipeline_mode<synchronous>, transform_indices = @transform_5, window_bounds = array<i64: 1, 32>}, {pipeline_mode = #tpu.pipeline_mode<synchronous>, transform_indices = @transform_6, window_bounds = array<i64: 48, 32>}, {pipeline_mode = #tpu.pipeline_mode<synchronous>, transform_indices = @transform_7, window_bounds = array<i64: 1, 32>}, {pipeline_mode = #tpu.pipeline_mode<synchronous>, transform_indices = @transform_8, window_bounds = array<i64: 96, 32>}, {pipeline_mode = #tpu.pipeline_mode<synchronous>, transform_indices = @transform_9, window_bounds = array<i64: 1, 32>}, {pipeline_mode = #tpu.pipeline_mode<synchronous>, transform_indices = @transform_10, window_bounds = array<i64: 1, 32>}, {pipeline_mode = #tpu.pipeline_mode<synchronous>, transform_indices = @transform_11, window_bounds = array<i64: 1, 32>}, {pipeline_mode = #tpu.pipeline_mode<synchronous>, transform_indices = @transform_12, window_bounds = array<i64: 1, 32>}, {pipeline_mode = #tpu.pipeline_mode<synchronous>, transform_indices = @transform_13, window_bounds = array<i64: 4, 32, 32>}, {pipeline_mode = #tpu.pipeline_mode<synchronous>, transform_indices = @transform_14, window_bounds = array<i64: 4, 1, 32>}, {pipeline_mode = #tpu.pipeline_mode<synchronous>, transform_indices = @transform_15, window_bounds = array<i64: 4, 1, 32>}, {pipeline_mode = #tpu.pipeline_mode<synchronous>, transform_indices = @transform_16, window_bounds = array<i64: 4, 1, 32>}, {pipeline_mode = #tpu.pipeline_mode<synchronous>, transform_indices = @transform_17, window_bounds = array<i64: 4, 32, 64>}, {pipeline_mode = #tpu.pipeline_mode<synchronous>, transform_indices = @transform_18, window_bounds = array<i64: 4, 1, 64>}, {pipeline_mode = #tpu.pipeline_mode<synchronous>, transform_indices = @transform_19, window_bounds = array<i64: 4, 64, 32>}, {pipeline_mode = #tpu.pipeline_mode<synchronous>, transform_indices = @transform_20, window_bounds = array<i64: 4, 1, 32>}, {pipeline_mode = #tpu.pipeline_mode<synchronous>, transform_indices = @transform_21, window_bounds = array<i64: 4, 1, 32>}, {pipeline_mode = #tpu.pipeline_mode<synchronous>, transform_indices = @transform_22, window_bounds = array<i64: 4, 1, 32>}, {pipeline_mode = #tpu.pipeline_mode<synchronous>, transform_indices = @transform_23, window_bounds = array<i64: 128, 256>}, {pipeline_mode = #tpu.pipeline_mode<synchronous>, transform_indices = @transform_24, window_bounds = array<i64: 1, 256>}, {pipeline_mode = #tpu.pipeline_mode<synchronous>, transform_indices = @transform_25, window_bounds = array<i64: 256, 128>}, {pipeline_mode = #tpu.pipeline_mode<synchronous>, transform_indices = @transform_26, window_bounds = array<i64: 1, 128>}, {transform_indices = @transform_27, window_bounds = array<i64: 8, 128>}]} {
    %c0 = arith.constant 0 : index
    %c0_0 = arith.constant 0 : index
    %0 = vector.load %arg1[%c0, %c0_0] : memref<8x64xf32, #tpu.memory_space<vmem>>, vector<8x64xf32>
    %c0_1 = arith.constant 0 : index
    %c0_2 = arith.constant 0 : index
    %1 = vector.load %arg5[%c0_1, %c0_2] : memref<64x32xf32, #tpu.memory_space<vmem>>, vector<64x32xf32>
    %cst = arith.constant dense<0.000000e+00> : vector<8x32xf32>
    %2 = tpu.matmul %0, %1, %cst {dimension_numbers = #tpu.dot_dimension_numbers<[1], [0], [0], [1], [0, 0, 1, 1], [], []>} : vector<8x64xf32>, vector<64x32xf32>, vector<8x32xf32> -> vector<8x32xf32>
    %c0_3 = arith.constant 0 : index
    %c0_4 = arith.constant 0 : index
    %3 = vector.load %arg6[%c0_3, %c0_4] : memref<1x32xf32, #tpu.memory_space<vmem>>, vector<1x32xf32>
    %4 = vector.broadcast %3 : vector<1x32xf32> to vector<8x32xf32>
    %5 = arith.addf %2, %4 : vector<8x32xf32>
    %c0_5 = arith.constant 0 : index
    %c0_6 = arith.constant 0 : index
    %6 = vector.load %arg2[%c0_5, %c0_6] : memref<8x48xf32, #tpu.memory_space<vmem>>, vector<8x48xf32>
    %c0_7 = arith.constant 0 : index
    %c0_8 = arith.constant 0 : index
    %7 = vector.load %arg7[%c0_7, %c0_8] : memref<48x32xf32, #tpu.memory_space<vmem>>, vector<48x32xf32>
    %cst_9 = arith.constant dense<0.000000e+00> : vector<8x32xf32>
    %8 = tpu.matmul %6, %7, %cst_9 {dimension_numbers = #tpu.dot_dimension_numbers<[1], [0], [0], [1], [0, 0, 1, 1], [], []>} : vector<8x48xf32>, vector<48x32xf32>, vector<8x32xf32> -> vector<8x32xf32>
    %c0_10 = arith.constant 0 : index
    %c0_11 = arith.constant 0 : index
    %9 = vector.load %arg8[%c0_10, %c0_11] : memref<1x32xf32, #tpu.memory_space<vmem>>, vector<1x32xf32>
    %10 = vector.broadcast %9 : vector<1x32xf32> to vector<8x32xf32>
    %11 = arith.addf %8, %10 : vector<8x32xf32>
    %c0_12 = arith.constant 0 : index
    %c0_13 = arith.constant 0 : index
    %12 = vector.load %arg3[%c0_12, %c0_13] : memref<8x96xf32, #tpu.memory_space<vmem>>, vector<8x96xf32>
    %c0_14 = arith.constant 0 : index
    %c0_15 = arith.constant 0 : index
    %13 = vector.load %arg9[%c0_14, %c0_15] : memref<96x32xf32, #tpu.memory_space<vmem>>, vector<96x32xf32>
    %cst_16 = arith.constant dense<0.000000e+00> : vector<8x32xf32>
    %14 = tpu.matmul %12, %13, %cst_16 {dimension_numbers = #tpu.dot_dimension_numbers<[1], [0], [0], [1], [0, 0, 1, 1], [], []>} : vector<8x96xf32>, vector<96x32xf32>, vector<8x32xf32> -> vector<8x32xf32>
    %c0_17 = arith.constant 0 : index
    %c0_18 = arith.constant 0 : index
    %15 = vector.load %arg10[%c0_17, %c0_18] : memref<1x32xf32, #tpu.memory_space<vmem>>, vector<1x32xf32>
    %16 = vector.broadcast %15 : vector<1x32xf32> to vector<8x32xf32>
    %17 = arith.addf %14, %16 : vector<8x32xf32>
    %c0_19 = arith.constant 0 : index
    %c0_20 = arith.constant 0 : index
    %18 = vector.load %arg4[%c0_19, %c0_20] : memref<8x1xf32, #tpu.memory_space<vmem>>, vector<8x1xf32>
    %c0_21 = arith.constant 0 : index
    %c0_22 = arith.constant 0 : index
    %19 = vector.load %arg11[%c0_21, %c0_22] : memref<1x32xf32, #tpu.memory_space<vmem>>, vector<1x32xf32>
    %20 = vector.broadcast %18 : vector<8x1xf32> to vector<8x32xf32>
    %21 = vector.broadcast %19 : vector<1x32xf32> to vector<8x32xf32>
    %22 = arith.mulf %20, %21 : vector<8x32xf32>
    %c0_23 = arith.constant 0 : index
    %c0_24 = arith.constant 0 : index
    %23 = vector.load %arg12[%c0_23, %c0_24] : memref<1x32xf32, #tpu.memory_space<vmem>>, vector<1x32xf32>
    %24 = vector.broadcast %23 : vector<1x32xf32> to vector<8x32xf32>
    %25 = arith.addf %22, %24 : vector<8x32xf32>
    %26 = tpu.concatenate %5, %11, %17, %25 in 0 : vector<8x32xf32>, vector<8x32xf32>, vector<8x32xf32>, vector<8x32xf32> -> vector<32x32xf32>
    %c0_25 = arith.constant 0 : index
    %c0_26 = arith.constant 0 : index
    %27 = vector.load %arg13[%c0_25, %c0_26] : memref<1x32xf32, #tpu.memory_space<vmem>>, vector<1x32xf32>
    %28 = vector.broadcast %27 : vector<1x32xf32> to vector<32x32xf32>
    %29 = arith.addf %26, %28 : vector<32x32xf32>
    %c0_i32 = arith.constant 0 : i32
    %30 = arith.index_cast %c0_i32 : i32 to index
    %c0_27 = arith.constant 0 : index
    %c0_28 = arith.constant 0 : index
    %31 = vector.load %arg14[%30, %c0_27, %c0_28] : memref<4x32x32xf32, #tpu.memory_space<vmem>>, vector<1x32x32xf32>
    %32 = vector.shape_cast %31 : vector<1x32x32xf32> to vector<32x32xf32>
    %cst_29 = arith.constant dense<0.000000e+00> : vector<32x32xf32>
    %33 = tpu.matmul %29, %32, %cst_29 {dimension_numbers = #tpu.dot_dimension_numbers<[1], [0], [0], [1], [0, 0, 1, 1], [], []>} : vector<32x32xf32>, vector<32x32xf32>, vector<32x32xf32> -> vector<32x32xf32>
    %34 = arith.index_cast %c0_i32 : i32 to index
    %c0_30 = arith.constant 0 : index
    %c0_31 = arith.constant 0 : index
    %35 = vector.load %arg15[%34, %c0_30, %c0_31] : memref<4x1x32xf32, #tpu.memory_space<vmem>>, vector<1x1x32xf32>
    %36 = vector.shape_cast %35 : vector<1x1x32xf32> to vector<1x32xf32>
    %37 = vector.broadcast %36 : vector<1x32xf32> to vector<32x32xf32>
    %38 = arith.addf %33, %37 : vector<32x32xf32>
    %39 = arith.addf %29, %38 : vector<32x32xf32>
    %40 = arith.index_cast %c0_i32 : i32 to index
    %c0_32 = arith.constant 0 : index
    %c0_33 = arith.constant 0 : index
    %41 = vector.load %arg16[%40, %c0_32, %c0_33] : memref<4x1x32xf32, #tpu.memory_space<vmem>>, vector<1x1x32xf32>
    %42 = vector.shape_cast %41 : vector<1x1x32xf32> to vector<1x32xf32>
    %43 = arith.index_cast %c0_i32 : i32 to index
    %c0_34 = arith.constant 0 : index
    %c0_35 = arith.constant 0 : index
    %44 = vector.load %arg17[%43, %c0_34, %c0_35] : memref<4x1x32xf32, #tpu.memory_space<vmem>>, vector<1x1x32xf32>
    %45 = vector.shape_cast %44 : vector<1x1x32xf32> to vector<1x32xf32>
    %cst_36 = arith.constant dense<0.000000e+00> : vector<32xf32>
    %46 = vector.multi_reduction <add>, %39, %cst_36 [1] : vector<32x32xf32> to vector<32xf32>
    %47 = vector.shape_cast %46 : vector<32xf32> to vector<32x1xf32>
    %cst_37 = arith.constant 3.200000e+01 : f32
    %48 = vector.broadcast %cst_37 : f32 to vector<32x1xf32>
    %49 = arith.divf %47, %48 : vector<32x1xf32>
    %50 = arith.mulf %39, %39 : vector<32x32xf32>
    %cst_38 = arith.constant dense<0.000000e+00> : vector<32xf32>
    %51 = vector.multi_reduction <add>, %50, %cst_38 [1] : vector<32x32xf32> to vector<32xf32>
    %52 = vector.shape_cast %51 : vector<32xf32> to vector<32x1xf32>
    %cst_39 = arith.constant 3.200000e+01 : f32
    %53 = vector.broadcast %cst_39 : f32 to vector<32x1xf32>
    %54 = arith.divf %52, %53 : vector<32x1xf32>
    %55 = arith.mulf %49, %49 : vector<32x1xf32>
    %56 = arith.subf %54, %55 : vector<32x1xf32>
    %cst_40 = arith.constant 0.000000e+00 : f32
    %57 = vector.broadcast %cst_40 : f32 to vector<32x1xf32>
    %58 = arith.maximumf %56, %57 : vector<32x1xf32>
    %59 = vector.broadcast %49 : vector<32x1xf32> to vector<32x32xf32>
    %60 = arith.subf %39, %59 : vector<32x32xf32>
    %cst_41 = arith.constant 9.99999974E-6 : f32
    %61 = vector.broadcast %cst_41 : f32 to vector<32x1xf32>
    %62 = arith.addf %58, %61 : vector<32x1xf32>
    %63 = math.rsqrt %62 : vector<32x1xf32>
    %64 = vector.broadcast %63 : vector<32x1xf32> to vector<32x32xf32>
    %65 = arith.mulf %60, %64 : vector<32x32xf32>
    %66 = vector.broadcast %42 : vector<1x32xf32> to vector<32x32xf32>
    %67 = arith.mulf %65, %66 : vector<32x32xf32>
    %68 = vector.broadcast %45 : vector<1x32xf32> to vector<32x32xf32>
    %69 = arith.addf %67, %68 : vector<32x32xf32>
    %70 = arith.index_cast %c0_i32 : i32 to index
    %c0_42 = arith.constant 0 : index
    %c0_43 = arith.constant 0 : index
    %71 = vector.load %arg18[%70, %c0_42, %c0_43] : memref<4x32x64xf32, #tpu.memory_space<vmem>>, vector<1x32x64xf32>
    %72 = vector.shape_cast %71 : vector<1x32x64xf32> to vector<32x64xf32>
    %cst_44 = arith.constant dense<0.000000e+00> : vector<32x64xf32>
    %73 = tpu.matmul %69, %72, %cst_44 {dimension_numbers = #tpu.dot_dimension_numbers<[1], [0], [0], [1], [0, 0, 1, 1], [], []>} : vector<32x32xf32>, vector<32x64xf32>, vector<32x64xf32> -> vector<32x64xf32>
    %74 = arith.index_cast %c0_i32 : i32 to index
    %c0_45 = arith.constant 0 : index
    %c0_46 = arith.constant 0 : index
    %75 = vector.load %arg19[%74, %c0_45, %c0_46] : memref<4x1x64xf32, #tpu.memory_space<vmem>>, vector<1x1x64xf32>
    %76 = vector.shape_cast %75 : vector<1x1x64xf32> to vector<1x64xf32>
    %77 = vector.broadcast %76 : vector<1x64xf32> to vector<32x64xf32>
    %78 = arith.addf %73, %77 : vector<32x64xf32>
    %cst_47 = arith.constant 0.000000e+00 : f32
    %79 = vector.broadcast %cst_47 : f32 to vector<32x64xf32>
    %80 = arith.maximumf %78, %79 : vector<32x64xf32>
    %81 = arith.index_cast %c0_i32 : i32 to index
    %c0_48 = arith.constant 0 : index
    %c0_49 = arith.constant 0 : index
    %82 = vector.load %arg20[%81, %c0_48, %c0_49] : memref<4x64x32xf32, #tpu.memory_space<vmem>>, vector<1x64x32xf32>
    %83 = vector.shape_cast %82 : vector<1x64x32xf32> to vector<64x32xf32>
    %cst_50 = arith.constant dense<0.000000e+00> : vector<32x32xf32>
    %84 = tpu.matmul %80, %83, %cst_50 {dimension_numbers = #tpu.dot_dimension_numbers<[1], [0], [0], [1], [0, 0, 1, 1], [], []>} : vector<32x64xf32>, vector<64x32xf32>, vector<32x32xf32> -> vector<32x32xf32>
    %85 = arith.index_cast %c0_i32 : i32 to index
    %c0_51 = arith.constant 0 : index
    %c0_52 = arith.constant 0 : index
    %86 = vector.load %arg21[%85, %c0_51, %c0_52] : memref<4x1x32xf32, #tpu.memory_space<vmem>>, vector<1x1x32xf32>
    %87 = vector.shape_cast %86 : vector<1x1x32xf32> to vector<1x32xf32>
    %88 = vector.broadcast %87 : vector<1x32xf32> to vector<32x32xf32>
    %89 = arith.addf %84, %88 : vector<32x32xf32>
    %90 = arith.addf %69, %89 : vector<32x32xf32>
    %91 = arith.index_cast %c0_i32 : i32 to index
    %c0_53 = arith.constant 0 : index
    %c0_54 = arith.constant 0 : index
    %92 = vector.load %arg22[%91, %c0_53, %c0_54] : memref<4x1x32xf32, #tpu.memory_space<vmem>>, vector<1x1x32xf32>
    %93 = vector.shape_cast %92 : vector<1x1x32xf32> to vector<1x32xf32>
    %94 = arith.index_cast %c0_i32 : i32 to index
    %c0_55 = arith.constant 0 : index
    %c0_56 = arith.constant 0 : index
    %95 = vector.load %arg23[%94, %c0_55, %c0_56] : memref<4x1x32xf32, #tpu.memory_space<vmem>>, vector<1x1x32xf32>
    %96 = vector.shape_cast %95 : vector<1x1x32xf32> to vector<1x32xf32>
    %cst_57 = arith.constant dense<0.000000e+00> : vector<32xf32>
    %97 = vector.multi_reduction <add>, %90, %cst_57 [1] : vector<32x32xf32> to vector<32xf32>
    %98 = vector.shape_cast %97 : vector<32xf32> to vector<32x1xf32>
    %cst_58 = arith.constant 3.200000e+01 : f32
    %99 = vector.broadcast %cst_58 : f32 to vector<32x1xf32>
    %100 = arith.divf %98, %99 : vector<32x1xf32>
    %101 = arith.mulf %90, %90 : vector<32x32xf32>
    %cst_59 = arith.constant dense<0.000000e+00> : vector<32xf32>
    %102 = vector.multi_reduction <add>, %101, %cst_59 [1] : vector<32x32xf32> to vector<32xf32>
    %103 = vector.shape_cast %102 : vector<32xf32> to vector<32x1xf32>
    %cst_60 = arith.constant 3.200000e+01 : f32
    %104 = vector.broadcast %cst_60 : f32 to vector<32x1xf32>
    %105 = arith.divf %103, %104 : vector<32x1xf32>
    %106 = arith.mulf %100, %100 : vector<32x1xf32>
    %107 = arith.subf %105, %106 : vector<32x1xf32>
    %cst_61 = arith.constant 0.000000e+00 : f32
    %108 = vector.broadcast %cst_61 : f32 to vector<32x1xf32>
    %109 = arith.maximumf %107, %108 : vector<32x1xf32>
    %110 = vector.broadcast %100 : vector<32x1xf32> to vector<32x32xf32>
    %111 = arith.subf %90, %110 : vector<32x32xf32>
    %cst_62 = arith.constant 9.99999974E-6 : f32
    %112 = vector.broadcast %cst_62 : f32 to vector<32x1xf32>
    %113 = arith.addf %109, %112 : vector<32x1xf32>
    %114 = math.rsqrt %113 : vector<32x1xf32>
    %115 = vector.broadcast %114 : vector<32x1xf32> to vector<32x32xf32>
    %116 = arith.mulf %111, %115 : vector<32x32xf32>
    %117 = vector.broadcast %93 : vector<1x32xf32> to vector<32x32xf32>
    %118 = arith.mulf %116, %117 : vector<32x32xf32>
    %119 = vector.broadcast %96 : vector<1x32xf32> to vector<32x32xf32>
    %120 = arith.addf %118, %119 : vector<32x32xf32>
    %c1_i32 = arith.constant 1 : i32
    %121 = arith.index_cast %c1_i32 : i32 to index
    %c0_63 = arith.constant 0 : index
    %c0_64 = arith.constant 0 : index
    %122 = vector.load %arg14[%121, %c0_63, %c0_64] : memref<4x32x32xf32, #tpu.memory_space<vmem>>, vector<1x32x32xf32>
    %123 = vector.shape_cast %122 : vector<1x32x32xf32> to vector<32x32xf32>
    %cst_65 = arith.constant dense<0.000000e+00> : vector<32x32xf32>
    %124 = tpu.matmul %120, %123, %cst_65 {dimension_numbers = #tpu.dot_dimension_numbers<[1], [0], [0], [1], [0, 0, 1, 1], [], []>} : vector<32x32xf32>, vector<32x32xf32>, vector<32x32xf32> -> vector<32x32xf32>
    %125 = arith.index_cast %c1_i32 : i32 to index
    %c0_66 = arith.constant 0 : index
    %c0_67 = arith.constant 0 : index
    %126 = vector.load %arg15[%125, %c0_66, %c0_67] : memref<4x1x32xf32, #tpu.memory_space<vmem>>, vector<1x1x32xf32>
    %127 = vector.shape_cast %126 : vector<1x1x32xf32> to vector<1x32xf32>
    %128 = vector.broadcast %127 : vector<1x32xf32> to vector<32x32xf32>
    %129 = arith.addf %124, %128 : vector<32x32xf32>
    %130 = arith.addf %120, %129 : vector<32x32xf32>
    %131 = arith.index_cast %c1_i32 : i32 to index
    %c0_68 = arith.constant 0 : index
    %c0_69 = arith.constant 0 : index
    %132 = vector.load %arg16[%131, %c0_68, %c0_69] : memref<4x1x32xf32, #tpu.memory_space<vmem>>, vector<1x1x32xf32>
    %133 = vector.shape_cast %132 : vector<1x1x32xf32> to vector<1x32xf32>
    %134 = arith.index_cast %c1_i32 : i32 to index
    %c0_70 = arith.constant 0 : index
    %c0_71 = arith.constant 0 : index
    %135 = vector.load %arg17[%134, %c0_70, %c0_71] : memref<4x1x32xf32, #tpu.memory_space<vmem>>, vector<1x1x32xf32>
    %136 = vector.shape_cast %135 : vector<1x1x32xf32> to vector<1x32xf32>
    %cst_72 = arith.constant dense<0.000000e+00> : vector<32xf32>
    %137 = vector.multi_reduction <add>, %130, %cst_72 [1] : vector<32x32xf32> to vector<32xf32>
    %138 = vector.shape_cast %137 : vector<32xf32> to vector<32x1xf32>
    %cst_73 = arith.constant 3.200000e+01 : f32
    %139 = vector.broadcast %cst_73 : f32 to vector<32x1xf32>
    %140 = arith.divf %138, %139 : vector<32x1xf32>
    %141 = arith.mulf %130, %130 : vector<32x32xf32>
    %cst_74 = arith.constant dense<0.000000e+00> : vector<32xf32>
    %142 = vector.multi_reduction <add>, %141, %cst_74 [1] : vector<32x32xf32> to vector<32xf32>
    %143 = vector.shape_cast %142 : vector<32xf32> to vector<32x1xf32>
    %cst_75 = arith.constant 3.200000e+01 : f32
    %144 = vector.broadcast %cst_75 : f32 to vector<32x1xf32>
    %145 = arith.divf %143, %144 : vector<32x1xf32>
    %146 = arith.mulf %140, %140 : vector<32x1xf32>
    %147 = arith.subf %145, %146 : vector<32x1xf32>
    %cst_76 = arith.constant 0.000000e+00 : f32
    %148 = vector.broadcast %cst_76 : f32 to vector<32x1xf32>
    %149 = arith.maximumf %147, %148 : vector<32x1xf32>
    %150 = vector.broadcast %140 : vector<32x1xf32> to vector<32x32xf32>
    %151 = arith.subf %130, %150 : vector<32x32xf32>
    %cst_77 = arith.constant 9.99999974E-6 : f32
    %152 = vector.broadcast %cst_77 : f32 to vector<32x1xf32>
    %153 = arith.addf %149, %152 : vector<32x1xf32>
    %154 = math.rsqrt %153 : vector<32x1xf32>
    %155 = vector.broadcast %154 : vector<32x1xf32> to vector<32x32xf32>
    %156 = arith.mulf %151, %155 : vector<32x32xf32>
    %157 = vector.broadcast %133 : vector<1x32xf32> to vector<32x32xf32>
    %158 = arith.mulf %156, %157 : vector<32x32xf32>
    %159 = vector.broadcast %136 : vector<1x32xf32> to vector<32x32xf32>
    %160 = arith.addf %158, %159 : vector<32x32xf32>
    %161 = arith.index_cast %c1_i32 : i32 to index
    %c0_78 = arith.constant 0 : index
    %c0_79 = arith.constant 0 : index
    %162 = vector.load %arg18[%161, %c0_78, %c0_79] : memref<4x32x64xf32, #tpu.memory_space<vmem>>, vector<1x32x64xf32>
    %163 = vector.shape_cast %162 : vector<1x32x64xf32> to vector<32x64xf32>
    %cst_80 = arith.constant dense<0.000000e+00> : vector<32x64xf32>
    %164 = tpu.matmul %160, %163, %cst_80 {dimension_numbers = #tpu.dot_dimension_numbers<[1], [0], [0], [1], [0, 0, 1, 1], [], []>} : vector<32x32xf32>, vector<32x64xf32>, vector<32x64xf32> -> vector<32x64xf32>
    %165 = arith.index_cast %c1_i32 : i32 to index
    %c0_81 = arith.constant 0 : index
    %c0_82 = arith.constant 0 : index
    %166 = vector.load %arg19[%165, %c0_81, %c0_82] : memref<4x1x64xf32, #tpu.memory_space<vmem>>, vector<1x1x64xf32>
    %167 = vector.shape_cast %166 : vector<1x1x64xf32> to vector<1x64xf32>
    %168 = vector.broadcast %167 : vector<1x64xf32> to vector<32x64xf32>
    %169 = arith.addf %164, %168 : vector<32x64xf32>
    %cst_83 = arith.constant 0.000000e+00 : f32
    %170 = vector.broadcast %cst_83 : f32 to vector<32x64xf32>
    %171 = arith.maximumf %169, %170 : vector<32x64xf32>
    %172 = arith.index_cast %c1_i32 : i32 to index
    %c0_84 = arith.constant 0 : index
    %c0_85 = arith.constant 0 : index
    %173 = vector.load %arg20[%172, %c0_84, %c0_85] : memref<4x64x32xf32, #tpu.memory_space<vmem>>, vector<1x64x32xf32>
    %174 = vector.shape_cast %173 : vector<1x64x32xf32> to vector<64x32xf32>
    %cst_86 = arith.constant dense<0.000000e+00> : vector<32x32xf32>
    %175 = tpu.matmul %171, %174, %cst_86 {dimension_numbers = #tpu.dot_dimension_numbers<[1], [0], [0], [1], [0, 0, 1, 1], [], []>} : vector<32x64xf32>, vector<64x32xf32>, vector<32x32xf32> -> vector<32x32xf32>
    %176 = arith.index_cast %c1_i32 : i32 to index
    %c0_87 = arith.constant 0 : index
    %c0_88 = arith.constant 0 : index
    %177 = vector.load %arg21[%176, %c0_87, %c0_88] : memref<4x1x32xf32, #tpu.memory_space<vmem>>, vector<1x1x32xf32>
    %178 = vector.shape_cast %177 : vector<1x1x32xf32> to vector<1x32xf32>
    %179 = vector.broadcast %178 : vector<1x32xf32> to vector<32x32xf32>
    %180 = arith.addf %175, %179 : vector<32x32xf32>
    %181 = arith.addf %160, %180 : vector<32x32xf32>
    %182 = arith.index_cast %c1_i32 : i32 to index
    %c0_89 = arith.constant 0 : index
    %c0_90 = arith.constant 0 : index
    %183 = vector.load %arg22[%182, %c0_89, %c0_90] : memref<4x1x32xf32, #tpu.memory_space<vmem>>, vector<1x1x32xf32>
    %184 = vector.shape_cast %183 : vector<1x1x32xf32> to vector<1x32xf32>
    %185 = arith.index_cast %c1_i32 : i32 to index
    %c0_91 = arith.constant 0 : index
    %c0_92 = arith.constant 0 : index
    %186 = vector.load %arg23[%185, %c0_91, %c0_92] : memref<4x1x32xf32, #tpu.memory_space<vmem>>, vector<1x1x32xf32>
    %187 = vector.shape_cast %186 : vector<1x1x32xf32> to vector<1x32xf32>
    %cst_93 = arith.constant dense<0.000000e+00> : vector<32xf32>
    %188 = vector.multi_reduction <add>, %181, %cst_93 [1] : vector<32x32xf32> to vector<32xf32>
    %189 = vector.shape_cast %188 : vector<32xf32> to vector<32x1xf32>
    %cst_94 = arith.constant 3.200000e+01 : f32
    %190 = vector.broadcast %cst_94 : f32 to vector<32x1xf32>
    %191 = arith.divf %189, %190 : vector<32x1xf32>
    %192 = arith.mulf %181, %181 : vector<32x32xf32>
    %cst_95 = arith.constant dense<0.000000e+00> : vector<32xf32>
    %193 = vector.multi_reduction <add>, %192, %cst_95 [1] : vector<32x32xf32> to vector<32xf32>
    %194 = vector.shape_cast %193 : vector<32xf32> to vector<32x1xf32>
    %cst_96 = arith.constant 3.200000e+01 : f32
    %195 = vector.broadcast %cst_96 : f32 to vector<32x1xf32>
    %196 = arith.divf %194, %195 : vector<32x1xf32>
    %197 = arith.mulf %191, %191 : vector<32x1xf32>
    %198 = arith.subf %196, %197 : vector<32x1xf32>
    %cst_97 = arith.constant 0.000000e+00 : f32
    %199 = vector.broadcast %cst_97 : f32 to vector<32x1xf32>
    %200 = arith.maximumf %198, %199 : vector<32x1xf32>
    %201 = vector.broadcast %191 : vector<32x1xf32> to vector<32x32xf32>
    %202 = arith.subf %181, %201 : vector<32x32xf32>
    %cst_98 = arith.constant 9.99999974E-6 : f32
    %203 = vector.broadcast %cst_98 : f32 to vector<32x1xf32>
    %204 = arith.addf %200, %203 : vector<32x1xf32>
    %205 = math.rsqrt %204 : vector<32x1xf32>
    %206 = vector.broadcast %205 : vector<32x1xf32> to vector<32x32xf32>
    %207 = arith.mulf %202, %206 : vector<32x32xf32>
    %208 = vector.broadcast %184 : vector<1x32xf32> to vector<32x32xf32>
    %209 = arith.mulf %207, %208 : vector<32x32xf32>
    %210 = vector.broadcast %187 : vector<1x32xf32> to vector<32x32xf32>
    %211 = arith.addf %209, %210 : vector<32x32xf32>
    %c2_i32 = arith.constant 2 : i32
    %212 = arith.index_cast %c2_i32 : i32 to index
    %c0_99 = arith.constant 0 : index
    %c0_100 = arith.constant 0 : index
    %213 = vector.load %arg14[%212, %c0_99, %c0_100] : memref<4x32x32xf32, #tpu.memory_space<vmem>>, vector<1x32x32xf32>
    %214 = vector.shape_cast %213 : vector<1x32x32xf32> to vector<32x32xf32>
    %cst_101 = arith.constant dense<0.000000e+00> : vector<32x32xf32>
    %215 = tpu.matmul %211, %214, %cst_101 {dimension_numbers = #tpu.dot_dimension_numbers<[1], [0], [0], [1], [0, 0, 1, 1], [], []>} : vector<32x32xf32>, vector<32x32xf32>, vector<32x32xf32> -> vector<32x32xf32>
    %216 = arith.index_cast %c2_i32 : i32 to index
    %c0_102 = arith.constant 0 : index
    %c0_103 = arith.constant 0 : index
    %217 = vector.load %arg15[%216, %c0_102, %c0_103] : memref<4x1x32xf32, #tpu.memory_space<vmem>>, vector<1x1x32xf32>
    %218 = vector.shape_cast %217 : vector<1x1x32xf32> to vector<1x32xf32>
    %219 = vector.broadcast %218 : vector<1x32xf32> to vector<32x32xf32>
    %220 = arith.addf %215, %219 : vector<32x32xf32>
    %221 = arith.addf %211, %220 : vector<32x32xf32>
    %222 = arith.index_cast %c2_i32 : i32 to index
    %c0_104 = arith.constant 0 : index
    %c0_105 = arith.constant 0 : index
    %223 = vector.load %arg16[%222, %c0_104, %c0_105] : memref<4x1x32xf32, #tpu.memory_space<vmem>>, vector<1x1x32xf32>
    %224 = vector.shape_cast %223 : vector<1x1x32xf32> to vector<1x32xf32>
    %225 = arith.index_cast %c2_i32 : i32 to index
    %c0_106 = arith.constant 0 : index
    %c0_107 = arith.constant 0 : index
    %226 = vector.load %arg17[%225, %c0_106, %c0_107] : memref<4x1x32xf32, #tpu.memory_space<vmem>>, vector<1x1x32xf32>
    %227 = vector.shape_cast %226 : vector<1x1x32xf32> to vector<1x32xf32>
    %cst_108 = arith.constant dense<0.000000e+00> : vector<32xf32>
    %228 = vector.multi_reduction <add>, %221, %cst_108 [1] : vector<32x32xf32> to vector<32xf32>
    %229 = vector.shape_cast %228 : vector<32xf32> to vector<32x1xf32>
    %cst_109 = arith.constant 3.200000e+01 : f32
    %230 = vector.broadcast %cst_109 : f32 to vector<32x1xf32>
    %231 = arith.divf %229, %230 : vector<32x1xf32>
    %232 = arith.mulf %221, %221 : vector<32x32xf32>
    %cst_110 = arith.constant dense<0.000000e+00> : vector<32xf32>
    %233 = vector.multi_reduction <add>, %232, %cst_110 [1] : vector<32x32xf32> to vector<32xf32>
    %234 = vector.shape_cast %233 : vector<32xf32> to vector<32x1xf32>
    %cst_111 = arith.constant 3.200000e+01 : f32
    %235 = vector.broadcast %cst_111 : f32 to vector<32x1xf32>
    %236 = arith.divf %234, %235 : vector<32x1xf32>
    %237 = arith.mulf %231, %231 : vector<32x1xf32>
    %238 = arith.subf %236, %237 : vector<32x1xf32>
    %cst_112 = arith.constant 0.000000e+00 : f32
    %239 = vector.broadcast %cst_112 : f32 to vector<32x1xf32>
    %240 = arith.maximumf %238, %239 : vector<32x1xf32>
    %241 = vector.broadcast %231 : vector<32x1xf32> to vector<32x32xf32>
    %242 = arith.subf %221, %241 : vector<32x32xf32>
    %cst_113 = arith.constant 9.99999974E-6 : f32
    %243 = vector.broadcast %cst_113 : f32 to vector<32x1xf32>
    %244 = arith.addf %240, %243 : vector<32x1xf32>
    %245 = math.rsqrt %244 : vector<32x1xf32>
    %246 = vector.broadcast %245 : vector<32x1xf32> to vector<32x32xf32>
    %247 = arith.mulf %242, %246 : vector<32x32xf32>
    %248 = vector.broadcast %224 : vector<1x32xf32> to vector<32x32xf32>
    %249 = arith.mulf %247, %248 : vector<32x32xf32>
    %250 = vector.broadcast %227 : vector<1x32xf32> to vector<32x32xf32>
    %251 = arith.addf %249, %250 : vector<32x32xf32>
    %252 = arith.index_cast %c2_i32 : i32 to index
    %c0_114 = arith.constant 0 : index
    %c0_115 = arith.constant 0 : index
    %253 = vector.load %arg18[%252, %c0_114, %c0_115] : memref<4x32x64xf32, #tpu.memory_space<vmem>>, vector<1x32x64xf32>
    %254 = vector.shape_cast %253 : vector<1x32x64xf32> to vector<32x64xf32>
    %cst_116 = arith.constant dense<0.000000e+00> : vector<32x64xf32>
    %255 = tpu.matmul %251, %254, %cst_116 {dimension_numbers = #tpu.dot_dimension_numbers<[1], [0], [0], [1], [0, 0, 1, 1], [], []>} : vector<32x32xf32>, vector<32x64xf32>, vector<32x64xf32> -> vector<32x64xf32>
    %256 = arith.index_cast %c2_i32 : i32 to index
    %c0_117 = arith.constant 0 : index
    %c0_118 = arith.constant 0 : index
    %257 = vector.load %arg19[%256, %c0_117, %c0_118] : memref<4x1x64xf32, #tpu.memory_space<vmem>>, vector<1x1x64xf32>
    %258 = vector.shape_cast %257 : vector<1x1x64xf32> to vector<1x64xf32>
    %259 = vector.broadcast %258 : vector<1x64xf32> to vector<32x64xf32>
    %260 = arith.addf %255, %259 : vector<32x64xf32>
    %cst_119 = arith.constant 0.000000e+00 : f32
    %261 = vector.broadcast %cst_119 : f32 to vector<32x64xf32>
    %262 = arith.maximumf %260, %261 : vector<32x64xf32>
    %263 = arith.index_cast %c2_i32 : i32 to index
    %c0_120 = arith.constant 0 : index
    %c0_121 = arith.constant 0 : index
    %264 = vector.load %arg20[%263, %c0_120, %c0_121] : memref<4x64x32xf32, #tpu.memory_space<vmem>>, vector<1x64x32xf32>
    %265 = vector.shape_cast %264 : vector<1x64x32xf32> to vector<64x32xf32>
    %cst_122 = arith.constant dense<0.000000e+00> : vector<32x32xf32>
    %266 = tpu.matmul %262, %265, %cst_122 {dimension_numbers = #tpu.dot_dimension_numbers<[1], [0], [0], [1], [0, 0, 1, 1], [], []>} : vector<32x64xf32>, vector<64x32xf32>, vector<32x32xf32> -> vector<32x32xf32>
    %267 = arith.index_cast %c2_i32 : i32 to index
    %c0_123 = arith.constant 0 : index
    %c0_124 = arith.constant 0 : index
    %268 = vector.load %arg21[%267, %c0_123, %c0_124] : memref<4x1x32xf32, #tpu.memory_space<vmem>>, vector<1x1x32xf32>
    %269 = vector.shape_cast %268 : vector<1x1x32xf32> to vector<1x32xf32>
    %270 = vector.broadcast %269 : vector<1x32xf32> to vector<32x32xf32>
    %271 = arith.addf %266, %270 : vector<32x32xf32>
    %272 = arith.addf %251, %271 : vector<32x32xf32>
    %273 = arith.index_cast %c2_i32 : i32 to index
    %c0_125 = arith.constant 0 : index
    %c0_126 = arith.constant 0 : index
    %274 = vector.load %arg22[%273, %c0_125, %c0_126] : memref<4x1x32xf32, #tpu.memory_space<vmem>>, vector<1x1x32xf32>
    %275 = vector.shape_cast %274 : vector<1x1x32xf32> to vector<1x32xf32>
    %276 = arith.index_cast %c2_i32 : i32 to index
    %c0_127 = arith.constant 0 : index
    %c0_128 = arith.constant 0 : index
    %277 = vector.load %arg23[%276, %c0_127, %c0_128] : memref<4x1x32xf32, #tpu.memory_space<vmem>>, vector<1x1x32xf32>
    %278 = vector.shape_cast %277 : vector<1x1x32xf32> to vector<1x32xf32>
    %cst_129 = arith.constant dense<0.000000e+00> : vector<32xf32>
    %279 = vector.multi_reduction <add>, %272, %cst_129 [1] : vector<32x32xf32> to vector<32xf32>
    %280 = vector.shape_cast %279 : vector<32xf32> to vector<32x1xf32>
    %cst_130 = arith.constant 3.200000e+01 : f32
    %281 = vector.broadcast %cst_130 : f32 to vector<32x1xf32>
    %282 = arith.divf %280, %281 : vector<32x1xf32>
    %283 = arith.mulf %272, %272 : vector<32x32xf32>
    %cst_131 = arith.constant dense<0.000000e+00> : vector<32xf32>
    %284 = vector.multi_reduction <add>, %283, %cst_131 [1] : vector<32x32xf32> to vector<32xf32>
    %285 = vector.shape_cast %284 : vector<32xf32> to vector<32x1xf32>
    %cst_132 = arith.constant 3.200000e+01 : f32
    %286 = vector.broadcast %cst_132 : f32 to vector<32x1xf32>
    %287 = arith.divf %285, %286 : vector<32x1xf32>
    %288 = arith.mulf %282, %282 : vector<32x1xf32>
    %289 = arith.subf %287, %288 : vector<32x1xf32>
    %cst_133 = arith.constant 0.000000e+00 : f32
    %290 = vector.broadcast %cst_133 : f32 to vector<32x1xf32>
    %291 = arith.maximumf %289, %290 : vector<32x1xf32>
    %292 = vector.broadcast %282 : vector<32x1xf32> to vector<32x32xf32>
    %293 = arith.subf %272, %292 : vector<32x32xf32>
    %cst_134 = arith.constant 9.99999974E-6 : f32
    %294 = vector.broadcast %cst_134 : f32 to vector<32x1xf32>
    %295 = arith.addf %291, %294 : vector<32x1xf32>
    %296 = math.rsqrt %295 : vector<32x1xf32>
    %297 = vector.broadcast %296 : vector<32x1xf32> to vector<32x32xf32>
    %298 = arith.mulf %293, %297 : vector<32x32xf32>
    %299 = vector.broadcast %275 : vector<1x32xf32> to vector<32x32xf32>
    %300 = arith.mulf %298, %299 : vector<32x32xf32>
    %301 = vector.broadcast %278 : vector<1x32xf32> to vector<32x32xf32>
    %302 = arith.addf %300, %301 : vector<32x32xf32>
    %c3_i32 = arith.constant 3 : i32
    %303 = arith.index_cast %c3_i32 : i32 to index
    %c0_135 = arith.constant 0 : index
    %c0_136 = arith.constant 0 : index
    %304 = vector.load %arg14[%303, %c0_135, %c0_136] : memref<4x32x32xf32, #tpu.memory_space<vmem>>, vector<1x32x32xf32>
    %305 = vector.shape_cast %304 : vector<1x32x32xf32> to vector<32x32xf32>
    %cst_137 = arith.constant dense<0.000000e+00> : vector<32x32xf32>
    %306 = tpu.matmul %302, %305, %cst_137 {dimension_numbers = #tpu.dot_dimension_numbers<[1], [0], [0], [1], [0, 0, 1, 1], [], []>} : vector<32x32xf32>, vector<32x32xf32>, vector<32x32xf32> -> vector<32x32xf32>
    %307 = arith.index_cast %c3_i32 : i32 to index
    %c0_138 = arith.constant 0 : index
    %c0_139 = arith.constant 0 : index
    %308 = vector.load %arg15[%307, %c0_138, %c0_139] : memref<4x1x32xf32, #tpu.memory_space<vmem>>, vector<1x1x32xf32>
    %309 = vector.shape_cast %308 : vector<1x1x32xf32> to vector<1x32xf32>
    %310 = vector.broadcast %309 : vector<1x32xf32> to vector<32x32xf32>
    %311 = arith.addf %306, %310 : vector<32x32xf32>
    %312 = arith.addf %302, %311 : vector<32x32xf32>
    %313 = arith.index_cast %c3_i32 : i32 to index
    %c0_140 = arith.constant 0 : index
    %c0_141 = arith.constant 0 : index
    %314 = vector.load %arg16[%313, %c0_140, %c0_141] : memref<4x1x32xf32, #tpu.memory_space<vmem>>, vector<1x1x32xf32>
    %315 = vector.shape_cast %314 : vector<1x1x32xf32> to vector<1x32xf32>
    %316 = arith.index_cast %c3_i32 : i32 to index
    %c0_142 = arith.constant 0 : index
    %c0_143 = arith.constant 0 : index
    %317 = vector.load %arg17[%316, %c0_142, %c0_143] : memref<4x1x32xf32, #tpu.memory_space<vmem>>, vector<1x1x32xf32>
    %318 = vector.shape_cast %317 : vector<1x1x32xf32> to vector<1x32xf32>
    %cst_144 = arith.constant dense<0.000000e+00> : vector<32xf32>
    %319 = vector.multi_reduction <add>, %312, %cst_144 [1] : vector<32x32xf32> to vector<32xf32>
    %320 = vector.shape_cast %319 : vector<32xf32> to vector<32x1xf32>
    %cst_145 = arith.constant 3.200000e+01 : f32
    %321 = vector.broadcast %cst_145 : f32 to vector<32x1xf32>
    %322 = arith.divf %320, %321 : vector<32x1xf32>
    %323 = arith.mulf %312, %312 : vector<32x32xf32>
    %cst_146 = arith.constant dense<0.000000e+00> : vector<32xf32>
    %324 = vector.multi_reduction <add>, %323, %cst_146 [1] : vector<32x32xf32> to vector<32xf32>
    %325 = vector.shape_cast %324 : vector<32xf32> to vector<32x1xf32>
    %cst_147 = arith.constant 3.200000e+01 : f32
    %326 = vector.broadcast %cst_147 : f32 to vector<32x1xf32>
    %327 = arith.divf %325, %326 : vector<32x1xf32>
    %328 = arith.mulf %322, %322 : vector<32x1xf32>
    %329 = arith.subf %327, %328 : vector<32x1xf32>
    %cst_148 = arith.constant 0.000000e+00 : f32
    %330 = vector.broadcast %cst_148 : f32 to vector<32x1xf32>
    %331 = arith.maximumf %329, %330 : vector<32x1xf32>
    %332 = vector.broadcast %322 : vector<32x1xf32> to vector<32x32xf32>
    %333 = arith.subf %312, %332 : vector<32x32xf32>
    %cst_149 = arith.constant 9.99999974E-6 : f32
    %334 = vector.broadcast %cst_149 : f32 to vector<32x1xf32>
    %335 = arith.addf %331, %334 : vector<32x1xf32>
    %336 = math.rsqrt %335 : vector<32x1xf32>
    %337 = vector.broadcast %336 : vector<32x1xf32> to vector<32x32xf32>
    %338 = arith.mulf %333, %337 : vector<32x32xf32>
    %339 = vector.broadcast %315 : vector<1x32xf32> to vector<32x32xf32>
    %340 = arith.mulf %338, %339 : vector<32x32xf32>
    %341 = vector.broadcast %318 : vector<1x32xf32> to vector<32x32xf32>
    %342 = arith.addf %340, %341 : vector<32x32xf32>
    %343 = arith.index_cast %c3_i32 : i32 to index
    %c0_150 = arith.constant 0 : index
    %c0_151 = arith.constant 0 : index
    %344 = vector.load %arg18[%343, %c0_150, %c0_151] : memref<4x32x64xf32, #tpu.memory_space<vmem>>, vector<1x32x64xf32>
    %345 = vector.shape_cast %344 : vector<1x32x64xf32> to vector<32x64xf32>
    %cst_152 = arith.constant dense<0.000000e+00> : vector<32x64xf32>
    %346 = tpu.matmul %342, %345, %cst_152 {dimension_numbers = #tpu.dot_dimension_numbers<[1], [0], [0], [1], [0, 0, 1, 1], [], []>} : vector<32x32xf32>, vector<32x64xf32>, vector<32x64xf32> -> vector<32x64xf32>
    %347 = arith.index_cast %c3_i32 : i32 to index
    %c0_153 = arith.constant 0 : index
    %c0_154 = arith.constant 0 : index
    %348 = vector.load %arg19[%347, %c0_153, %c0_154] : memref<4x1x64xf32, #tpu.memory_space<vmem>>, vector<1x1x64xf32>
    %349 = vector.shape_cast %348 : vector<1x1x64xf32> to vector<1x64xf32>
    %350 = vector.broadcast %349 : vector<1x64xf32> to vector<32x64xf32>
    %351 = arith.addf %346, %350 : vector<32x64xf32>
    %cst_155 = arith.constant 0.000000e+00 : f32
    %352 = vector.broadcast %cst_155 : f32 to vector<32x64xf32>
    %353 = arith.maximumf %351, %352 : vector<32x64xf32>
    %354 = arith.index_cast %c3_i32 : i32 to index
    %c0_156 = arith.constant 0 : index
    %c0_157 = arith.constant 0 : index
    %355 = vector.load %arg20[%354, %c0_156, %c0_157] : memref<4x64x32xf32, #tpu.memory_space<vmem>>, vector<1x64x32xf32>
    %356 = vector.shape_cast %355 : vector<1x64x32xf32> to vector<64x32xf32>
    %cst_158 = arith.constant dense<0.000000e+00> : vector<32x32xf32>
    %357 = tpu.matmul %353, %356, %cst_158 {dimension_numbers = #tpu.dot_dimension_numbers<[1], [0], [0], [1], [0, 0, 1, 1], [], []>} : vector<32x64xf32>, vector<64x32xf32>, vector<32x32xf32> -> vector<32x32xf32>
    %358 = arith.index_cast %c3_i32 : i32 to index
    %c0_159 = arith.constant 0 : index
    %c0_160 = arith.constant 0 : index
    %359 = vector.load %arg21[%358, %c0_159, %c0_160] : memref<4x1x32xf32, #tpu.memory_space<vmem>>, vector<1x1x32xf32>
    %360 = vector.shape_cast %359 : vector<1x1x32xf32> to vector<1x32xf32>
    %361 = vector.broadcast %360 : vector<1x32xf32> to vector<32x32xf32>
    %362 = arith.addf %357, %361 : vector<32x32xf32>
    %363 = arith.addf %342, %362 : vector<32x32xf32>
    %364 = arith.index_cast %c3_i32 : i32 to index
    %c0_161 = arith.constant 0 : index
    %c0_162 = arith.constant 0 : index
    %365 = vector.load %arg22[%364, %c0_161, %c0_162] : memref<4x1x32xf32, #tpu.memory_space<vmem>>, vector<1x1x32xf32>
    %366 = vector.shape_cast %365 : vector<1x1x32xf32> to vector<1x32xf32>
    %367 = arith.index_cast %c3_i32 : i32 to index
    %c0_163 = arith.constant 0 : index
    %c0_164 = arith.constant 0 : index
    %368 = vector.load %arg23[%367, %c0_163, %c0_164] : memref<4x1x32xf32, #tpu.memory_space<vmem>>, vector<1x1x32xf32>
    %369 = vector.shape_cast %368 : vector<1x1x32xf32> to vector<1x32xf32>
    %cst_165 = arith.constant dense<0.000000e+00> : vector<32xf32>
    %370 = vector.multi_reduction <add>, %363, %cst_165 [1] : vector<32x32xf32> to vector<32xf32>
    %371 = vector.shape_cast %370 : vector<32xf32> to vector<32x1xf32>
    %cst_166 = arith.constant 3.200000e+01 : f32
    %372 = vector.broadcast %cst_166 : f32 to vector<32x1xf32>
    %373 = arith.divf %371, %372 : vector<32x1xf32>
    %374 = arith.mulf %363, %363 : vector<32x32xf32>
    %cst_167 = arith.constant dense<0.000000e+00> : vector<32xf32>
    %375 = vector.multi_reduction <add>, %374, %cst_167 [1] : vector<32x32xf32> to vector<32xf32>
    %376 = vector.shape_cast %375 : vector<32xf32> to vector<32x1xf32>
    %cst_168 = arith.constant 3.200000e+01 : f32
    %377 = vector.broadcast %cst_168 : f32 to vector<32x1xf32>
    %378 = arith.divf %376, %377 : vector<32x1xf32>
    %379 = arith.mulf %373, %373 : vector<32x1xf32>
    %380 = arith.subf %378, %379 : vector<32x1xf32>
    %cst_169 = arith.constant 0.000000e+00 : f32
    %381 = vector.broadcast %cst_169 : f32 to vector<32x1xf32>
    %382 = arith.maximumf %380, %381 : vector<32x1xf32>
    %383 = vector.broadcast %373 : vector<32x1xf32> to vector<32x32xf32>
    %384 = arith.subf %363, %383 : vector<32x32xf32>
    %cst_170 = arith.constant 9.99999974E-6 : f32
    %385 = vector.broadcast %cst_170 : f32 to vector<32x1xf32>
    %386 = arith.addf %382, %385 : vector<32x1xf32>
    %387 = math.rsqrt %386 : vector<32x1xf32>
    %388 = vector.broadcast %387 : vector<32x1xf32> to vector<32x32xf32>
    %389 = arith.mulf %384, %388 : vector<32x32xf32>
    %390 = vector.broadcast %366 : vector<1x32xf32> to vector<32x32xf32>
    %391 = arith.mulf %389, %390 : vector<32x32xf32>
    %392 = vector.broadcast %369 : vector<1x32xf32> to vector<32x32xf32>
    %393 = arith.addf %391, %392 : vector<32x32xf32>
    %c4_i32 = arith.constant 4 : i32
    %c0_171 = arith.constant 0 : index
    %c0_172 = arith.constant 0 : index
    %394 = vector.load %arg25[%c0_171, %c0_172] : memref<1x256xf32, #tpu.memory_space<vmem>>, vector<1x256xf32>
    %395 = vector.extract_strided_slice %393 {offsets = [0, 0], sizes = [8, 32], strides = [1, 1]} : vector<32x32xf32> to vector<8x32xf32>
    %c0_173 = arith.constant 0 : index
    %c0_174 = arith.constant 0 : index
    %396 = vector.load %arg24[%c0_173, %c0_174] : memref<128x256xf32, #tpu.memory_space<vmem>>, vector<32x256xf32>
    %cst_175 = arith.constant dense<0.000000e+00> : vector<8x256xf32>
    %397 = tpu.matmul %395, %396, %cst_175 {dimension_numbers = #tpu.dot_dimension_numbers<[1], [0], [0], [1], [0, 0, 1, 1], [], []>} : vector<8x32xf32>, vector<32x256xf32>, vector<8x256xf32> -> vector<8x256xf32>
    %398 = vector.broadcast %394 : vector<1x256xf32> to vector<8x256xf32>
    %399 = arith.addf %398, %397 : vector<8x256xf32>
    %400 = vector.extract_strided_slice %393 {offsets = [8, 0], sizes = [8, 32], strides = [1, 1]} : vector<32x32xf32> to vector<8x32xf32>
    %c32 = arith.constant 32 : index
    %c0_176 = arith.constant 0 : index
    %401 = vector.load %arg24[%c32, %c0_176] : memref<128x256xf32, #tpu.memory_space<vmem>>, vector<32x256xf32>
    %cst_177 = arith.constant dense<0.000000e+00> : vector<8x256xf32>
    %402 = tpu.matmul %400, %401, %cst_177 {dimension_numbers = #tpu.dot_dimension_numbers<[1], [0], [0], [1], [0, 0, 1, 1], [], []>} : vector<8x32xf32>, vector<32x256xf32>, vector<8x256xf32> -> vector<8x256xf32>
    %403 = arith.addf %399, %402 : vector<8x256xf32>
    %404 = vector.extract_strided_slice %393 {offsets = [16, 0], sizes = [8, 32], strides = [1, 1]} : vector<32x32xf32> to vector<8x32xf32>
    %c64 = arith.constant 64 : index
    %c0_178 = arith.constant 0 : index
    %405 = vector.load %arg24[%c64, %c0_178] : memref<128x256xf32, #tpu.memory_space<vmem>>, vector<32x256xf32>
    %cst_179 = arith.constant dense<0.000000e+00> : vector<8x256xf32>
    %406 = tpu.matmul %404, %405, %cst_179 {dimension_numbers = #tpu.dot_dimension_numbers<[1], [0], [0], [1], [0, 0, 1, 1], [], []>} : vector<8x32xf32>, vector<32x256xf32>, vector<8x256xf32> -> vector<8x256xf32>
    %407 = arith.addf %403, %406 : vector<8x256xf32>
    %408 = vector.extract_strided_slice %393 {offsets = [24, 0], sizes = [8, 32], strides = [1, 1]} : vector<32x32xf32> to vector<8x32xf32>
    %c96 = arith.constant 96 : index
    %c0_180 = arith.constant 0 : index
    %409 = vector.load %arg24[%c96, %c0_180] : memref<128x256xf32, #tpu.memory_space<vmem>>, vector<32x256xf32>
    %cst_181 = arith.constant dense<0.000000e+00> : vector<8x256xf32>
    %410 = tpu.matmul %408, %409, %cst_181 {dimension_numbers = #tpu.dot_dimension_numbers<[1], [0], [0], [1], [0, 0, 1, 1], [], []>} : vector<8x32xf32>, vector<32x256xf32>, vector<8x256xf32> -> vector<8x256xf32>
    %411 = arith.addf %407, %410 : vector<8x256xf32>
    %cst_182 = arith.constant 0.000000e+00 : f32
    %412 = vector.broadcast %cst_182 : f32 to vector<8x256xf32>
    %413 = arith.maximumf %411, %412 : vector<8x256xf32>
    %c0_183 = arith.constant 0 : index
    %c0_184 = arith.constant 0 : index
    %414 = vector.load %arg26[%c0_183, %c0_184] : memref<256x128xf32, #tpu.memory_space<vmem>>, vector<256x128xf32>
    %cst_185 = arith.constant dense<0.000000e+00> : vector<8x128xf32>
    %415 = tpu.matmul %413, %414, %cst_185 {dimension_numbers = #tpu.dot_dimension_numbers<[1], [0], [0], [1], [0, 0, 1, 1], [], []>} : vector<8x256xf32>, vector<256x128xf32>, vector<8x128xf32> -> vector<8x128xf32>
    %c0_186 = arith.constant 0 : index
    %c0_187 = arith.constant 0 : index
    %416 = vector.load %arg27[%c0_186, %c0_187] : memref<1x128xf32, #tpu.memory_space<vmem>>, vector<1x128xf32>
    %417 = vector.broadcast %416 : vector<1x128xf32> to vector<8x128xf32>
    %418 = arith.addf %415, %417 : vector<8x128xf32>
    %c0_188 = arith.constant 0 : index
    %c0_189 = arith.constant 0 : index
    %419 = vector.load %arg28[%c0_188, %c0_189] : memref<8x128xf32, #tpu.memory_space<vmem>>, vector<8x128xf32>
    tpu.vector_store %arg28[%c0_188, %c0_189], %418 {strides = array<i32>} : memref<8x128xf32, #tpu.memory_space<vmem>>, vector<8x128xf32>,
    return
  }
  func.func @transform_0(%arg0: i32) -> (i32, i32) {
    %c0_i32 = arith.constant 0 : i32
    %c0_i32_0 = arith.constant 0 : i32
    return %arg0, %c0_i32 : i32, i32
  }
  func.func @transform_1(%arg0: i32) -> (i32, i32) {
    %c0_i32 = arith.constant 0 : i32
    %c0_i32_0 = arith.constant 0 : i32
    return %arg0, %c0_i32 : i32, i32
  }
  func.func @transform_2(%arg0: i32) -> (i32, i32) {
    %c0_i32 = arith.constant 0 : i32
    %c0_i32_0 = arith.constant 0 : i32
    return %arg0, %c0_i32 : i32, i32
  }
  func.func @transform_3(%arg0: i32) -> (i32, i32) {
    %c0_i32 = arith.constant 0 : i32
    %c0_i32_0 = arith.constant 0 : i32
    return %arg0, %c0_i32 : i32, i32
  }
  func.func @transform_4(%arg0: i32) -> (i32, i32) {
    %c0_i32 = arith.constant 0 : i32
    %c0_i32_0 = arith.constant 0 : i32
    %c0_i32_1 = arith.constant 0 : i32
    return %c0_i32, %c0_i32_0 : i32, i32
  }
  func.func @transform_5(%arg0: i32) -> (i32, i32) {
    %c0_i32 = arith.constant 0 : i32
    %c0_i32_0 = arith.constant 0 : i32
    %c0_i32_1 = arith.constant 0 : i32
    return %c0_i32, %c0_i32_0 : i32, i32
  }
  func.func @transform_6(%arg0: i32) -> (i32, i32) {
    %c0_i32 = arith.constant 0 : i32
    %c0_i32_0 = arith.constant 0 : i32
    %c0_i32_1 = arith.constant 0 : i32
    return %c0_i32, %c0_i32_0 : i32, i32
  }
  func.func @transform_7(%arg0: i32) -> (i32, i32) {
    %c0_i32 = arith.constant 0 : i32
    %c0_i32_0 = arith.constant 0 : i32
    %c0_i32_1 = arith.constant 0 : i32
    return %c0_i32, %c0_i32_0 : i32, i32
  }
  func.func @transform_8(%arg0: i32) -> (i32, i32) {
    %c0_i32 = arith.constant 0 : i32
    %c0_i32_0 = arith.constant 0 : i32
    %c0_i32_1 = arith.constant 0 : i32
    return %c0_i32, %c0_i32_0 : i32, i32
  }
  func.func @transform_9(%arg0: i32) -> (i32, i32) {
    %c0_i32 = arith.constant 0 : i32
    %c0_i32_0 = arith.constant 0 : i32
    %c0_i32_1 = arith.constant 0 : i32
    return %c0_i32, %c0_i32_0 : i32, i32
  }
  func.func @transform_10(%arg0: i32) -> (i32, i32) {
    %c0_i32 = arith.constant 0 : i32
    %c0_i32_0 = arith.constant 0 : i32
    %c0_i32_1 = arith.constant 0 : i32
    return %c0_i32, %c0_i32_0 : i32, i32
  }
  func.func @transform_11(%arg0: i32) -> (i32, i32) {
    %c0_i32 = arith.constant 0 : i32
    %c0_i32_0 = arith.constant 0 : i32
    %c0_i32_1 = arith.constant 0 : i32
    return %c0_i32, %c0_i32_0 : i32, i32
  }
  func.func @transform_12(%arg0: i32) -> (i32, i32) {
    %c0_i32 = arith.constant 0 : i32
    %c0_i32_0 = arith.constant 0 : i32
    %c0_i32_1 = arith.constant 0 : i32
    return %c0_i32, %c0_i32_0 : i32, i32
  }
  func.func @transform_13(%arg0: i32) -> (i32, i32, i32) {
    %c0_i32 = arith.constant 0 : i32
    %c0_i32_0 = arith.constant 0 : i32
    %c0_i32_1 = arith.constant 0 : i32
    %c0_i32_2 = arith.constant 0 : i32
    return %c0_i32, %c0_i32_0, %c0_i32_1 : i32, i32, i32
  }
  func.func @transform_14(%arg0: i32) -> (i32, i32, i32) {
    %c0_i32 = arith.constant 0 : i32
    %c0_i32_0 = arith.constant 0 : i32
    %c0_i32_1 = arith.constant 0 : i32
    %c0_i32_2 = arith.constant 0 : i32
    return %c0_i32, %c0_i32_0, %c0_i32_1 : i32, i32, i32
  }
  func.func @transform_15(%arg0: i32) -> (i32, i32, i32) {
    %c0_i32 = arith.constant 0 : i32
    %c0_i32_0 = arith.constant 0 : i32
    %c0_i32_1 = arith.constant 0 : i32
    %c0_i32_2 = arith.constant 0 : i32
    return %c0_i32, %c0_i32_0, %c0_i32_1 : i32, i32, i32
  }
  func.func @transform_16(%arg0: i32) -> (i32, i32, i32) {
    %c0_i32 = arith.constant 0 : i32
    %c0_i32_0 = arith.constant 0 : i32
    %c0_i32_1 = arith.constant 0 : i32
    %c0_i32_2 = arith.constant 0 : i32
    return %c0_i32, %c0_i32_0, %c0_i32_1 : i32, i32, i32
  }
  func.func @transform_17(%arg0: i32) -> (i32, i32, i32) {
    %c0_i32 = arith.constant 0 : i32
    %c0_i32_0 = arith.constant 0 : i32
    %c0_i32_1 = arith.constant 0 : i32
    %c0_i32_2 = arith.constant 0 : i32
    return %c0_i32, %c0_i32_0, %c0_i32_1 : i32, i32, i32
  }
  func.func @transform_18(%arg0: i32) -> (i32, i32, i32) {
    %c0_i32 = arith.constant 0 : i32
    %c0_i32_0 = arith.constant 0 : i32
    %c0_i32_1 = arith.constant 0 : i32
    %c0_i32_2 = arith.constant 0 : i32
    return %c0_i32, %c0_i32_0, %c0_i32_1 : i32, i32, i32
  }
  func.func @transform_19(%arg0: i32) -> (i32, i32, i32) {
    %c0_i32 = arith.constant 0 : i32
    %c0_i32_0 = arith.constant 0 : i32
    %c0_i32_1 = arith.constant 0 : i32
    %c0_i32_2 = arith.constant 0 : i32
    return %c0_i32, %c0_i32_0, %c0_i32_1 : i32, i32, i32
  }
  func.func @transform_20(%arg0: i32) -> (i32, i32, i32) {
    %c0_i32 = arith.constant 0 : i32
    %c0_i32_0 = arith.constant 0 : i32
    %c0_i32_1 = arith.constant 0 : i32
    %c0_i32_2 = arith.constant 0 : i32
    return %c0_i32, %c0_i32_0, %c0_i32_1 : i32, i32, i32
  }
  func.func @transform_21(%arg0: i32) -> (i32, i32, i32) {
    %c0_i32 = arith.constant 0 : i32
    %c0_i32_0 = arith.constant 0 : i32
    %c0_i32_1 = arith.constant 0 : i32
    %c0_i32_2 = arith.constant 0 : i32
    return %c0_i32, %c0_i32_0, %c0_i32_1 : i32, i32, i32
  }
  func.func @transform_22(%arg0: i32) -> (i32, i32, i32) {
    %c0_i32 = arith.constant 0 : i32
    %c0_i32_0 = arith.constant 0 : i32
    %c0_i32_1 = arith.constant 0 : i32
    %c0_i32_2 = arith.constant 0 : i32
    return %c0_i32, %c0_i32_0, %c0_i32_1 : i32, i32, i32
  }
  func.func @transform_23(%arg0: i32) -> (i32, i32) {
    %c0_i32 = arith.constant 0 : i32
    %c0_i32_0 = arith.constant 0 : i32
    %c0_i32_1 = arith.constant 0 : i32
    return %c0_i32, %c0_i32_0 : i32, i32
  }
  func.func @transform_24(%arg0: i32) -> (i32, i32) {
    %c0_i32 = arith.constant 0 : i32
    %c0_i32_0 = arith.constant 0 : i32
    %c0_i32_1 = arith.constant 0 : i32
    return %c0_i32, %c0_i32_0 : i32, i32
  }
  func.func @transform_25(%arg0: i32) -> (i32, i32) {
    %c0_i32 = arith.constant 0 : i32
    %c0_i32_0 = arith.constant 0 : i32
    %c0_i32_1 = arith.constant 0 : i32
    return %c0_i32, %c0_i32_0 : i32, i32
  }
  func.func @transform_26(%arg0: i32) -> (i32, i32) {
    %c0_i32 = arith.constant 0 : i32
    %c0_i32_0 = arith.constant 0 : i32
    %c0_i32_1 = arith.constant 0 : i32
    return %c0_i32, %c0_i32_0 : i32, i32
  }
  func.func @transform_27(%arg0: i32) -> (i32, i32) {
    %c0_i32 = arith.constant 0 : i32
    %c0_i32_0 = arith.constant 0 : i32
    return %arg0, %c0_i32 : i32, i32
  }
}

</mosaic_0001>

<llo_original>
// kernel: tpu_custom_call.1
$region0: #{tpu_custom_call.1}
  #allocation0 [shape = 'u32[]', space=smem, size = 0x4, offset = 0x4, fixed_abs, tag = 'smem constant byte address 0x4 - core index']
  #allocation1 [shape = 'u32[144,128]{1,0:T(1,128)}', space=vmem, size = 0x12000, scoped, tag = 'internal scratch']
  %s0 = inlined_call_operand.hbm [shape: f32[8,64], index: 0, kind: input, shape index: {}]
  %s1 = inlined_call_operand.hbm [shape: f32[8,48], index: 1, kind: input, shape index: {}]
  %s2 = inlined_call_operand.hbm [shape: f32[8,96], index: 2, kind: input, shape index: {}]
  %s3 = inlined_call_operand.vmem [shape: f32[8,1], index: 3, kind: input, shape index: {}]
  %s4 = inlined_call_operand.vmem [shape: f32[64,32], index: 4, kind: input, shape index: {}]
  %s5 = inlined_call_operand.hbm [shape: f32[1,32], index: 5, kind: input, shape index: {}]
  %s6 = inlined_call_operand.vmem [shape: f32[48,32], index: 6, kind: input, shape index: {}]
  %s7 = inlined_call_operand.vmem [shape: f32[1,32], index: 7, kind: input, shape index: {}]
  %s8 = inlined_call_operand.vmem [shape: f32[96,32], index: 8, kind: input, shape index: {}]
  %s9 = inlined_call_operand.hbm [shape: f32[1,32], index: 9, kind: input, shape index: {}]
  %s10 = inlined_call_operand.vmem [shape: f32[1,32], index: 10, kind: input, shape index: {}]
  %s11 = inlined_call_operand.vmem [shape: f32[1,32], index: 11, kind: input, shape index: {}]
  %s12 = inlined_call_operand.vmem [shape: f32[1,32], index: 12, kind: input, shape index: {}]
  %s13 = inlined_call_operand.hbm [shape: f32[4,32,32], index: 13, kind: input, shape index: {}]
  %s14 = inlined_call_operand.vmem [shape: f32[4,1,32], index: 14, kind: input, shape index: {}]
  %s15 = inlined_call_operand.vmem [shape: f32[4,1,32], index: 15, kind: input, shape index: {}]
  %s16 = inlined_call_operand.vmem [shape: f32[4,1,32], index: 16, kind: input, shape index: {}]
  %s17 = inlined_call_operand.hbm [shape: f32[4,32,64], index: 17, kind: input, shape index: {}]
  %s18 = inlined_call_operand.vmem [shape: f32[4,1,64], index: 18, kind: input, shape index: {}]
  %s19 = inlined_call_operand.vmem [shape: f32[4,64,32], index: 19, kind: input, shape index: {}]
  %s20 = inlined_call_operand.vmem [shape: f32[4,1,32], index: 20, kind: input, shape index: {}]
  %s21 = inlined_call_operand.vmem [shape: f32[4,1,32], index: 21, kind: input, shape index: {}]
  %s22 = inlined_call_operand.vmem [shape: f32[4,1,32], index: 22, kind: input, shape index: {}]
  %s23 = inlined_call_operand.vmem [shape: f32[128,256], index: 23, kind: input, shape index: {}]
  %s24 = inlined_call_operand.vmem [shape: f32[1,256], index: 24, kind: input, shape index: {}]
  %s25 = inlined_call_operand.vmem [shape: f32[256,128], index: 25, kind: input, shape index: {}]
  %s26 = inlined_call_operand.vmem [shape: f32[1,128], index: 26, kind: input, shape index: {}]
  %s27 = inlined_call_operand.hbm [shape: f32[8,128], index: 27, kind: output, shape index: {}]
  %s28 = sld [smem:[#allocation0]]
  $region146: #{tpu_custom_call.1} parent=0
    _
  %s30 = ssub.s32 1, %s28
  %s31 = scalar_select 0, %s30, %s28
  $region1: #{tpu_custom_call.1} parent=0
    #allocation2 [shape = 'u8[4096]{0}', space=vmem, size = 0x1000, scoped, tag = 'input window, operand 0, single buffered']
    #allocation3 [shape = 's32[1]{0}', space=sflag, size = 0x4, scoped, tag = 'scoped memory for tpu_custom_call.1']
    #allocation4 [shape = 's32[1]{0}', space=sflag, size = 0x4, scoped, tag = 'scoped memory for tpu_custom_call.1']
    #allocation5 [shape = 'u8[4096]{0}', space=vmem, size = 0x1000, scoped, tag = 'input window, operand 1, single buffered']
    #allocation6 [shape = 's32[1]{0}', space=sflag, size = 0x4, scoped, tag = 'scoped memory for tpu_custom_call.1']
    #allocation7 [shape = 'u8[4096]{0}', space=vmem, size = 0x1000, scoped, tag = 'input window, operand 2, single buffered']
    #allocation8 [shape = 'u8[512]{0}', space=vmem, size = 0x400, scoped, tag = 'input window, operand 5, single buffered']
    #allocation9 [shape = 's32[1]{0}', space=sflag, size = 0x4, scoped, tag = 'scoped memory for tpu_custom_call.1']
    #allocation10 [shape = 'u8[512]{0}', space=vmem, size = 0x400, scoped, tag = 'input window, operand 9, single buffered']
    #allocation11 [shape = 'u8[65536]{0}', space=vmem, size = 0x10000, scoped, tag = 'input window, operand 13, single buffered']
    #allocation12 [shape = 's32[1]{0}', space=sflag, size = 0x4, scoped, tag = 'scoped memory for tpu_custom_call.1']
    #allocation13 [shape = 'u8[65536]{0}', space=vmem, size = 0x10000, scoped, tag = 'input window, operand 17, single buffered']
    #allocation14 [shape = 'u8[4096]{0}', space=vmem, size = 0x1000, scoped, tag = 'output window, operand 0, single buffered']
    %32 = vsyncpa [#allocation3], 0
    %33 = vsyncpa [#allocation6], 0
    %34 = vsyncpa [#allocation9], 0
    %35 = vsyncpa [#allocation12], 0
    %36 = vsyncpa [#allocation4], 0
    // Predicated region
    $region2: #{tpu_custom_call.1} parent=1 // pred_check
      _
    $region3: #{tpu_custom_call.1} parent=1 // pred_check_branch
      %38 = sbr.rel (0) target = $region5
    $region4: #{tpu_custom_call.1} parent=1 // pred_region
      %s40 = ssub.s32 128, 128
      %41 = vsyncadd [#allocation3], %s40
      %s43 = sshll.u32 [#allocation2], 4
      %s44 = int_to_ptr.vmem [resolvable:$true] %s43
      %46 = dma.hbm_to_vmem [thread:$0]  %s0, 128, %s44, [#allocation3]
    $region5: #{tpu_custom_call.1} parent=1 // pred_fallthru
      _
    // Predicated region
    $region6: #{tpu_custom_call.1} parent=1 // pred_check
      _
    $region7: #{tpu_custom_call.1} parent=1 // pred_check_branch
      %48 = sbr.rel (0) target = $region9
    $region8: #{tpu_custom_call.1} parent=1 // pred_region
      %s50 = ssub.s32 128, 128
      %51 = vsyncadd [#allocation6], %s50
      %s53 = sshll.u32 [#allocation5], 4
      %s54 = int_to_ptr.vmem [resolvable:$true] %s53
      %56 = dma.hbm_to_vmem [thread:$0]  %s1, 128, %s54, [#allocation6]
    $region9: #{tpu_custom_call.1} parent=1 // pred_fallthru
      _
    // Predicated region
    $region10: #{tpu_custom_call.1} parent=1 // pred_check
      _
    $region11: #{tpu_custom_call.1} parent=1 // pred_check_branch
      %58 = sbr.rel (0) target = $region13
    $region12: #{tpu_custom_call.1} parent=1 // pred_region
      %s60 = ssub.s32 128, 128
      %61 = vsyncadd [#allocation6], %s60
      %s63 = sshll.u32 [#allocation7], 4
      %s64 = int_to_ptr.vmem [resolvable:$true] %s63
      %66 = dma.hbm_to_vmem [thread:$0]  %s2, 128, %s64, [#allocation6]
    $region13: #{tpu_custom_call.1} parent=1 // pred_fallthru
      _
    // Predicated region
    $region14: #{tpu_custom_call.1} parent=1 // pred_check
      _
    $region15: #{tpu_custom_call.1} parent=1 // pred_check_branch
      %68 = sbr.rel (0) target = $region17
    $region16: #{tpu_custom_call.1} parent=1 // pred_region
      _
    $region17: #{tpu_custom_call.1} parent=1 // pred_fallthru
      _
    // Predicated region
    $region18: #{tpu_custom_call.1} parent=1 // pred_check
      _
    $region19: #{tpu_custom_call.1} parent=1 // pred_check_branch
      %70 = sbr.rel (0) target = $region21
    $region20: #{tpu_custom_call.1} parent=1 // pred_region
      _
    $region21: #{tpu_custom_call.1} parent=1 // pred_fallthru
      _
    // Predicated region
    $region22: #{tpu_custom_call.1} parent=1 // pred_check
      _
    $region23: #{tpu_custom_call.1} parent=1 // pred_check_branch
      %72 = sbr.rel (0) target = $region25
    $region24: #{tpu_custom_call.1} parent=1 // pred_region
      %s74 = ssub.s32 16, 16
      %75 = vsyncadd [#allocation9], %s74
      %s77 = sshll.u32 [#allocation8], 4
      %s78 = int_to_ptr.vmem [resolvable:$true] %s77
      %80 = dma.hbm_to_vmem [thread:$0]  %s5, 16, %s78, [#allocation9]
    $region25: #{tpu_custom_call.1} parent=1 // pred_fallthru
      _
    // Predicated region
    $region26: #{tpu_custom_call.1} parent=1 // pred_check
      _
    $region27: #{tpu_custom_call.1} parent=1 // pred_check_branch
      %82 = sbr.rel (0) target = $region29
    $region28: #{tpu_custom_call.1} parent=1 // pred_region
      _
    $region29: #{tpu_custom_call.1} parent=1 // pred_fallthru
      _
    // Predicated region
    $region30: #{tpu_custom_call.1} parent=1 // pred_check
      _
    $region31: #{tpu_custom_call.1} parent=1 // pred_check_branch
      %84 = sbr.rel (0) target = $region33
    $region32: #{tpu_custom_call.1} parent=1 // pred_region
      _
    $region33: #{tpu_custom_call.1} parent=1 // pred_fallthru
      _
    // Predicated region
    $region34: #{tpu_custom_call.1} parent=1 // pred_check
      _
    $region35: #{tpu_custom_call.1} parent=1 // pred_check_branch
      %86 = sbr.rel (0) target = $region37
    $region36: #{tpu_custom_call.1} parent=1 // pred_region
      _
    $region37: #{tpu_custom_call.1} parent=1 // pred_fallthru
      _
    // Predicated region
    $region38: #{tpu_custom_call.1} parent=1 // pred_check
      _
    $region39: #{tpu_custom_call.1} parent=1 // pred_check_branch
      %88 = sbr.rel (0) target = $region41
    $region40: #{tpu_custom_call.1} parent=1 // pred_region
      %s90 = ssub.s32 16, 16
      %91 = vsyncadd [#allocation9], %s90
      %s93 = sshll.u32 [#allocation10], 4
      %s94 = int_to_ptr.vmem [resolvable:$true] %s93
      %96 = dma.hbm_to_vmem [thread:$0]  %s9, 16, %s94, [#allocation9]
    $region41: #{tpu_custom_call.1} parent=1 // pred_fallthru
      _
    // Predicated region
    $region42: #{tpu_custom_call.1} parent=1 // pred_check
      _
    $region43: #{tpu_custom_call.1} parent=1 // pred_check_branch
      %98 = sbr.rel (0) target = $region45
    $region44: #{tpu_custom_call.1} parent=1 // pred_region
      _
    $region45: #{tpu_custom_call.1} parent=1 // pred_fallthru
      _
    // Predicated region
    $region46: #{tpu_custom_call.1} parent=1 // pred_check
      _
    $region47: #{tpu_custom_call.1} parent=1 // pred_check_branch
      %100 = sbr.rel (0) target = $region49
    $region48: #{tpu_custom_call.1} parent=1 // pred_region
      _
    $region49: #{tpu_custom_call.1} parent=1 // pred_fallthru
      _
    // Predicated region
    $region50: #{tpu_custom_call.1} parent=1 // pred_check
      _
    $region51: #{tpu_custom_call.1} parent=1 // pred_check_branch
      %102 = sbr.rel (0) target = $region53
    $region52: #{tpu_custom_call.1} parent=1 // pred_region
      _
    $region53: #{tpu_custom_call.1} parent=1 // pred_fallthru
      _
    // Predicated region
    $region54: #{tpu_custom_call.1} parent=1 // pred_check
      _
    $region55: #{tpu_custom_call.1} parent=1 // pred_check_branch
      %104 = sbr.rel (0) target = $region57
    $region56: #{tpu_custom_call.1} parent=1 // pred_region
      %s106 = ssub.s32 2048, 2048
      %107 = vsyncadd [#allocation12], %s106
      %s108 = sshll.u32 [#allocation11], 4
      %s109 = int_to_ptr.vmem [resolvable:$true] %s108
      %114 = dma.hbm_to_vmem [thread:$0]  %s13, 2048, %s109, [#allocation12], 128, 128, 8
    $region57: #{tpu_custom_call.1} parent=1 // pred_fallthru
      _
    // Predicated region
    $region58: #{tpu_custom_call.1} parent=1 // pred_check
      _
    $region59: #{tpu_custom_call.1} parent=1 // pred_check_branch
      %116 = sbr.rel (0) target = $region61
    $region60: #{tpu_custom_call.1} parent=1 // pred_region
      _
    $region61: #{tpu_custom_call.1} parent=1 // pred_fallthru
      _
    // Predicated region
    $region62: #{tpu_custom_call.1} parent=1 // pred_check
      _
    $region63: #{tpu_custom_call.1} parent=1 // pred_check_branch
      %118 = sbr.rel (0) target = $region65
    $region64: #{tpu_custom_call.1} parent=1 // pred_region
      _
    $region65: #{tpu_custom_call.1} parent=1 // pred_fallthru
      _
    // Predicated region
    $region66: #{tpu_custom_call.1} parent=1 // pred_check
      _
    $region67: #{tpu_custom_call.1} parent=1 // pred_check_branch
      %120 = sbr.rel (0) target = $region69
    $region68: #{tpu_custom_call.1} parent=1 // pred_region
      _
    $region69: #{tpu_custom_call.1} parent=1 // pred_fallthru
      _
    // Predicated region
    $region70: #{tpu_custom_call.1} parent=1 // pred_check
      _
    $region71: #{tpu_custom_call.1} parent=1 // pred_check_branch
      %122 = sbr.rel (0) target = $region73
    $region72: #{tpu_custom_call.1} parent=1 // pred_region
      %s124 = ssub.s32 2048, 2048
      %125 = vsyncadd [#allocation12], %s124
      %s126 = sshll.u32 [#allocation13], 4
      %s127 = int_to_ptr.vmem [resolvable:$true] %s126
      %132 = dma.hbm_to_vmem [thread:$0]  %s17, 2048, %s127, [#allocation12], 128, 128, 8
    $region73: #{tpu_custom_call.1} parent=1 // pred_fallthru
      _
    // Predicated region
    $region74: #{tpu_custom_call.1} parent=1 // pred_check
      _
    $region75: #{tpu_custom_call.1} parent=1 // pred_check_branch
      %134 = sbr.rel (0) target = $region77
    $region76: #{tpu_custom_call.1} parent=1 // pred_region
      _
    $region77: #{tpu_custom_call.1} parent=1 // pred_fallthru
      _
    // Predicated region
    $region78: #{tpu_custom_call.1} parent=1 // pred_check
      _
    $region79: #{tpu_custom_call.1} parent=1 // pred_check_branch
      %136 = sbr.rel (0) target = $region81
    $region80: #{tpu_custom_call.1} parent=1 // pred_region
      _
    $region81: #{tpu_custom_call.1} parent=1 // pred_fallthru
      _
    // Predicated region
    $region82: #{tpu_custom_call.1} parent=1 // pred_check
      _
    $region83: #{tpu_custom_call.1} parent=1 // pred_check_branch
      %138 = sbr.rel (0) target = $region85
    $region84: #{tpu_custom_call.1} parent=1 // pred_region
      _
    $region85: #{tpu_custom_call.1} parent=1 // pred_fallthru
      _
    // Predicated region
    $region86: #{tpu_custom_call.1} parent=1 // pred_check
      _
    $region87: #{tpu_custom_call.1} parent=1 // pred_check_branch
      %140 = sbr.rel (0) target = $region89
    $region88: #{tpu_custom_call.1} parent=1 // pred_region
      _
    $region89: #{tpu_custom_call.1} parent=1 // pred_fallthru
      _
    // Predicated region
    $region90: #{tpu_custom_call.1} parent=1 // pred_check
      _
    $region91: #{tpu_custom_call.1} parent=1 // pred_check_branch
      %142 = sbr.rel (0) target = $region93
    $region92: #{tpu_custom_call.1} parent=1 // pred_region
      _
    $region93: #{tpu_custom_call.1} parent=1 // pred_fallthru
      _
    // Predicated region
    $region94: #{tpu_custom_call.1} parent=1 // pred_check
      _
    $region95: #{tpu_custom_call.1} parent=1 // pred_check_branch
      %144 = sbr.rel (0) target = $region97
    $region96: #{tpu_custom_call.1} parent=1 // pred_region
      _
    $region97: #{tpu_custom_call.1} parent=1 // pred_fallthru
      _
    // Predicated region
    $region98: #{tpu_custom_call.1} parent=1 // pred_check
      _
    $region99: #{tpu_custom_call.1} parent=1 // pred_check_branch
      %146 = sbr.rel (0) target = $region101
    $region100: #{tpu_custom_call.1} parent=1 // pred_region
      _
    $region101: #{tpu_custom_call.1} parent=1 // pred_fallthru
      _
    // Predicated region
    $region102: #{tpu_custom_call.1} parent=1 // pred_check
      _
    $region103: #{tpu_custom_call.1} parent=1 // pred_check_branch
      %148 = sbr.rel (0) target = $region105
    $region104: #{tpu_custom_call.1} parent=1 // pred_region
      _
    $region105: #{tpu_custom_call.1} parent=1 // pred_fallthru
      _
    // Predicated region
    $region106: #{tpu_custom_call.1} parent=1 // pred_check
      _
    $region107: #{tpu_custom_call.1} parent=1 // pred_check_branch
      %150 = sbr.rel (0) target = $region109
    $region108: #{tpu_custom_call.1} parent=1 // pred_region
      _
    $region109: #{tpu_custom_call.1} parent=1 // pred_fallthru
      _
    // Predicated region
    $region110: #{tpu_custom_call.1} parent=1 // pred_check
      _
    $region111: #{tpu_custom_call.1} parent=1 // pred_check_branch
      %152 = sbr.rel (0) target = $region113
    $region112: #{tpu_custom_call.1} parent=1 // pred_region
      %153 = dma.done [#allocation3], 128
    $region113: #{tpu_custom_call.1} parent=1 // pred_fallthru
      _
    // Predicated region
    $region114: #{tpu_custom_call.1} parent=1 // pred_check
      _
    $region115: #{tpu_custom_call.1} parent=1 // pred_check_branch
      %155 = sbr.rel (0) target = $region117
    $region116: #{tpu_custom_call.1} parent=1 // pred_region
      %156 = dma.done [#allocation6], 128
    $region117: #{tpu_custom_call.1} parent=1 // pred_fallthru
      _
    // Predicated region
    $region118: #{tpu_custom_call.1} parent=1 // pred_check
      _
    $region119: #{tpu_custom_call.1} parent=1 // pred_check_branch
      %158 = sbr.rel (0) target = $region121
    $region120: #{tpu_custom_call.1} parent=1 // pred_region
      %159 = dma.done [#allocation6], 128
    $region121: #{tpu_custom_call.1} parent=1 // pred_fallthru
      _
    // Predicated region
    $region122: #{tpu_custom_call.1} parent=1 // pred_check
      _
    $region123: #{tpu_custom_call.1} parent=1 // pred_check_branch
      %161 = sbr.rel (0) target = $region125
    $region124: #{tpu_custom_call.1} parent=1 // pred_region
      %162 = dma.done [#allocation9], 16
    $region125: #{tpu_custom_call.1} parent=1 // pred_fallthru
      _
    // Predicated region
    $region126: #{tpu_custom_call.1} parent=1 // pred_check
      _
    $region127: #{tpu_custom_call.1} parent=1 // pred_check_branch
      %164 = sbr.rel (0) target = $region129
    $region128: #{tpu_custom_call.1} parent=1 // pred_region
      %165 = dma.done [#allocation9], 16
    $region129: #{tpu_custom_call.1} parent=1 // pred_fallthru
      _
    // Predicated region
    $region130: #{tpu_custom_call.1} parent=1 // pred_check
      _
    $region131: #{tpu_custom_call.1} parent=1 // pred_check_branch
      %167 = sbr.rel (0) target = $region133
    $region132: #{tpu_custom_call.1} parent=1 // pred_region
      %168 = dma.done [#allocation12], 2048
    $region133: #{tpu_custom_call.1} parent=1 // pred_fallthru
      _
    // Predicated region
    $region134: #{tpu_custom_call.1} parent=1 // pred_check
      _
    $region135: #{tpu_custom_call.1} parent=1 // pred_check_branch
      %170 = sbr.rel (0) target = $region137
    $region136: #{tpu_custom_call.1} parent=1 // pred_region
      %171 = dma.done [#allocation12], 2048
    $region137: #{tpu_custom_call.1} parent=1 // pred_fallthru
      _
    %v172 = vld [vmem:[#allocation2] sm:$0xff]
    %v173 = vld [vmem:[%s4] sm:$0xff]
    %v174 = vld [vmem:[%s4 + $0x8] sm:$0xff]
    %v175 = vld [vmem:[%s4 + $0x10] sm:$0xff]
    %v176 = vld [vmem:[%s4 + $0x18] sm:$0xff]
    %v177 = vld [vmem:[%s4 + $0x20] sm:$0xff]
    %v178 = vld [vmem:[%s4 + $0x28] sm:$0xff]
    %v179 = vld [vmem:[%s4 + $0x30] sm:$0xff]
    %v180 = vld [vmem:[%s4 + $0x38] sm:$0xff]
    %v181 = vld [vmem:[#allocation8] sm:$0x1]
    %v183 = vlaneseq
    %v184 = vshrl.u32 %v183, 7
    %v185 = vsub.s32 0, %v184
    %v186 = vrot.slane %v181, %v185
    %vm188 = vcmask 523264
    %v190 = vsel %vm188, %v172, 0
    %192 = vmatprep.subr.mxu0 0.0
    %193 = vmatpush1.msra.mxu0 %v173
    %194 = vmatprep.subr.mxu0 0.0
    %195 = vmatpush1.msra.mxu0 %v174
    %196 = vmatprep.subr.mxu0 0.0
    %197 = vmatpush1.msra.mxu0 %v175
    %198 = vmatprep.subr.mxu0 0.0
    %199 = vmatpush1.msra.mxu0 %v176
    %200 = vmatprep.subr.mxu0 0.0
    %201 = vmatpush1.msra.mxu0 %v177
    %202 = vmatprep.subr.mxu0 0.0
    %203 = vmatpush1.msra.mxu0 %v178
    %204 = vmatprep.subr.mxu0 0.0
    %205 = vmatpush1.msra.mxu0 %v179
    %206 = vmatprep.subr.mxu0 0.0
    %207 = vmatpush1.msra.mxu0 %v180
    %208 = vmatprep.subr.mxu0 0.0
    %209 = vmatpush1.msra.mxu0 0.0
    %210 = vmatprep.subr.mxu0 0.0
    %211 = vmatpush1.msra.mxu0 0.0
    %212 = vmatprep.subr.mxu0 0.0
    %213 = vmatpush1.msra.mxu0 0.0
    %214 = vmatprep.subr.mxu0 0.0
    %215 = vmatpush1.msra.mxu0 0.0
    %216 = vmatprep.subr.mxu0 0.0
    %217 = vmatpush1.msra.mxu0 0.0
    %218 = vmatprep.subr.mxu0 0.0
    %219 = vmatpush1.msra.mxu0 0.0
    %220 = vmatprep.subr.mxu0 0.0
    %221 = vmatpush1.msra.mxu0 0.0
    %222 = vmatprep.subr.mxu0 0.0
    %223 = vmatpush1.msra.mxu0 0.0
    %224 = vmatprep.subr.mxu0 0.0
    %225 = vmatpush1.msra.mxu0 0.0
    %226 = vmatprep.subr.mxu0 0.0
    %227 = vmatpush1.msra.mxu0 0.0
    %228 = vmatprep.subr.mxu0 0.0
    %229 = vmatpush1.msra.mxu0 0.0
    %230 = vmatprep.subr.mxu0 0.0
    %231 = vmatpush1.msra.mxu0 0.0
    %232 = vmatprep.subr.mxu0 0.0
    %233 = vmatpush1.msra.mxu0 0.0
    %234 = vmatprep.subr.mxu0 0.0
    %235 = vmatpush1.msra.mxu0 0.0
    %236 = vmatprep.subr.mxu0 0.0
    %237 = vmatpush1.msra.mxu0 0.0
    %238 = vmatprep.subr.mxu0 0.0
    %239 = vmatpush1.msra.mxu0 0.0
    %240 = vmatprep.subr.mxu0 0.0
    %241 = vmatpush1.msra.mxu0 0.0
    %242 = vmatprep.subr.mxu0 0.0
    %243 = vmatpush1.msra.mxu0 0.0
    %244 = vmatprep.subr.mxu0 0.0
    %245 = vmatpush1.msra.mxu0 0.0
    %246 = vmatprep.subr.mxu0 0.0
    %247 = vmatpush1.msra.mxu0 0.0
    %248 = vmatprep.subr.mxu0 0.0
    %249 = vmatpush1.msra.mxu0 0.0
    %250 = vmatprep.subr.mxu0 0.0
    %251 = vmatpush1.msra.mxu0 0.0
    %252 = vmatprep.subr.mxu0 0.0
    %253 = vmatpush1.msra.mxu0 0.0
    %254 = vmatprep.subr.mxu0 0.0
    %255 = vmatpush1.msra.mxu0 0.0
    %256 = vmatprep.mubr.f32.mxu0 0.0
    %257 = vmatmul.mubr.f32.gmra.mrb[0].mxu0 %v190
    %v258 = vpop.f32.mrb[0].mxu0
    %v259 = vadd.f32 %v186, %v258
    %v260 = vpop.f32.mrb[0].mxu0
    %261 = vdwg.mxu0
    %v262 = vld [vmem:[#allocation5] sm:$0xff]
    %v263 = vld [vmem:[%s6] sm:$0xff]
    %v264 = vld [vmem:[%s6 + $0x8] sm:$0xff]
    %v265 = vld [vmem:[%s6 + $0x10] sm:$0xff]
    %v266 = vld [vmem:[%s6 + $0x18] sm:$0xff]
    %v267 = vld [vmem:[%s6 + $0x20] sm:$0xff]
    %v268 = vld [vmem:[%s6 + $0x28] sm:$0xff]
    %v269 = vld [vmem:[%s7] sm:$0x1]
    %v271 = vlaneseq
    %v272 = vshrl.u32 %v271, 7
    %v273 = vsub.s32 0, %v272
    %v274 = vrot.slane %v269, %v273
    %vm276 = vcmask 392192
    %v278 = vsel %vm276, %v262, 0
    %280 = vmatprep.subr.mxu0 0.0
    %281 = vmatpush1.msra.mxu0 %v263
    %282 = vmatprep.subr.mxu0 0.0
    %283 = vmatpush1.msra.mxu0 %v264
    %284 = vmatprep.subr.mxu0 0.0
    %285 = vmatpush1.msra.mxu0 %v265
    %286 = vmatprep.subr.mxu0 0.0
    %287 = vmatpush1.msra.mxu0 %v266
    %288 = vmatprep.subr.mxu0 0.0
    %289 = vmatpush1.msra.mxu0 %v267
    %290 = vmatprep.subr.mxu0 0.0
    %291 = vmatpush1.msra.mxu0 %v268
    %292 = vmatprep.subr.mxu0 0.0
    %293 = vmatpush1.msra.mxu0 0.0
    %294 = vmatprep.subr.mxu0 0.0
    %295 = vmatpush1.msra.mxu0 0.0
    %296 = vmatprep.subr.mxu0 0.0
    %297 = vmatpush1.msra.mxu0 0.0
    %298 = vmatprep.subr.mxu0 0.0
    %299 = vmatpush1.msra.mxu0 0.0
    %300 = vmatprep.subr.mxu0 0.0
    %301 = vmatpush1.msra.mxu0 0.0
    %302 = vmatprep.subr.mxu0 0.0
    %303 = vmatpush1.msra.mxu0 0.0
    %304 = vmatprep.subr.mxu0 0.0
    %305 = vmatpush1.msra.mxu0 0.0
    %306 = vmatprep.subr.mxu0 0.0
    %307 = vmatpush1.msra.mxu0 0.0
    %308 = vmatprep.subr.mxu0 0.0
    %309 = vmatpush1.msra.mxu0 0.0
    %310 = vmatprep.subr.mxu0 0.0
    %311 = vmatpush1.msra.mxu0 0.0
    %312 = vmatprep.subr.mxu0 0.0
    %313 = vmatpush1.msra.mxu0 0.0
    %314 = vmatprep.subr.mxu0 0.0
    %315 = vmatpush1.msra.mxu0 0.0
    %316 = vmatprep.subr.mxu0 0.0
    %317 = vmatpush1.msra.mxu0 0.0
    %318 = vmatprep.subr.mxu0 0.0
    %319 = vmatpush1.msra.mxu0 0.0
    %320 = vmatprep.subr.mxu0 0.0
    %321 = vmatpush1.msra.mxu0 0.0
    %322 = vmatprep.subr.mxu0 0.0
    %323 = vmatpush1.msra.mxu0 0.0
    %324 = vmatprep.subr.mxu0 0.0
    %325 = vmatpush1.msra.mxu0 0.0
    %326 = vmatprep.subr.mxu0 0.0
    %327 = vmatpush1.msra.mxu0 0.0
    %328 = vmatprep.subr.mxu0 0.0
    %329 = vmatpush1.msra.mxu0 0.0
    %330 = vmatprep.subr.mxu0 0.0
    %331 = vmatpush1.msra.mxu0 0.0
    %332 = vmatprep.subr.mxu0 0.0
    %333 = vmatpush1.msra.mxu0 0.0
    %334 = vmatprep.subr.mxu0 0.0
    %335 = vmatpush1.msra.mxu0 0.0
    %336 = vmatprep.subr.mxu0 0.0
    %337 = vmatpush1.msra.mxu0 0.0
    %338 = vmatprep.subr.mxu0 0.0
    %339 = vmatpush1.msra.mxu0 0.0
    %340 = vmatprep.subr.mxu0 0.0
    %341 = vmatpush1.msra.mxu0 0.0
    %342 = vmatprep.subr.mxu0 0.0
    %343 = vmatpush1.msra.mxu0 0.0
    %344 = vmatprep.mubr.f32.mxu0 0.0
    %345 = vmatmul.mubr.f32.gmra.mrb[0].mxu0 %v278
    %v346 = vpop.f32.mrb[0].mxu0
    %v347 = vadd.f32 %v274, %v346
    %v348 = vpop.f32.mrb[0].mxu0
    %349 = vdwg.mxu0
    %v350 = vld [vmem:[#allocation7] sm:$0xff]
    %v351 = vld [vmem:[%s8] sm:$0xff]
    %v352 = vld [vmem:[%s8 + $0x8] sm:$0xff]
    %v353 = vld [vmem:[%s8 + $0x10] sm:$0xff]
    %v354 = vld [vmem:[%s8 + $0x18] sm:$0xff]
    %v355 = vld [vmem:[%s8 + $0x20] sm:$0xff]
    %v356 = vld [vmem:[%s8 + $0x28] sm:$0xff]
    %v357 = vld [vmem:[%s8 + $0x30] sm:$0xff]
    %v358 = vld [vmem:[%s8 + $0x38] sm:$0xff]
    %v359 = vld [vmem:[%s8 + $0x40] sm:$0xff]
    %v360 = vld [vmem:[%s8 + $0x48] sm:$0xff]
    %v361 = vld [vmem:[%s8 + $0x50] sm:$0xff]
    %v362 = vld [vmem:[%s8 + $0x58] sm:$0xff]
    %v363 = vld [vmem:[#allocation10] sm:$0x1]
    %v365 = vlaneseq
    %v366 = vshrl.u32 %v365, 7
    %v367 = vsub.s32 0, %v366
    %v368 = vrot.slane %v363, %v367
    %vm370 = vcmask 785408
    %v372 = vsel %vm370, %v350, 0
    %374 = vmatprep.subr.mxu0 0.0
    %375 = vmatpush1.msra.mxu0 %v351
    %376 = vmatprep.subr.mxu0 0.0
    %377 = vmatpush1.msra.mxu0 %v352
    %378 = vmatprep.subr.mxu0 0.0
    %379 = vmatpush1.msra.mxu0 %v353
    %380 = vmatprep.subr.mxu0 0.0
    %381 = vmatpush1.msra.mxu0 %v354
    %382 = vmatprep.subr.mxu0 0.0
    %383 = vmatpush1.msra.mxu0 %v355
    %384 = vmatprep.subr.mxu0 0.0
    %385 = vmatpush1.msra.mxu0 %v356
    %386 = vmatprep.subr.mxu0 0.0
    %387 = vmatpush1.msra.mxu0 %v357
    %388 = vmatprep.subr.mxu0 0.0
    %389 = vmatpush1.msra.mxu0 %v358
    %390 = vmatprep.subr.mxu0 0.0
    %391 = vmatpush1.msra.mxu0 %v359
    %392 = vmatprep.subr.mxu0 0.0
    %393 = vmatpush1.msra.mxu0 %v360
    %394 = vmatprep.subr.mxu0 0.0
    %395 = vmatpush1.msra.mxu0 %v361
    %396 = vmatprep.subr.mxu0 0.0
    %397 = vmatpush1.msra.mxu0 %v362
    %398 = vmatprep.subr.mxu0 0.0
    %399 = vmatpush1.msra.mxu0 0.0
    %400 = vmatprep.subr.mxu0 0.0
    %401 = vmatpush1.msra.mxu0 0.0
    %402 = vmatprep.subr.mxu0 0.0
    %403 = vmatpush1.msra.mxu0 0.0
    %404 = vmatprep.subr.mxu0 0.0
    %405 = vmatpush1.msra.mxu0 0.0
    %406 = vmatprep.subr.mxu0 0.0
    %407 = vmatpush1.msra.mxu0 0.0
    %408 = vmatprep.subr.mxu0 0.0
    %409 = vmatpush1.msra.mxu0 0.0
    %410 = vmatprep.subr.mxu0 0.0
    %411 = vmatpush1.msra.mxu0 0.0
    %412 = vmatprep.subr.mxu0 0.0
    %413 = vmatpush1.msra.mxu0 0.0
    %414 = vmatprep.subr.mxu0 0.0
    %415 = vmatpush1.msra.mxu0 0.0
    %416 = vmatprep.subr.mxu0 0.0
    %417 = vmatpush1.msra.mxu0 0.0
    %418 = vmatprep.subr.mxu0 0.0
    %419 = vmatpush1.msra.mxu0 0.0
    %420 = vmatprep.subr.mxu0 0.0
    %421 = vmatpush1.msra.mxu0 0.0
    %422 = vmatprep.subr.mxu0 0.0
    %423 = vmatpush1.msra.mxu0 0.0
    %424 = vmatprep.subr.mxu0 0.0
    %425 = vmatpush1.msra.mxu0 0.0
    %426 = vmatprep.subr.mxu0 0.0
    %427 = vmatpush1.msra.mxu0 0.0
    %428 = vmatprep.subr.mxu0 0.0
    %429 = vmatpush1.msra.mxu0 0.0
    %430 = vmatprep.subr.mxu0 0.0
    %431 = vmatpush1.msra.mxu0 0.0
    %432 = vmatprep.subr.mxu0 0.0
    %433 = vmatpush1.msra.mxu0 0.0
    %434 = vmatprep.subr.mxu0 0.0
    %435 = vmatpush1.msra.mxu0 0.0
    %436 = vmatprep.subr.mxu0 0.0
    %437 = vmatpush1.msra.mxu0 0.0
    %438 = vmatprep.mubr.f32.mxu0 0.0
    %439 = vmatmul.mubr.f32.gmra.mrb[0].mxu0 %v372
    %v440 = vpop.f32.mrb[0].mxu0
    %v441 = vadd.f32 %v368, %v440
    %v442 = vpop.f32.mrb[0].mxu0
    %443 = vdwg.mxu0
    %v444 = vld [vmem:[%s3] sm:$0xff]
    %v445 = vld [vmem:[%s10] sm:$0x1]
    %447 = vset.pattern.permute.xlu0 0
    %448 = vperm.xlu0 %447, %v444
    %v449 = vpop.permute.xlu0 %448
    %v452 = vlaneseq
    %v453 = vshrl.u32 %v452, 7
    %v454 = vsub.s32 0, %v453
    %v455 = vrot.slane %v445, %v454
    %v457 = vmul.f32 %v449, %v455
    %v458 = vld [vmem:[%s11] sm:$0x1]
    %v460 = vlaneseq
    %v461 = vshrl.u32 %v460, 7
    %v462 = vsub.s32 0, %v461
    %v463 = vrot.slane %v458, %v462
    %v465 = vadd.f32 %v457, %v463
    %v466 = vld [vmem:[%s12] sm:$0x1]
    %v468 = vlaneseq
    %v469 = vshrl.u32 %v468, 7
    %v470 = vsub.s32 0, %v469
    %v471 = vrot.slane %v466, %v470
    %v473 = vadd.f32 %v259, %v471
    %v474 = vadd.f32 %v347, %v471
    %v475 = vadd.f32 %v441, %v471
    %v476 = vadd.f32 %v465, %v471
    %v477 = vld [vmem:[#allocation11] sm:$0xff]
    %v478 = vld [vmem:[#allocation11 + $0x8] sm:$0xff]
    %v479 = vld [vmem:[#allocation11 + $0x10] sm:$0xff]
    %v480 = vld [vmem:[#allocation11 + $0x18] sm:$0xff]
    %v481 = vld [vmem:[%s14] sm:$0x1]
    %v483 = vlaneseq
    %v484 = vshrl.u32 %v483, 7
    %v485 = vsub.s32 0, %v484
    %v486 = vrot.slane %v481, %v485
    %vm488 = vcmask 261120
    %v490 = vsel %vm488, %v473, 0
    %v493 = vsel %vm488, %v474, 0
    %v496 = vsel %vm488, %v475, 0
    %v499 = vsel %vm488, %v476, 0
    %501 = vmatprep.subr.mxu0 0.0
    %502 = vmatpush1.msra.mxu0 %v477
    %503 = vmatprep.subr.mxu0 0.0
    %504 = vmatpush1.msra.mxu0 %v478
    %505 = vmatprep.subr.mxu0 0.0
    %506 = vmatpush1.msra.mxu0 %v479
    %507 = vmatprep.subr.mxu0 0.0
    %508 = vmatpush1.msra.mxu0 %v480
    %509 = vmatprep.subr.mxu0 0.0
    %510 = vmatpush1.msra.mxu0 0.0
    %511 = vmatprep.subr.mxu0 0.0
    %512 = vmatpush1.msra.mxu0 0.0
    %513 = vmatprep.subr.mxu0 0.0
    %514 = vmatpush1.msra.mxu0 0.0
    %515 = vmatprep.subr.mxu0 0.0
    %516 = vmatpush1.msra.mxu0 0.0
    %517 = vmatprep.subr.mxu0 0.0
    %518 = vmatpush1.msra.mxu0 0.0
    %519 = vmatprep.subr.mxu0 0.0
    %520 = vmatpush1.msra.mxu0 0.0
    %521 = vmatprep.subr.mxu0 0.0
    %522 = vmatpush1.msra.mxu0 0.0
    %523 = vmatprep.subr.mxu0 0.0
    %524 = vmatpush1.msra.mxu0 0.0
    %525 = vmatprep.subr.mxu0 0.0
    %526 = vmatpush1.msra.mxu0 0.0
    %527 = vmatprep.subr.mxu0 0.0
    %528 = vmatpush1.msra.mxu0 0.0
    %529 = vmatprep.subr.mxu0 0.0
    %530 = vmatpush1.msra.mxu0 0.0
    %531 = vmatprep.subr.mxu0 0.0
    %532 = vmatpush1.msra.mxu0 0.0
    %533 = vmatprep.subr.mxu0 0.0
    %534 = vmatpush1.msra.mxu0 0.0
    %535 = vmatprep.subr.mxu0 0.0
    %536 = vmatpush1.msra.mxu0 0.0
    %537 = vmatprep.subr.mxu0 0.0
    %538 = vmatpush1.msra.mxu0 0.0
    %539 = vmatprep.subr.mxu0 0.0
    %540 = vmatpush1.msra.mxu0 0.0
    %541 = vmatprep.subr.mxu0 0.0
    %542 = vmatpush1.msra.mxu0 0.0
    %543 = vmatprep.subr.mxu0 0.0
    %544 = vmatpush1.msra.mxu0 0.0
    %545 = vmatprep.subr.mxu0 0.0
    %546 = vmatpush1.msra.mxu0 0.0
    %547 = vmatprep.subr.mxu0 0.0
    %548 = vmatpush1.msra.mxu0 0.0
    %549 = vmatprep.subr.mxu0 0.0
    %550 = vmatpush1.msra.mxu0 0.0
    %551 = vmatprep.subr.mxu0 0.0
    %552 = vmatpush1.msra.mxu0 0.0
    %553 = vmatprep.subr.mxu0 0.0
    %554 = vmatpush1.msra.mxu0 0.0
    %555 = vmatprep.subr.mxu0 0.0
    %556 = vmatpush1.msra.mxu0 0.0
    %557 = vmatprep.subr.mxu0 0.0
    %558 = vmatpush1.msra.mxu0 0.0
    %559 = vmatprep.subr.mxu0 0.0
    %560 = vmatpush1.msra.mxu0 0.0
    %561 = vmatprep.subr.mxu0 0.0
    %562 = vmatpush1.msra.mxu0 0.0
    %563 = vmatprep.subr.mxu0 0.0
    %564 = vmatpush1.msra.mxu0 0.0
    %565 = vmatprep.mubr.f32.mxu0 0.0
    %566 = vmatmul.mubr.f32.gmra.mrb[0].mxu0 %v490
    %v567 = vpop.f32.mrb[0].mxu0
    %v568 = vadd.f32 %v486, %v567
    %v569 = vpop.f32.mrb[0].mxu0
    %570 = vmatprep.mubr.f32.mxu0 0.0
    %571 = vmatmul.mubr.f32.gmra.mrb[0].mxu0 %v493
    %v572 = vpop.f32.mrb[0].mxu0
    %v573 = vadd.f32 %v486, %v572
    %v574 = vpop.f32.mrb[0].mxu0
    %575 = vmatprep.mubr.f32.mxu0 0.0
    %576 = vmatmul.mubr.f32.gmra.mrb[0].mxu0 %v496
    %v577 = vpop.f32.mrb[0].mxu0
    %v578 = vadd.f32 %v486, %v577
    %v579 = vpop.f32.mrb[0].mxu0
    %580 = vmatprep.mubr.f32.mxu0 0.0
    %581 = vmatmul.mubr.f32.gmra.mrb[0].mxu0 %v499
    %v582 = vpop.f32.mrb[0].mxu0
    %v583 = vadd.f32 %v486, %v582
    %v584 = vpop.f32.mrb[0].mxu0
    %585 = vdwg.mxu0
    %v586 = vadd.f32 %v473, %v568
    %v587 = vadd.f32 %v474, %v573
    %v588 = vadd.f32 %v475, %v578
    %v589 = vadd.f32 %v476, %v583
    %v590 = vld [vmem:[%s15] sm:$0x1]
    %v591 = vld [vmem:[%s16] sm:$0x1]
    %v592 = vsel %vm488, %v586, 0.0
    %593 = vadd.xlane.f32.xlu0 %v592
    %v594 = vpop.xlane.xlu0 %593
    %v595 = vsel %vm488, %v587, 0.0
    %596 = vadd.xlane.f32.xlu0 %v595
    %v597 = vpop.xlane.xlu0 %596
    %v598 = vsel %vm488, %v588, 0.0
    %599 = vadd.xlane.f32.xlu0 %v598
    %v600 = vpop.xlane.xlu0 %599
    %v601 = vsel %vm488, %v589, 0.0
    %602 = vadd.xlane.f32.xlu0 %v601
    %v603 = vpop.xlane.xlu0 %602
    %v604 = vrcp.pop 32.0
    %v605 = vmul.f32 %v594, %v604
    %v606 = vmul.f32 %v597, %v604
    %v607 = vmul.f32 %v600, %v604
    %v608 = vmul.f32 %v603, %v604
    %v609 = vmul.f32 %v586, %v586
    %v610 = vmul.f32 %v587, %v587
    %v611 = vmul.f32 %v588, %v588
    %v612 = vmul.f32 %v589, %v589
    %v613 = vsel %vm488, %v609, 0.0
    %614 = vadd.xlane.f32.xlu0 %v613
    %v615 = vpop.xlane.xlu0 %614
    %v616 = vsel %vm488, %v610, 0.0
    %617 = vadd.xlane.f32.xlu0 %v616
    %v618 = vpop.xlane.xlu0 %617
    %v619 = vsel %vm488, %v611, 0.0
    %620 = vadd.xlane.f32.xlu0 %v619
    %v621 = vpop.xlane.xlu0 %620
    %v622 = vsel %vm488, %v612, 0.0
    %623 = vadd.xlane.f32.xlu0 %v622
    %v624 = vpop.xlane.xlu0 %623
    %v625 = vmul.f32 %v615, %v604
    %v626 = vmul.f32 %v618, %v604
    %v627 = vmul.f32 %v621, %v604
    %v628 = vmul.f32 %v624, %v604
    %v629 = vmul.f32 %v605, %v605
    %v630 = vmul.f32 %v606, %v606
    %v631 = vmul.f32 %v607, %v607
    %v632 = vmul.f32 %v608, %v608
    %v633 = vsub.f32 %v625, %v629
    %v634 = vsub.f32 %v626, %v630
    %v635 = vsub.f32 %v627, %v631
    %v636 = vsub.f32 %v628, %v632
    %v637 = vmax.f32 %v633, 0.0
    %v638 = vmax.f32 %v634, 0.0
    %v639 = vmax.f32 %v635, 0.0
    %v640 = vmax.f32 %v636, 0.0
    %v641 = vsub.f32 %v586, %v605
    %v642 = vsub.f32 %v587, %v606
    %v643 = vsub.f32 %v588, %v607
    %v644 = vsub.f32 %v589, %v608
    %v645 = vadd.f32 %v637, 1e-05
    %v646 = vadd.f32 %v638, 1e-05
    %v647 = vadd.f32 %v639, 1e-05
    %v648 = vadd.f32 %v640, 1e-05
    %v649 = vrsqrt.pop %v645
    %v650 = vrsqrt.pop %v646
    %v651 = vrsqrt.pop %v647
    %v652 = vrsqrt.pop %v648
    %v653 = vmul.f32 %v641, %v649
    %v654 = vmul.f32 %v642, %v650
    %v655 = vmul.f32 %v643, %v651
    %v656 = vmul.f32 %v644, %v652
    %v658 = vlaneseq
    %v659 = vshrl.u32 %v658, 7
    %v660 = vsub.s32 0, %v659
    %v661 = vrot.slane %v590, %v660
    %v663 = vmul.f32 %v653, %v661
    %v664 = vmul.f32 %v654, %v661
    %v665 = vmul.f32 %v655, %v661
    %v666 = vmul.f32 %v656, %v661
    %v668 = vlaneseq
    %v669 = vshrl.u32 %v668, 7
    %v670 = vsub.s32 0, %v669
    %v671 = vrot.slane %v591, %v670
    %v673 = vadd.f32 %v663, %v671
    %v674 = vadd.f32 %v664, %v671
    %v675 = vadd.f32 %v665, %v671
    %v676 = vadd.f32 %v666, %v671
    %v677 = vld [vmem:[#allocation13] sm:$0xff]
    %v678 = vld [vmem:[#allocation13 + $0x8] sm:$0xff]
    %v679 = vld [vmem:[#allocation13 + $0x10] sm:$0xff]
    %v680 = vld [vmem:[#allocation13 + $0x18] sm:$0xff]
    %v681 = vld [vmem:[%s18] sm:$0x1]
    %v683 = vlaneseq
    %v684 = vshrl.u32 %v683, 7
    %v685 = vsub.s32 0, %v684
    %v686 = vrot.slane %v681, %v685
    %v689 = vsel %vm488, %v673, 0
    %v692 = vsel %vm488, %v674, 0
    %v695 = vsel %vm488, %v675, 0
    %v698 = vsel %vm488, %v676, 0
    %700 = vmatprep.subr.mxu0 0.0
    %701 = vmatpush1.msra.mxu0 %v677
    %702 = vmatprep.subr.mxu0 0.0
    %703 = vmatpush1.msra.mxu0 %v678
    %704 = vmatprep.subr.mxu0 0.0
    %705 = vmatpush1.msra.mxu0 %v679
    %706 = vmatprep.subr.mxu0 0.0
    %707 = vmatpush1.msra.mxu0 %v680
    %708 = vmatprep.subr.mxu0 0.0
    %709 = vmatpush1.msra.mxu0 0.0
    %710 = vmatprep.subr.mxu0 0.0
    %711 = vmatpush1.msra.mxu0 0.0
    %712 = vmatprep.subr.mxu0 0.0
    %713 = vmatpush1.msra.mxu0 0.0
    %714 = vmatprep.subr.mxu0 0.0
    %715 = vmatpush1.msra.mxu0 0.0
    %716 = vmatprep.subr.mxu0 0.0
    %717 = vmatpush1.msra.mxu0 0.0
    %718 = vmatprep.subr.mxu0 0.0
    %719 = vmatpush1.msra.mxu0 0.0
    %720 = vmatprep.subr.mxu0 0.0
    %721 = vmatpush1.msra.mxu0 0.0
    %722 = vmatprep.subr.mxu0 0.0
    %723 = vmatpush1.msra.mxu0 0.0
    %724 = vmatprep.subr.mxu0 0.0
    %725 = vmatpush1.msra.mxu0 0.0
    %726 = vmatprep.subr.mxu0 0.0
    %727 = vmatpush1.msra.mxu0 0.0
    %728 = vmatprep.subr.mxu0 0.0
    %729 = vmatpush1.msra.mxu0 0.0
    %730 = vmatprep.subr.mxu0 0.0
    %731 = vmatpush1.msra.mxu0 0.0
    %732 = vmatprep.subr.mxu0 0.0
    %733 = vmatpush1.msra.mxu0 0.0
    %734 = vmatprep.subr.mxu0 0.0
    %735 = vmatpush1.msra.mxu0 0.0
    %736 = vmatprep.subr.mxu0 0.0
    %737 = vmatpush1.msra.mxu0 0.0
    %738 = vmatprep.subr.mxu0 0.0
    %739 = vmatpush1.msra.mxu0 0.0
    %740 = vmatprep.subr.mxu0 0.0
    %741 = vmatpush1.msra.mxu0 0.0
    %742 = vmatprep.subr.mxu0 0.0
    %743 = vmatpush1.msra.mxu0 0.0
    %744 = vmatprep.subr.mxu0 0.0
    %745 = vmatpush1.msra.mxu0 0.0
    %746 = vmatprep.subr.mxu0 0.0
    %747 = vmatpush1.msra.mxu0 0.0
    %748 = vmatprep.subr.mxu0 0.0
    %749 = vmatpush1.msra.mxu0 0.0
    %750 = vmatprep.subr.mxu0 0.0
    %751 = vmatpush1.msra.mxu0 0.0
    %752 = vmatprep.subr.mxu0 0.0
    %753 = vmatpush1.msra.mxu0 0.0
    %754 = vmatprep.subr.mxu0 0.0
    %755 = vmatpush1.msra.mxu0 0.0
    %756 = vmatprep.subr.mxu0 0.0
    %757 = vmatpush1.msra.mxu0 0.0
    %758 = vmatprep.subr.mxu0 0.0
    %759 = vmatpush1.msra.mxu0 0.0
    %760 = vmatprep.subr.mxu0 0.0
    %761 = vmatpush1.msra.mxu0 0.0
    %762 = vmatprep.subr.mxu0 0.0
    %763 = vmatpush1.msra.mxu0 0.0
    %764 = vmatprep.mubr.f32.mxu0 0.0
    %765 = vmatmul.mubr.f32.gmra.mrb[0].mxu0 %v689
    %v766 = vpop.f32.mrb[0].mxu0
    %v767 = vadd.f32 %v686, %v766
    %v768 = vpop.f32.mrb[0].mxu0
    %769 = vmatprep.mubr.f32.mxu0 0.0
    %770 = vmatmul.mubr.f32.gmra.mrb[0].mxu0 %v692
    %v771 = vpop.f32.mrb[0].mxu0
    %v772 = vadd.f32 %v686, %v771
    %v773 = vpop.f32.mrb[0].mxu0
    %774 = vmatprep.mubr.f32.mxu0 0.0
    %775 = vmatmul.mubr.f32.gmra.mrb[0].mxu0 %v695
    %v776 = vpop.f32.mrb[0].mxu0
    %v777 = vadd.f32 %v686, %v776
    %v778 = vpop.f32.mrb[0].mxu0
    %779 = vmatprep.mubr.f32.mxu0 0.0
    %780 = vmatmul.mubr.f32.gmra.mrb[0].mxu0 %v698
    %v781 = vpop.f32.mrb[0].mxu0
    %v782 = vadd.f32 %v686, %v781
    %v783 = vpop.f32.mrb[0].mxu0
    %784 = vdwg.mxu0
    %v785 = vmax.f32 %v767, 0.0
    %v786 = vmax.f32 %v772, 0.0
    %v787 = vmax.f32 %v777, 0.0
    %v788 = vmax.f32 %v782, 0.0
    %v789 = vld [vmem:[%s19] sm:$0xff]
    %v790 = vld [vmem:[%s19 + $0x8] sm:$0xff]
    %v791 = vld [vmem:[%s19 + $0x10] sm:$0xff]
    %v792 = vld [vmem:[%s19 + $0x18] sm:$0xff]
    %v793 = vld [vmem:[%s19 + $0x20] sm:$0xff]
    %v794 = vld [vmem:[%s19 + $0x28] sm:$0xff]
    %v795 = vld [vmem:[%s19 + $0x30] sm:$0xff]
    %v796 = vld [vmem:[%s19 + $0x38] sm:$0xff]
    %v797 = vld [vmem:[%s20] sm:$0x1]
    %v799 = vlaneseq
    %v800 = vshrl.u32 %v799, 7
    %v801 = vsub.s32 0, %v800
    %v802 = vrot.slane %v797, %v801
    %v805 = vsel %vm188, %v785, 0
    %v808 = vsel %vm188, %v786, 0
    %v811 = vsel %vm188, %v787, 0
    %v814 = vsel %vm188, %v788, 0
    %816 = vmatprep.subr.mxu0 0.0
    %817 = vmatpush1.msra.mxu0 %v789
    %818 = vmatprep.subr.mxu0 0.0
    %819 = vmatpush1.msra.mxu0 %v790
    %820 = vmatprep.subr.mxu0 0.0
    %821 = vmatpush1.msra.mxu0 %v791
    %822 = vmatprep.subr.mxu0 0.0
    %823 = vmatpush1.msra.mxu0 %v792
    %824 = vmatprep.subr.mxu0 0.0
    %825 = vmatpush1.msra.mxu0 %v793
    %826 = vmatprep.subr.mxu0 0.0
    %827 = vmatpush1.msra.mxu0 %v794
    %828 = vmatprep.subr.mxu0 0.0
    %829 = vmatpush1.msra.mxu0 %v795
    %830 = vmatprep.subr.mxu0 0.0
    %831 = vmatpush1.msra.mxu0 %v796
    %832 = vmatprep.subr.mxu0 0.0
    %833 = vmatpush1.msra.mxu0 0.0
    %834 = vmatprep.subr.mxu0 0.0
    %835 = vmatpush1.msra.mxu0 0.0
    %836 = vmatprep.subr.mxu0 0.0
    %837 = vmatpush1.msra.mxu0 0.0
    %838 = vmatprep.subr.mxu0 0.0
    %839 = vmatpush1.msra.mxu0 0.0
    %840 = vmatprep.subr.mxu0 0.0
    %841 = vmatpush1.msra.mxu0 0.0
    %842 = vmatprep.subr.mxu0 0.0
    %843 = vmatpush1.msra.mxu0 0.0
    %844 = vmatprep.subr.mxu0 0.0
    %845 = vmatpush1.msra.mxu0 0.0
    %846 = vmatprep.subr.mxu0 0.0
    %847 = vmatpush1.msra.mxu0 0.0
    %848 = vmatprep.subr.mxu0 0.0
    %849 = vmatpush1.msra.mxu0 0.0
    %850 = vmatprep.subr.mxu0 0.0
    %851 = vmatpush1.msra.mxu0 0.0
    %852 = vmatprep.subr.mxu0 0.0
    %853 = vmatpush1.msra.mxu0 0.0
    %854 = vmatprep.subr.mxu0 0.0
    %855 = vmatpush1.msra.mxu0 0.0
    %856 = vmatprep.subr.mxu0 0.0
    %857 = vmatpush1.msra.mxu0 0.0
    %858 = vmatprep.subr.mxu0 0.0
    %859 = vmatpush1.msra.mxu0 0.0
    %860 = vmatprep.subr.mxu0 0.0
    %861 = vmatpush1.msra.mxu0 0.0
    %862 = vmatprep.subr.mxu0 0.0
    %863 = vmatpush1.msra.mxu0 0.0
    %864 = vmatprep.subr.mxu0 0.0
    %865 = vmatpush1.msra.mxu0 0.0
    %866 = vmatprep.subr.mxu0 0.0
    %867 = vmatpush1.msra.mxu0 0.0
    %868 = vmatprep.subr.mxu0 0.0
    %869 = vmatpush1.msra.mxu0 0.0
    %870 = vmatprep.subr.mxu0 0.0
    %871 = vmatpush1.msra.mxu0 0.0
    %872 = vmatprep.subr.mxu0 0.0
    %873 = vmatpush1.msra.mxu0 0.0
    %874 = vmatprep.subr.mxu0 0.0
    %875 = vmatpush1.msra.mxu0 0.0
    %876 = vmatprep.subr.mxu0 0.0
    %877 = vmatpush1.msra.mxu0 0.0
    %878 = vmatprep.subr.mxu0 0.0
    %879 = vmatpush1.msra.mxu0 0.0
    %880 = vmatprep.mubr.f32.mxu0 0.0
    %881 = vmatmul.mubr.f32.gmra.mrb[0].mxu0 %v805
    %v882 = vpop.f32.mrb[0].mxu0
    %v883 = vadd.f32 %v802, %v882
    %v884 = vpop.f32.mrb[0].mxu0
    %885 = vmatprep.mubr.f32.mxu0 0.0
    %886 = vmatmul.mubr.f32.gmra.mrb[0].mxu0 %v808
    %v887 = vpop.f32.mrb[0].mxu0
    %v888 = vadd.f32 %v802, %v887
    %v889 = vpop.f32.mrb[0].mxu0
    %890 = vmatprep.mubr.f32.mxu0 0.0
    %891 = vmatmul.mubr.f32.gmra.mrb[0].mxu0 %v811
    %v892 = vpop.f32.mrb[0].mxu0
    %v893 = vadd.f32 %v802, %v892
    %v894 = vpop.f32.mrb[0].mxu0
    %895 = vmatprep.mubr.f32.mxu0 0.0
    %896 = vmatmul.mubr.f32.gmra.mrb[0].mxu0 %v814
    %v897 = vpop.f32.mrb[0].mxu0
    %v898 = vadd.f32 %v802, %v897
    %v899 = vpop.f32.mrb[0].mxu0
    %900 = vdwg.mxu0
    %v901 = vadd.f32 %v673, %v883
    %v902 = vadd.f32 %v674, %v888
    %v903 = vadd.f32 %v675, %v893
    %v904 = vadd.f32 %v676, %v898
    %v905 = vld [vmem:[%s21] sm:$0x1]
    %v906 = vld [vmem:[%s22] sm:$0x1]
    %v907 = vsel %vm488, %v901, 0.0
    %908 = vadd.xlane.f32.xlu0 %v907
    %v909 = vpop.xlane.xlu0 %908
    %v910 = vsel %vm488, %v902, 0.0
    %911 = vadd.xlane.f32.xlu0 %v910
    %v912 = vpop.xlane.xlu0 %911
    %v913 = vsel %vm488, %v903, 0.0
    %914 = vadd.xlane.f32.xlu0 %v913
    %v915 = vpop.xlane.xlu0 %914
    %v916 = vsel %vm488, %v904, 0.0
    %917 = vadd.xlane.f32.xlu0 %v916
    %v918 = vpop.xlane.xlu0 %917
    %v919 = vmul.f32 %v909, %v604
    %v920 = vmul.f32 %v912, %v604
    %v921 = vmul.f32 %v915, %v604
    %v922 = vmul.f32 %v918, %v604
    %v923 = vmul.f32 %v901, %v901
    %v924 = vmul.f32 %v902, %v902
    %v925 = vmul.f32 %v903, %v903
    %v926 = vmul.f32 %v904, %v904
    %v927 = vsel %vm488, %v923, 0.0
    %928 = vadd.xlane.f32.xlu0 %v927
    %v929 = vpop.xlane.xlu0 %928
    %v930 = vsel %vm488, %v924, 0.0
    %931 = vadd.xlane.f32.xlu0 %v930
    %v932 = vpop.xlane.xlu0 %931
    %v933 = vsel %vm488, %v925, 0.0
    %934 = vadd.xlane.f32.xlu0 %v933
    %v935 = vpop.xlane.xlu0 %934
    %v936 = vsel %vm488, %v926, 0.0
    %937 = vadd.xlane.f32.xlu0 %v936
    %v938 = vpop.xlane.xlu0 %937
    %v939 = vmul.f32 %v929, %v604
    %v940 = vmul.f32 %v932, %v604
    %v941 = vmul.f32 %v935, %v604
    %v942 = vmul.f32 %v938, %v604
    %v943 = vmul.f32 %v919, %v919
    %v944 = vmul.f32 %v920, %v920
    %v945 = vmul.f32 %v921, %v921
    %v946 = vmul.f32 %v922, %v922
    %v947 = vsub.f32 %v939, %v943
    %v948 = vsub.f32 %v940, %v944
    %v949 = vsub.f32 %v941, %v945
    %v950 = vsub.f32 %v942, %v946
    %v951 = vmax.f32 %v947, 0.0
    %v952 = vmax.f32 %v948, 0.0
    %v953 = vmax.f32 %v949, 0.0
    %v954 = vmax.f32 %v950, 0.0
    %v955 = vsub.f32 %v901, %v919
    %v956 = vsub.f32 %v902, %v920
    %v957 = vsub.f32 %v903, %v921
    %v958 = vsub.f32 %v904, %v922
    %v959 = vadd.f32 %v951, 1e-05
    %v960 = vadd.f32 %v952, 1e-05
    %v961 = vadd.f32 %v953, 1e-05
    %v962 = vadd.f32 %v954, 1e-05
    %v963 = vrsqrt.pop %v959
    %v964 = vrsqrt.pop %v960
    %v965 = vrsqrt.pop %v961
    %v966 = vrsqrt.pop %v962
    %v967 = vmul.f32 %v955, %v963
    %v968 = vmul.f32 %v956, %v964
    %v969 = vmul.f32 %v957, %v965
    %v970 = vmul.f32 %v958, %v966
    %v972 = vlaneseq
    %v973 = vshrl.u32 %v972, 7
    %v974 = vsub.s32 0, %v973
    %v975 = vrot.slane %v905, %v974
    %v977 = vmul.f32 %v967, %v975
    %v978 = vmul.f32 %v968, %v975
    %v979 = vmul.f32 %v969, %v975
    %v980 = vmul.f32 %v970, %v975
    %v982 = vlaneseq
    %v983 = vshrl.u32 %v982, 7
    %v984 = vsub.s32 0, %v983
    %v985 = vrot.slane %v906, %v984
    %v987 = vadd.f32 %v977, %v985
    %v988 = vadd.f32 %v978, %v985
    %v989 = vadd.f32 %v979, %v985
    %v990 = vadd.f32 %v980, %v985
    %s991 = scalar_lea.vmem [#allocation11], 32
    %v992 = vld [vmem:[%s991] sm:$0xff]
    %v993 = vld [vmem:[%s991 + $0x8] sm:$0xff]
    %v994 = vld [vmem:[%s991 + $0x10] sm:$0xff]
    %v995 = vld [vmem:[%s991 + $0x18] sm:$0xff]
    %s996 = scalar_lea.vmem %s14, 1
    %v997 = vld [vmem:[%s996] sm:$0x1]
    %v999 = vlaneseq
    %v1000 = vshrl.u32 %v999, 7
    %v1001 = vsub.s32 0, %v1000
    %v1002 = vrot.slane %v997, %v1001
    %v1005 = vsel %vm488, %v987, 0
    %v1008 = vsel %vm488, %v988, 0
    %v1011 = vsel %vm488, %v989, 0
    %v1014 = vsel %vm488, %v990, 0
    %1016 = vmatprep.subr.mxu0 0.0
    %1017 = vmatpush1.msra.mxu0 %v992
    %1018 = vmatprep.subr.mxu0 0.0
    %1019 = vmatpush1.msra.mxu0 %v993
    %1020 = vmatprep.subr.mxu0 0.0
    %1021 = vmatpush1.msra.mxu0 %v994
    %1022 = vmatprep.subr.mxu0 0.0
    %1023 = vmatpush1.msra.mxu0 %v995
    %1024 = vmatprep.subr.mxu0 0.0
    %1025 = vmatpush1.msra.mxu0 0.0
    %1026 = vmatprep.subr.mxu0 0.0
    %1027 = vmatpush1.msra.mxu0 0.0
    %1028 = vmatprep.subr.mxu0 0.0
    %1029 = vmatpush1.msra.mxu0 0.0
    %1030 = vmatprep.subr.mxu0 0.0
    %1031 = vmatpush1.msra.mxu0 0.0
    %1032 = vmatprep.subr.mxu0 0.0
    %1033 = vmatpush1.msra.mxu0 0.0
    %1034 = vmatprep.subr.mxu0 0.0
    %1035 = vmatpush1.msra.mxu0 0.0
    %1036 = vmatprep.subr.mxu0 0.0
    %1037 = vmatpush1.msra.mxu0 0.0
    %1038 = vmatprep.subr.mxu0 0.0
    %1039 = vmatpush1.msra.mxu0 0.0
    %1040 = vmatprep.subr.mxu0 0.0
    %1041 = vmatpush1.msra.mxu0 0.0
    %1042 = vmatprep.subr.mxu0 0.0
    %1043 = vmatpush1.msra.mxu0 0.0
    %1044 = vmatprep.subr.mxu0 0.0
    %1045 = vmatpush1.msra.mxu0 0.0
    %1046 = vmatprep.subr.mxu0 0.0
    %1047 = vmatpush1.msra.mxu0 0.0
    %1048 = vmatprep.subr.mxu0 0.0
    %1049 = vmatpush1.msra.mxu0 0.0
    %1050 = vmatprep.subr.mxu0 0.0
    %1051 = vmatpush1.msra.mxu0 0.0
    %1052 = vmatprep.subr.mxu0 0.0
    %1053 = vmatpush1.msra.mxu0 0.0
    %1054 = vmatprep.subr.mxu0 0.0
    %1055 = vmatpush1.msra.mxu0 0.0
    %1056 = vmatprep.subr.mxu0 0.0
    %1057 = vmatpush1.msra.mxu0 0.0
    %1058 = vmatprep.subr.mxu0 0.0
    %1059 = vmatpush1.msra.mxu0 0.0
    %1060 = vmatprep.subr.mxu0 0.0
    %1061 = vmatpush1.msra.mxu0 0.0
    %1062 = vmatprep.subr.mxu0 0.0
    %1063 = vmatpush1.msra.mxu0 0.0
    %1064 = vmatprep.subr.mxu0 0.0
    %1065 = vmatpush1.msra.mxu0 0.0
    %1066 = vmatprep.subr.mxu0 0.0
    %1067 = vmatpush1.msra.mxu0 0.0
    %1068 = vmatprep.subr.mxu0 0.0
    %1069 = vmatpush1.msra.mxu0 0.0
    %1070 = vmatprep.subr.mxu0 0.0
    %1071 = vmatpush1.msra.mxu0 0.0
    %1072 = vmatprep.subr.mxu0 0.0
    %1073 = vmatpush1.msra.mxu0 0.0
    %1074 = vmatprep.subr.mxu0 0.0
    %1075 = vmatpush1.msra.mxu0 0.0
    %1076 = vmatprep.subr.mxu0 0.0
    %1077 = vmatpush1.msra.mxu0 0.0
    %1078 = vmatprep.subr.mxu0 0.0
    %1079 = vmatpush1.msra.mxu0 0.0
    %1080 = vmatprep.mubr.f32.mxu0 0.0
    %1081 = vmatmul.mubr.f32.gmra.mrb[0].mxu0 %v1005
    %v1082 = vpop.f32.mrb[0].mxu0
    %v1083 = vadd.f32 %v1002, %v1082
    %v1084 = vpop.f32.mrb[0].mxu0
    %1085 = vmatprep.mubr.f32.mxu0 0.0
    %1086 = vmatmul.mubr.f32.gmra.mrb[0].mxu0 %v1008
    %v1087 = vpop.f32.mrb[0].mxu0
    %v1088 = vadd.f32 %v1002, %v1087
    %v1089 = vpop.f32.mrb[0].mxu0
    %1090 = vmatprep.mubr.f32.mxu0 0.0
    %1091 = vmatmul.mubr.f32.gmra.mrb[0].mxu0 %v1011
    %v1092 = vpop.f32.mrb[0].mxu0
    %v1093 = vadd.f32 %v1002, %v1092
    %v1094 = vpop.f32.mrb[0].mxu0
    %1095 = vmatprep.mubr.f32.mxu0 0.0
    %1096 = vmatmul.mubr.f32.gmra.mrb[0].mxu0 %v1014
    %v1097 = vpop.f32.mrb[0].mxu0
    %v1098 = vadd.f32 %v1002, %v1097
    %v1099 = vpop.f32.mrb[0].mxu0
    %1100 = vdwg.mxu0
    %v1101 = vadd.f32 %v987, %v1083
    %v1102 = vadd.f32 %v988, %v1088
    %v1103 = vadd.f32 %v989, %v1093
    %v1104 = vadd.f32 %v990, %v1098
    %s1105 = scalar_lea.vmem %s15, 1
    %v1106 = vld [vmem:[%s1105] sm:$0x1]
    %s1107 = scalar_lea.vmem %s16, 1
    %v1108 = vld [vmem:[%s1107] sm:$0x1]
    %v1109 = vsel %vm488, %v1101, 0.0
    %1110 = vadd.xlane.f32.xlu0 %v1109
    %v1111 = vpop.xlane.xlu0 %1110
    %v1112 = vsel %vm488, %v1102, 0.0
    %1113 = vadd.xlane.f32.xlu0 %v1112
    %v1114 = vpop.xlane.xlu0 %1113
    %v1115 = vsel %vm488, %v1103, 0.0
    %1116 = vadd.xlane.f32.xlu0 %v1115
    %v1117 = vpop.xlane.xlu0 %1116
    %v1118 = vsel %vm488, %v1104, 0.0
    %1119 = vadd.xlane.f32.xlu0 %v1118
    %v1120 = vpop.xlane.xlu0 %1119
    %v1121 = vmul.f32 %v1111, %v604
    %v1122 = vmul.f32 %v1114, %v604
    %v1123 = vmul.f32 %v1117, %v604
    %v1124 = vmul.f32 %v1120, %v604
    %v1125 = vmul.f32 %v1101, %v1101
    %v1126 = vmul.f32 %v1102, %v1102
    %v1127 = vmul.f32 %v1103, %v1103
    %v1128 = vmul.f32 %v1104, %v1104
    %v1129 = vsel %vm488, %v1125, 0.0
    %1130 = vadd.xlane.f32.xlu0 %v1129
    %v1131 = vpop.xlane.xlu0 %1130
    %v1132 = vsel %vm488, %v1126, 0.0
    %1133 = vadd.xlane.f32.xlu0 %v1132
    %v1134 = vpop.xlane.xlu0 %1133
    %v1135 = vsel %vm488, %v1127, 0.0
    %1136 = vadd.xlane.f32.xlu0 %v1135
    %v1137 = vpop.xlane.xlu0 %1136
    %v1138 = vsel %vm488, %v1128, 0.0
    %1139 = vadd.xlane.f32.xlu0 %v1138
    %v1140 = vpop.xlane.xlu0 %1139
    %v1141 = vmul.f32 %v1131, %v604
    %v1142 = vmul.f32 %v1134, %v604
    %v1143 = vmul.f32 %v1137, %v604
    %v1144 = vmul.f32 %v1140, %v604
    %v1145 = vmul.f32 %v1121, %v1121
    %v1146 = vmul.f32 %v1122, %v1122
    %v1147 = vmul.f32 %v1123, %v1123
    %v1148 = vmul.f32 %v1124, %v1124
    %v1149 = vsub.f32 %v1141, %v1145
    %v1150 = vsub.f32 %v1142, %v1146
    %v1151 = vsub.f32 %v1143, %v1147
    %v1152 = vsub.f32 %v1144, %v1148
    %v1153 = vmax.f32 %v1149, 0.0
    %v1154 = vmax.f32 %v1150, 0.0
    %v1155 = vmax.f32 %v1151, 0.0
    %v1156 = vmax.f32 %v1152, 0.0
    %v1157 = vsub.f32 %v1101, %v1121
    %v1158 = vsub.f32 %v1102, %v1122
    %v1159 = vsub.f32 %v1103, %v1123
    %v1160 = vsub.f32 %v1104, %v1124
    %v1161 = vadd.f32 %v1153, 1e-05
    %v1162 = vadd.f32 %v1154, 1e-05
    %v1163 = vadd.f32 %v1155, 1e-05
    %v1164 = vadd.f32 %v1156, 1e-05
    %v1165 = vrsqrt.pop %v1161
    %v1166 = vrsqrt.pop %v1162
    %v1167 = vrsqrt.pop %v1163
    %v1168 = vrsqrt.pop %v1164
    %v1169 = vmul.f32 %v1157, %v1165
    %v1170 = vmul.f32 %v1158, %v1166
    %v1171 = vmul.f32 %v1159, %v1167
    %v1172 = vmul.f32 %v1160, %v1168
    %v1174 = vlaneseq
    %v1175 = vshrl.u32 %v1174, 7
    %v1176 = vsub.s32 0, %v1175
    %v1177 = vrot.slane %v1106, %v1176
    %v1179 = vmul.f32 %v1169, %v1177
    %v1180 = vmul.f32 %v1170, %v1177
    %v1181 = vmul.f32 %v1171, %v1177
    %v1182 = vmul.f32 %v1172, %v1177
    %v1184 = vlaneseq
    %v1185 = vshrl.u32 %v1184, 7
    %v1186 = vsub.s32 0, %v1185
    %v1187 = vrot.slane %v1108, %v1186
    %v1189 = vadd.f32 %v1179, %v1187
    %v1190 = vadd.f32 %v1180, %v1187
    %v1191 = vadd.f32 %v1181, %v1187
    %v1192 = vadd.f32 %v1182, %v1187
    %s1193 = scalar_lea.vmem [#allocation13], 32
    %v1194 = vld [vmem:[%s1193] sm:$0xff]
    %v1195 = vld [vmem:[%s1193 + $0x8] sm:$0xff]
    %v1196 = vld [vmem:[%s1193 + $0x10] sm:$0xff]
    %v1197 = vld [vmem:[%s1193 + $0x18] sm:$0xff]
    %s1198 = scalar_lea.vmem %s18, 1
    %v1199 = vld [vmem:[%s1198] sm:$0x1]
    %v1201 = vlaneseq
    %v1202 = vshrl.u32 %v1201, 7
    %v1203 = vsub.s32 0, %v1202
    %v1204 = vrot.slane %v1199, %v1203
    %v1207 = vsel %vm488, %v1189, 0
    %v1210 = vsel %vm488, %v1190, 0
    %v1213 = vsel %vm488, %v1191, 0
    %v1216 = vsel %vm488, %v1192, 0
    %1218 = vmatprep.subr.mxu0 0.0
    %1219 = vmatpush1.msra.mxu0 %v1194
    %1220 = vmatprep.subr.mxu0 0.0
    %1221 = vmatpush1.msra.mxu0 %v1195
    %1222 = vmatprep.subr.mxu0 0.0
    %1223 = vmatpush1.msra.mxu0 %v1196
    %1224 = vmatprep.subr.mxu0 0.0
    %1225 = vmatpush1.msra.mxu0 %v1197
    %1226 = vmatprep.subr.mxu0 0.0
    %1227 = vmatpush1.msra.mxu0 0.0
    %1228 = vmatprep.subr.mxu0 0.0
    %1229 = vmatpush1.msra.mxu0 0.0
    %1230 = vmatprep.subr.mxu0 0.0
    %1231 = vmatpush1.msra.mxu0 0.0
    %1232 = vmatprep.subr.mxu0 0.0
    %1233 = vmatpush1.msra.mxu0 0.0
    %1234 = vmatprep.subr.mxu0 0.0
    %1235 = vmatpush1.msra.mxu0 0.0
    %1236 = vmatprep.subr.mxu0 0.0
    %1237 = vmatpush1.msra.mxu0 0.0
    %1238 = vmatprep.subr.mxu0 0.0
    %1239 = vmatpush1.msra.mxu0 0.0
    %1240 = vmatprep.subr.mxu0 0.0
    %1241 = vmatpush1.msra.mxu0 0.0
    %1242 = vmatprep.subr.mxu0 0.0
    %1243 = vmatpush1.msra.mxu0 0.0
    %1244 = vmatprep.subr.mxu0 0.0
    %1245 = vmatpush1.msra.mxu0 0.0
    %1246 = vmatprep.subr.mxu0 0.0
    %1247 = vmatpush1.msra.mxu0 0.0
    %1248 = vmatprep.subr.mxu0 0.0
    %1249 = vmatpush1.msra.mxu0 0.0
    %1250 = vmatprep.subr.mxu0 0.0
    %1251 = vmatpush1.msra.mxu0 0.0
    %1252 = vmatprep.subr.mxu0 0.0
    %1253 = vmatpush1.msra.mxu0 0.0
    %1254 = vmatprep.subr.mxu0 0.0
    %1255 = vmatpush1.msra.mxu0 0.0
    %1256 = vmatprep.subr.mxu0 0.0
    %1257 = vmatpush1.msra.mxu0 0.0
    %1258 = vmatprep.subr.mxu0 0.0
    %1259 = vmatpush1.msra.mxu0 0.0
    %1260 = vmatprep.subr.mxu0 0.0
    %1261 = vmatpush1.msra.mxu0 0.0
    %1262 = vmatprep.subr.mxu0 0.0
    %1263 = vmatpush1.msra.mxu0 0.0
    %1264 = vmatprep.subr.mxu0 0.0
    %1265 = vmatpush1.msra.mxu0 0.0
    %1266 = vmatprep.subr.mxu0 0.0
    %1267 = vmatpush1.msra.mxu0 0.0
    %1268 = vmatprep.subr.mxu0 0.0
    %1269 = vmatpush1.msra.mxu0 0.0
    %1270 = vmatprep.subr.mxu0 0.0
    %1271 = vmatpush1.msra.mxu0 0.0
    %1272 = vmatprep.subr.mxu0 0.0
    %1273 = vmatpush1.msra.mxu0 0.0
    %1274 = vmatprep.subr.mxu0 0.0
    %1275 = vmatpush1.msra.mxu0 0.0
    %1276 = vmatprep.subr.mxu0 0.0
    %1277 = vmatpush1.msra.mxu0 0.0
    %1278 = vmatprep.subr.mxu0 0.0
    %1279 = vmatpush1.msra.mxu0 0.0
    %1280 = vmatprep.subr.mxu0 0.0
    %1281 = vmatpush1.msra.mxu0 0.0
    %1282 = vmatprep.mubr.f32.mxu0 0.0
    %1283 = vmatmul.mubr.f32.gmra.mrb[0].mxu0 %v1207
    %v1284 = vpop.f32.mrb[0].mxu0
    %v1285 = vadd.f32 %v1204, %v1284
    %v1286 = vpop.f32.mrb[0].mxu0
    %1287 = vmatprep.mubr.f32.mxu0 0.0
    %1288 = vmatmul.mubr.f32.gmra.mrb[0].mxu0 %v1210
    %v1289 = vpop.f32.mrb[0].mxu0
    %v1290 = vadd.f32 %v1204, %v1289
    %v1291 = vpop.f32.mrb[0].mxu0
    %1292 = vmatprep.mubr.f32.mxu0 0.0
    %1293 = vmatmul.mubr.f32.gmra.mrb[0].mxu0 %v1213
    %v1294 = vpop.f32.mrb[0].mxu0
    %v1295 = vadd.f32 %v1204, %v1294
    %v1296 = vpop.f32.mrb[0].mxu0
    %1297 = vmatprep.mubr.f32.mxu0 0.0
    %1298 = vmatmul.mubr.f32.gmra.mrb[0].mxu0 %v1216
    %v1299 = vpop.f32.mrb[0].mxu0
    %v1300 = vadd.f32 %v1204, %v1299
    %v1301 = vpop.f32.mrb[0].mxu0
    %1302 = vdwg.mxu0
    %v1303 = vmax.f32 %v1285, 0.0
    %v1304 = vmax.f32 %v1290, 0.0
    %v1305 = vmax.f32 %v1295, 0.0
    %v1306 = vmax.f32 %v1300, 0.0
    %s1307 = scalar_lea.vmem %s19, 64
    %v1308 = vld [vmem:[%s1307] sm:$0xff]
    %v1309 = vld [vmem:[%s1307 + $0x8] sm:$0xff]
    %v1310 = vld [vmem:[%s1307 + $0x10] sm:$0xff]
    %v1311 = vld [vmem:[%s1307 + $0x18] sm:$0xff]
    %v1312 = vld [vmem:[%s1307 + $0x20] sm:$0xff]
    %v1313 = vld [vmem:[%s1307 + $0x28] sm:$0xff]
    %v1314 = vld [vmem:[%s1307 + $0x30] sm:$0xff]
    %v1315 = vld [vmem:[%s1307 + $0x38] sm:$0xff]
    %s1316 = scalar_lea.vmem %s20, 1
    %v1317 = vld [vmem:[%s1316] sm:$0x1]
    %v1319 = vlaneseq
    %v1320 = vshrl.u32 %v1319, 7
    %v1321 = vsub.s32 0, %v1320
    %v1322 = vrot.slane %v1317, %v1321
    %v1325 = vsel %vm188, %v1303, 0
    %v1328 = vsel %vm188, %v1304, 0
    %v1331 = vsel %vm188, %v1305, 0
    %v1334 = vsel %vm188, %v1306, 0
    %1336 = vmatprep.subr.mxu0 0.0
    %1337 = vmatpush1.msra.mxu0 %v1308
    %1338 = vmatprep.subr.mxu0 0.0
    %1339 = vmatpush1.msra.mxu0 %v1309
    %1340 = vmatprep.subr.mxu0 0.0
    %1341 = vmatpush1.msra.mxu0 %v1310
    %1342 = vmatprep.subr.mxu0 0.0
    %1343 = vmatpush1.msra.mxu0 %v1311
    %1344 = vmatprep.subr.mxu0 0.0
    %1345 = vmatpush1.msra.mxu0 %v1312
    %1346 = vmatprep.subr.mxu0 0.0
    %1347 = vmatpush1.msra.mxu0 %v1313
    %1348 = vmatprep.subr.mxu0 0.0
    %1349 = vmatpush1.msra.mxu0 %v1314
    %1350 = vmatprep.subr.mxu0 0.0
    %1351 = vmatpush1.msra.mxu0 %v1315
    %1352 = vmatprep.subr.mxu0 0.0
    %1353 = vmatpush1.msra.mxu0 0.0
    %1354 = vmatprep.subr.mxu0 0.0
    %1355 = vmatpush1.msra.mxu0 0.0
    %1356 = vmatprep.subr.mxu0 0.0
    %1357 = vmatpush1.msra.mxu0 0.0
    %1358 = vmatprep.subr.mxu0 0.0
    %1359 = vmatpush1.msra.mxu0 0.0
    %1360 = vmatprep.subr.mxu0 0.0
    %1361 = vmatpush1.msra.mxu0 0.0
    %1362 = vmatprep.subr.mxu0 0.0
    %1363 = vmatpush1.msra.mxu0 0.0
    %1364 = vmatprep.subr.mxu0 0.0
    %1365 = vmatpush1.msra.mxu0 0.0
    %1366 = vmatprep.subr.mxu0 0.0
    %1367 = vmatpush1.msra.mxu0 0.0
    %1368 = vmatprep.subr.mxu0 0.0
    %1369 = vmatpush1.msra.mxu0 0.0
    %1370 = vmatprep.subr.mxu0 0.0
    %1371 = vmatpush1.msra.mxu0 0.0
    %1372 = vmatprep.subr.mxu0 0.0
    %1373 = vmatpush1.msra.mxu0 0.0
    %1374 = vmatprep.subr.mxu0 0.0
    %1375 = vmatpush1.msra.mxu0 0.0
    %1376 = vmatprep.subr.mxu0 0.0
    %1377 = vmatpush1.msra.mxu0 0.0
    %1378 = vmatprep.subr.mxu0 0.0
    %1379 = vmatpush1.msra.mxu0 0.0
    %1380 = vmatprep.subr.mxu0 0.0
    %1381 = vmatpush1.msra.mxu0 0.0
    %1382 = vmatprep.subr.mxu0 0.0
    %1383 = vmatpush1.msra.mxu0 0.0
    %1384 = vmatprep.subr.mxu0 0.0
    %1385 = vmatpush1.msra.mxu0 0.0
    %1386 = vmatprep.subr.mxu0 0.0
    %1387 = vmatpush1.msra.mxu0 0.0
    %1388 = vmatprep.subr.mxu0 0.0
    %1389 = vmatpush1.msra.mxu0 0.0
    %1390 = vmatprep.subr.mxu0 0.0
    %1391 = vmatpush1.msra.mxu0 0.0
    %1392 = vmatprep.subr.mxu0 0.0
    %1393 = vmatpush1.msra.mxu0 0.0
    %1394 = vmatprep.subr.mxu0 0.0
    %1395 = vmatpush1.msra.mxu0 0.0
    %1396 = vmatprep.subr.mxu0 0.0
    %1397 = vmatpush1.msra.mxu0 0.0
    %1398 = vmatprep.subr.mxu0 0.0
    %1399 = vmatpush1.msra.mxu0 0.0
    %1400 = vmatprep.mubr.f32.mxu0 0.0
    %1401 = vmatmul.mubr.f32.gmra.mrb[0].mxu0 %v1325
    %v1402 = vpop.f32.mrb[0].mxu0
    %v1403 = vadd.f32 %v1322, %v1402
    %v1404 = vpop.f32.mrb[0].mxu0
    %1405 = vmatprep.mubr.f32.mxu0 0.0
    %1406 = vmatmul.mubr.f32.gmra.mrb[0].mxu0 %v1328
    %v1407 = vpop.f32.mrb[0].mxu0
    %v1408 = vadd.f32 %v1322, %v1407
    %v1409 = vpop.f32.mrb[0].mxu0
    %1410 = vmatprep.mubr.f32.mxu0 0.0
    %1411 = vmatmul.mubr.f32.gmra.mrb[0].mxu0 %v1331
    %v1412 = vpop.f32.mrb[0].mxu0
    %v1413 = vadd.f32 %v1322, %v1412
    %v1414 = vpop.f32.mrb[0].mxu0
    %1415 = vmatprep.mubr.f32.mxu0 0.0
    %1416 = vmatmul.mubr.f32.gmra.mrb[0].mxu0 %v1334
    %v1417 = vpop.f32.mrb[0].mxu0
    %v1418 = vadd.f32 %v1322, %v1417
    %v1419 = vpop.f32.mrb[0].mxu0
    %1420 = vdwg.mxu0
    %v1421 = vadd.f32 %v1189, %v1403
    %v1422 = vadd.f32 %v1190, %v1408
    %v1423 = vadd.f32 %v1191, %v1413
    %v1424 = vadd.f32 %v1192, %v1418
    %s1425 = scalar_lea.vmem %s21, 1
    %v1426 = vld [vmem:[%s1425] sm:$0x1]
    %s1427 = scalar_lea.vmem %s22, 1
    %v1428 = vld [vmem:[%s1427] sm:$0x1]
    %v1429 = vsel %vm488, %v1421, 0.0
    %1430 = vadd.xlane.f32.xlu0 %v1429
    %v1431 = vpop.xlane.xlu0 %1430
    %v1432 = vsel %vm488, %v1422, 0.0
    %1433 = vadd.xlane.f32.xlu0 %v1432
    %v1434 = vpop.xlane.xlu0 %1433
    %v1435 = vsel %vm488, %v1423, 0.0
    %1436 = vadd.xlane.f32.xlu0 %v1435
    %v1437 = vpop.xlane.xlu0 %1436
    %v1438 = vsel %vm488, %v1424, 0.0
    %1439 = vadd.xlane.f32.xlu0 %v1438
    %v1440 = vpop.xlane.xlu0 %1439
    %v1441 = vmul.f32 %v1431, %v604
    %v1442 = vmul.f32 %v1434, %v604
    %v1443 = vmul.f32 %v1437, %v604
    %v1444 = vmul.f32 %v1440, %v604
    %v1445 = vmul.f32 %v1421, %v1421
    %v1446 = vmul.f32 %v1422, %v1422
    %v1447 = vmul.f32 %v1423, %v1423
    %v1448 = vmul.f32 %v1424, %v1424
    %v1449 = vsel %vm488, %v1445, 0.0
    %1450 = vadd.xlane.f32.xlu0 %v1449
    %v1451 = vpop.xlane.xlu0 %1450
    %v1452 = vsel %vm488, %v1446, 0.0
    %1453 = vadd.xlane.f32.xlu0 %v1452
    %v1454 = vpop.xlane.xlu0 %1453
    %v1455 = vsel %vm488, %v1447, 0.0
    %1456 = vadd.xlane.f32.xlu0 %v1455
    %v1457 = vpop.xlane.xlu0 %1456
    %v1458 = vsel %vm488, %v1448, 0.0
    %1459 = vadd.xlane.f32.xlu0 %v1458
    %v1460 = vpop.xlane.xlu0 %1459
    %v1461 = vmul.f32 %v1451, %v604
    %v1462 = vmul.f32 %v1454, %v604
    %v1463 = vmul.f32 %v1457, %v604
    %v1464 = vmul.f32 %v1460, %v604
    %v1465 = vmul.f32 %v1441, %v1441
    %v1466 = vmul.f32 %v1442, %v1442
    %v1467 = vmul.f32 %v1443, %v1443
    %v1468 = vmul.f32 %v1444, %v1444
    %v1469 = vsub.f32 %v1461, %v1465
    %v1470 = vsub.f32 %v1462, %v1466
    %v1471 = vsub.f32 %v1463, %v1467
    %v1472 = vsub.f32 %v1464, %v1468
    %v1473 = vmax.f32 %v1469, 0.0
    %v1474 = vmax.f32 %v1470, 0.0
    %v1475 = vmax.f32 %v1471, 0.0
    %v1476 = vmax.f32 %v1472, 0.0
    %v1477 = vsub.f32 %v1421, %v1441
    %v1478 = vsub.f32 %v1422, %v1442
    %v1479 = vsub.f32 %v1423, %v1443
    %v1480 = vsub.f32 %v1424, %v1444
    %v1481 = vadd.f32 %v1473, 1e-05
    %v1482 = vadd.f32 %v1474, 1e-05
    %v1483 = vadd.f32 %v1475, 1e-05
    %v1484 = vadd.f32 %v1476, 1e-05
    %v1485 = vrsqrt.pop %v1481
    %v1486 = vrsqrt.pop %v1482
    %v1487 = vrsqrt.pop %v1483
    %v1488 = vrsqrt.pop %v1484
    %v1489 = vmul.f32 %v1477, %v1485
    %v1490 = vmul.f32 %v1478, %v1486
    %v1491 = vmul.f32 %v1479, %v1487
    %v1492 = vmul.f32 %v1480, %v1488
    %v1494 = vlaneseq
    %v1495 = vshrl.u32 %v1494, 7
    %v1496 = vsub.s32 0, %v1495
    %v1497 = vrot.slane %v1426, %v1496
    %v1499 = vmul.f32 %v1489, %v1497
    %v1500 = vmul.f32 %v1490, %v1497
    %v1501 = vmul.f32 %v1491, %v1497
    %v1502 = vmul.f32 %v1492, %v1497
    %v1504 = vlaneseq
    %v1505 = vshrl.u32 %v1504, 7
    %v1506 = vsub.s32 0, %v1505
    %v1507 = vrot.slane %v1428, %v1506
    %v1509 = vadd.f32 %v1499, %v1507
    %v1510 = vadd.f32 %v1500, %v1507
    %v1511 = vadd.f32 %v1501, %v1507
    %v1512 = vadd.f32 %v1502, %v1507
    %s1513 = scalar_lea.vmem [#allocation11], 64
    %v1514 = vld [vmem:[%s1513] sm:$0xff]
    %v1515 = vld [vmem:[%s1513 + $0x8] sm:$0xff]
    %v1516 = vld [vmem:[%s1513 + $0x10] sm:$0xff]
    %v1517 = vld [vmem:[%s1513 + $0x18] sm:$0xff]
    %s1518 = scalar_lea.vmem %s14, 2
    %v1519 = vld [vmem:[%s1518] sm:$0x1]
    %v1521 = vlaneseq
    %v1522 = vshrl.u32 %v1521, 7
    %v1523 = vsub.s32 0, %v1522
    %v1524 = vrot.slane %v1519, %v1523
    %v1527 = vsel %vm488, %v1509, 0
    %v1530 = vsel %vm488, %v1510, 0
    %v1533 = vsel %vm488, %v1511, 0
    %v1536 = vsel %vm488, %v1512, 0
    %1538 = vmatprep.subr.mxu0 0.0
    %1539 = vmatpush1.msra.mxu0 %v1514
    %1540 = vmatprep.subr.mxu0 0.0
    %1541 = vmatpush1.msra.mxu0 %v1515
    %1542 = vmatprep.subr.mxu0 0.0
    %1543 = vmatpush1.msra.mxu0 %v1516
    %1544 = vmatprep.subr.mxu0 0.0
    %1545 = vmatpush1.msra.mxu0 %v1517
    %1546 = vmatprep.subr.mxu0 0.0
    %1547 = vmatpush1.msra.mxu0 0.0
    %1548 = vmatprep.subr.mxu0 0.0
    %1549 = vmatpush1.msra.mxu0 0.0
    %1550 = vmatprep.subr.mxu0 0.0
    %1551 = vmatpush1.msra.mxu0 0.0
    %1552 = vmatprep.subr.mxu0 0.0
    %1553 = vmatpush1.msra.mxu0 0.0
    %1554 = vmatprep.subr.mxu0 0.0
    %1555 = vmatpush1.msra.mxu0 0.0
    %1556 = vmatprep.subr.mxu0 0.0
    %1557 = vmatpush1.msra.mxu0 0.0
    %1558 = vmatprep.subr.mxu0 0.0
    %1559 = vmatpush1.msra.mxu0 0.0
    %1560 = vmatprep.subr.mxu0 0.0
    %1561 = vmatpush1.msra.mxu0 0.0
    %1562 = vmatprep.subr.mxu0 0.0
    %1563 = vmatpush1.msra.mxu0 0.0
    %1564 = vmatprep.subr.mxu0 0.0
    %1565 = vmatpush1.msra.mxu0 0.0
    %1566 = vmatprep.subr.mxu0 0.0
    %1567 = vmatpush1.msra.mxu0 0.0
    %1568 = vmatprep.subr.mxu0 0.0
    %1569 = vmatpush1.msra.mxu0 0.0
    %1570 = vmatprep.subr.mxu0 0.0
    %1571 = vmatpush1.msra.mxu0 0.0
    %1572 = vmatprep.subr.mxu0 0.0
    %1573 = vmatpush1.msra.mxu0 0.0
    %1574 = vmatprep.subr.mxu0 0.0
    %1575 = vmatpush1.msra.mxu0 0.0
    %1576 = vmatprep.subr.mxu0 0.0
    %1577 = vmatpush1.msra.mxu0 0.0
    %1578 = vmatprep.subr.mxu0 0.0
    %1579 = vmatpush1.msra.mxu0 0.0
    %1580 = vmatprep.subr.mxu0 0.0
    %1581 = vmatpush1.msra.mxu0 0.0
    %1582 = vmatprep.subr.mxu0 0.0
    %1583 = vmatpush1.msra.mxu0 0.0
    %1584 = vmatprep.subr.mxu0 0.0
    %1585 = vmatpush1.msra.mxu0 0.0
    %1586 = vmatprep.subr.mxu0 0.0
    %1587 = vmatpush1.msra.mxu0 0.0
    %1588 = vmatprep.subr.mxu0 0.0
    %1589 = vmatpush1.msra.mxu0 0.0
    %1590 = vmatprep.subr.mxu0 0.0
    %1591 = vmatpush1.msra.mxu0 0.0
    %1592 = vmatprep.subr.mxu0 0.0
    %1593 = vmatpush1.msra.mxu0 0.0
    %1594 = vmatprep.subr.mxu0 0.0
    %1595 = vmatpush1.msra.mxu0 0.0
    %1596 = vmatprep.subr.mxu0 0.0
    %1597 = vmatpush1.msra.mxu0 0.0
    %1598 = vmatprep.subr.mxu0 0.0
    %1599 = vmatpush1.msra.mxu0 0.0
    %1600 = vmatprep.subr.mxu0 0.0
    %1601 = vmatpush1.msra.mxu0 0.0
    %1602 = vmatprep.mubr.f32.mxu0 0.0
    %1603 = vmatmul.mubr.f32.gmra.mrb[0].mxu0 %v1527
    %v1604 = vpop.f32.mrb[0].mxu0
    %v1605 = vadd.f32 %v1524, %v1604
    %v1606 = vpop.f32.mrb[0].mxu0
    %1607 = vmatprep.mubr.f32.mxu0 0.0
    %1608 = vmatmul.mubr.f32.gmra.mrb[0].mxu0 %v1530
    %v1609 = vpop.f32.mrb[0].mxu0
    %v1610 = vadd.f32 %v1524, %v1609
    %v1611 = vpop.f32.mrb[0].mxu0
    %1612 = vmatprep.mubr.f32.mxu0 0.0
    %1613 = vmatmul.mubr.f32.gmra.mrb[0].mxu0 %v1533
    %v1614 = vpop.f32.mrb[0].mxu0
    %v1615 = vadd.f32 %v1524, %v1614
    %v1616 = vpop.f32.mrb[0].mxu0
    %1617 = vmatprep.mubr.f32.mxu0 0.0
    %1618 = vmatmul.mubr.f32.gmra.mrb[0].mxu0 %v1536
    %v1619 = vpop.f32.mrb[0].mxu0
    %v1620 = vadd.f32 %v1524, %v1619
    %v1621 = vpop.f32.mrb[0].mxu0
    %1622 = vdwg.mxu0
    %v1623 = vadd.f32 %v1509, %v1605
    %v1624 = vadd.f32 %v1510, %v1610
    %v1625 = vadd.f32 %v1511, %v1615
    %v1626 = vadd.f32 %v1512, %v1620
    %s1627 = scalar_lea.vmem %s15, 2
    %v1628 = vld [vmem:[%s1627] sm:$0x1]
    %s1629 = scalar_lea.vmem %s16, 2
    %v1630 = vld [vmem:[%s1629] sm:$0x1]
    %v1631 = vsel %vm488, %v1623, 0.0
    %1632 = vadd.xlane.f32.xlu0 %v1631
    %v1633 = vpop.xlane.xlu0 %1632
    %v1634 = vsel %vm488, %v1624, 0.0
    %1635 = vadd.xlane.f32.xlu0 %v1634
    %v1636 = vpop.xlane.xlu0 %1635
    %v1637 = vsel %vm488, %v1625, 0.0
    %1638 = vadd.xlane.f32.xlu0 %v1637
    %v1639 = vpop.xlane.xlu0 %1638
    %v1640 = vsel %vm488, %v1626, 0.0
    %1641 = vadd.xlane.f32.xlu0 %v1640
    %v1642 = vpop.xlane.xlu0 %1641
    %v1643 = vmul.f32 %v1633, %v604
    %v1644 = vmul.f32 %v1636, %v604
    %v1645 = vmul.f32 %v1639, %v604
    %v1646 = vmul.f32 %v1642, %v604
    %v1647 = vmul.f32 %v1623, %v1623
    %v1648 = vmul.f32 %v1624, %v1624
    %v1649 = vmul.f32 %v1625, %v1625
    %v1650 = vmul.f32 %v1626, %v1626
    %v1651 = vsel %vm488, %v1647, 0.0
    %1652 = vadd.xlane.f32.xlu0 %v1651
    %v1653 = vpop.xlane.xlu0 %1652
    %v1654 = vsel %vm488, %v1648, 0.0
    %1655 = vadd.xlane.f32.xlu0 %v1654
    %v1656 = vpop.xlane.xlu0 %1655
    %v1657 = vsel %vm488, %v1649, 0.0
    %1658 = vadd.xlane.f32.xlu0 %v1657
    %v1659 = vpop.xlane.xlu0 %1658
    %v1660 = vsel %vm488, %v1650, 0.0
    %1661 = vadd.xlane.f32.xlu0 %v1660
    %v1662 = vpop.xlane.xlu0 %1661
    %v1663 = vmul.f32 %v1653, %v604
    %v1664 = vmul.f32 %v1656, %v604
    %v1665 = vmul.f32 %v1659, %v604
    %v1666 = vmul.f32 %v1662, %v604
    %v1667 = vmul.f32 %v1643, %v1643
    %v1668 = vmul.f32 %v1644, %v1644
    %v1669 = vmul.f32 %v1645, %v1645
    %v1670 = vmul.f32 %v1646, %v1646
    %v1671 = vsub.f32 %v1663, %v1667
    %v1672 = vsub.f32 %v1664, %v1668
    %v1673 = vsub.f32 %v1665, %v1669
    %v1674 = vsub.f32 %v1666, %v1670
    %v1675 = vmax.f32 %v1671, 0.0
    %v1676 = vmax.f32 %v1672, 0.0
    %v1677 = vmax.f32 %v1673, 0.0
    %v1678 = vmax.f32 %v1674, 0.0
    %v1679 = vsub.f32 %v1623, %v1643
    %v1680 = vsub.f32 %v1624, %v1644
    %v1681 = vsub.f32 %v1625, %v1645
    %v1682 = vsub.f32 %v1626, %v1646
    %v1683 = vadd.f32 %v1675, 1e-05
    %v1684 = vadd.f32 %v1676, 1e-05
    %v1685 = vadd.f32 %v1677, 1e-05
    %v1686 = vadd.f32 %v1678, 1e-05
    %v1687 = vrsqrt.pop %v1683
    %v1688 = vrsqrt.pop %v1684
    %v1689 = vrsqrt.pop %v1685
    %v1690 = vrsqrt.pop %v1686
    %v1691 = vmul.f32 %v1679, %v1687
    %v1692 = vmul.f32 %v1680, %v1688
    %v1693 = vmul.f32 %v1681, %v1689
    %v1694 = vmul.f32 %v1682, %v1690
    %v1696 = vlaneseq
    %v1697 = vshrl.u32 %v1696, 7
    %v1698 = vsub.s32 0, %v1697
    %v1699 = vrot.slane %v1628, %v1698
    %v1701 = vmul.f32 %v1691, %v1699
    %v1702 = vmul.f32 %v1692, %v1699
    %v1703 = vmul.f32 %v1693, %v1699
    %v1704 = vmul.f32 %v1694, %v1699
    %v1706 = vlaneseq
    %v1707 = vshrl.u32 %v1706, 7
    %v1708 = vsub.s32 0, %v1707
    %v1709 = vrot.slane %v1630, %v1708
    %v1711 = vadd.f32 %v1701, %v1709
    %v1712 = vadd.f32 %v1702, %v1709
    %v1713 = vadd.f32 %v1703, %v1709
    %v1714 = vadd.f32 %v1704, %v1709
    %s1715 = scalar_lea.vmem [#allocation13], 64
    %v1716 = vld [vmem:[%s1715] sm:$0xff]
    %v1717 = vld [vmem:[%s1715 + $0x8] sm:$0xff]
    %v1718 = vld [vmem:[%s1715 + $0x10] sm:$0xff]
    %v1719 = vld [vmem:[%s1715 + $0x18] sm:$0xff]
    %s1720 = scalar_lea.vmem %s18, 2
    %v1721 = vld [vmem:[%s1720] sm:$0x1]
    %v1723 = vlaneseq
    %v1724 = vshrl.u32 %v1723, 7
    %v1725 = vsub.s32 0, %v1724
    %v1726 = vrot.slane %v1721, %v1725
    %v1729 = vsel %vm488, %v1711, 0
    %v1732 = vsel %vm488, %v1712, 0
    %v1735 = vsel %vm488, %v1713, 0
    %v1738 = vsel %vm488, %v1714, 0
    %1740 = vmatprep.subr.mxu0 0.0
    %1741 = vmatpush1.msra.mxu0 %v1716
    %1742 = vmatprep.subr.mxu0 0.0
    %1743 = vmatpush1.msra.mxu0 %v1717
    %1744 = vmatprep.subr.mxu0 0.0
    %1745 = vmatpush1.msra.mxu0 %v1718
    %1746 = vmatprep.subr.mxu0 0.0
    %1747 = vmatpush1.msra.mxu0 %v1719
    %1748 = vmatprep.subr.mxu0 0.0
    %1749 = vmatpush1.msra.mxu0 0.0
    %1750 = vmatprep.subr.mxu0 0.0
    %1751 = vmatpush1.msra.mxu0 0.0
    %1752 = vmatprep.subr.mxu0 0.0
    %1753 = vmatpush1.msra.mxu0 0.0
    %1754 = vmatprep.subr.mxu0 0.0
    %1755 = vmatpush1.msra.mxu0 0.0
    %1756 = vmatprep.subr.mxu0 0.0
    %1757 = vmatpush1.msra.mxu0 0.0
    %1758 = vmatprep.subr.mxu0 0.0
    %1759 = vmatpush1.msra.mxu0 0.0
    %1760 = vmatprep.subr.mxu0 0.0
    %1761 = vmatpush1.msra.mxu0 0.0
    %1762 = vmatprep.subr.mxu0 0.0
    %1763 = vmatpush1.msra.mxu0 0.0
    %1764 = vmatprep.subr.mxu0 0.0
    %1765 = vmatpush1.msra.mxu0 0.0
    %1766 = vmatprep.subr.mxu0 0.0
    %1767 = vmatpush1.msra.mxu0 0.0
    %1768 = vmatprep.subr.mxu0 0.0
    %1769 = vmatpush1.msra.mxu0 0.0
    %1770 = vmatprep.subr.mxu0 0.0
    %1771 = vmatpush1.msra.mxu0 0.0
    %1772 = vmatprep.subr.mxu0 0.0
    %1773 = vmatpush1.msra.mxu0 0.0
    %1774 = vmatprep.subr.mxu0 0.0
    %1775 = vmatpush1.msra.mxu0 0.0
    %1776 = vmatprep.subr.mxu0 0.0
    %1777 = vmatpush1.msra.mxu0 0.0
    %1778 = vmatprep.subr.mxu0 0.0
    %1779 = vmatpush1.msra.mxu0 0.0
    %1780 = vmatprep.subr.mxu0 0.0
    %1781 = vmatpush1.msra.mxu0 0.0
    %1782 = vmatprep.subr.mxu0 0.0
    %1783 = vmatpush1.msra.mxu0 0.0
    %1784 = vmatprep.subr.mxu0 0.0
    %1785 = vmatpush1.msra.mxu0 0.0
    %1786 = vmatprep.subr.mxu0 0.0
    %1787 = vmatpush1.msra.mxu0 0.0
    %1788 = vmatprep.subr.mxu0 0.0
    %1789 = vmatpush1.msra.mxu0 0.0
    %1790 = vmatprep.subr.mxu0 0.0
    %1791 = vmatpush1.msra.mxu0 0.0
    %1792 = vmatprep.subr.mxu0 0.0
    %1793 = vmatpush1.msra.mxu0 0.0
    %1794 = vmatprep.subr.mxu0 0.0
    %1795 = vmatpush1.msra.mxu0 0.0
    %1796 = vmatprep.subr.mxu0 0.0
    %1797 = vmatpush1.msra.mxu0 0.0
    %1798 = vmatprep.subr.mxu0 0.0
    %1799 = vmatpush1.msra.mxu0 0.0
    %1800 = vmatprep.subr.mxu0 0.0
    %1801 = vmatpush1.msra.mxu0 0.0
    %1802 = vmatprep.subr.mxu0 0.0
    %1803 = vmatpush1.msra.mxu0 0.0
    %1804 = vmatprep.mubr.f32.mxu0 0.0
    %1805 = vmatmul.mubr.f32.gmra.mrb[0].mxu0 %v1729
    %v1806 = vpop.f32.mrb[0].mxu0
    %v1807 = vadd.f32 %v1726, %v1806
    %v1808 = vpop.f32.mrb[0].mxu0
    %1809 = vmatprep.mubr.f32.mxu0 0.0
    %1810 = vmatmul.mubr.f32.gmra.mrb[0].mxu0 %v1732
    %v1811 = vpop.f32.mrb[0].mxu0
    %v1812 = vadd.f32 %v1726, %v1811
    %v1813 = vpop.f32.mrb[0].mxu0
    %1814 = vmatprep.mubr.f32.mxu0 0.0
    %1815 = vmatmul.mubr.f32.gmra.mrb[0].mxu0 %v1735
    %v1816 = vpop.f32.mrb[0].mxu0
    %v1817 = vadd.f32 %v1726, %v1816
    %v1818 = vpop.f32.mrb[0].mxu0
    %1819 = vmatprep.mubr.f32.mxu0 0.0
    %1820 = vmatmul.mubr.f32.gmra.mrb[0].mxu0 %v1738
    %v1821 = vpop.f32.mrb[0].mxu0
    %v1822 = vadd.f32 %v1726, %v1821
    %v1823 = vpop.f32.mrb[0].mxu0
    %1824 = vdwg.mxu0
    %v1825 = vmax.f32 %v1807, 0.0
    %v1826 = vmax.f32 %v1812, 0.0
    %v1827 = vmax.f32 %v1817, 0.0
    %v1828 = vmax.f32 %v1822, 0.0
    %s1829 = scalar_lea.vmem %s19, 128
    %v1830 = vld [vmem:[%s1829] sm:$0xff]
    %v1831 = vld [vmem:[%s1829 + $0x8] sm:$0xff]
    %v1832 = vld [vmem:[%s1829 + $0x10] sm:$0xff]
    %v1833 = vld [vmem:[%s1829 + $0x18] sm:$0xff]
    %v1834 = vld [vmem:[%s1829 + $0x20] sm:$0xff]
    %v1835 = vld [vmem:[%s1829 + $0x28] sm:$0xff]
    %v1836 = vld [vmem:[%s1829 + $0x30] sm:$0xff]
    %v1837 = vld [vmem:[%s1829 + $0x38] sm:$0xff]
    %s1838 = scalar_lea.vmem %s20, 2
    %v1839 = vld [vmem:[%s1838] sm:$0x1]
    %v1841 = vlaneseq
    %v1842 = vshrl.u32 %v1841, 7
    %v1843 = vsub.s32 0, %v1842
    %v1844 = vrot.slane %v1839, %v1843
    %v1847 = vsel %vm188, %v1825, 0
    %v1850 = vsel %vm188, %v1826, 0
    %v1853 = vsel %vm188, %v1827, 0
    %v1856 = vsel %vm188, %v1828, 0
    %1858 = vmatprep.subr.mxu0 0.0
    %1859 = vmatpush1.msra.mxu0 %v1830
    %1860 = vmatprep.subr.mxu0 0.0
    %1861 = vmatpush1.msra.mxu0 %v1831
    %1862 = vmatprep.subr.mxu0 0.0
    %1863 = vmatpush1.msra.mxu0 %v1832
    %1864 = vmatprep.subr.mxu0 0.0
    %1865 = vmatpush1.msra.mxu0 %v1833
    %1866 = vmatprep.subr.mxu0 0.0
    %1867 = vmatpush1.msra.mxu0 %v1834
    %1868 = vmatprep.subr.mxu0 0.0
    %1869 = vmatpush1.msra.mxu0 %v1835
    %1870 = vmatprep.subr.mxu0 0.0
    %1871 = vmatpush1.msra.mxu0 %v1836
    %1872 = vmatprep.subr.mxu0 0.0
    %1873 = vmatpush1.msra.mxu0 %v1837
    %1874 = vmatprep.subr.mxu0 0.0
    %1875 = vmatpush1.msra.mxu0 0.0
    %1876 = vmatprep.subr.mxu0 0.0
    %1877 = vmatpush1.msra.mxu0 0.0
    %1878 = vmatprep.subr.mxu0 0.0
    %1879 = vmatpush1.msra.mxu0 0.0
    %1880 = vmatprep.subr.mxu0 0.0
    %1881 = vmatpush1.msra.mxu0 0.0
    %1882 = vmatprep.subr.mxu0 0.0
    %1883 = vmatpush1.msra.mxu0 0.0
    %1884 = vmatprep.subr.mxu0 0.0
    %1885 = vmatpush1.msra.mxu0 0.0
    %1886 = vmatprep.subr.mxu0 0.0
    %1887 = vmatpush1.msra.mxu0 0.0
    %1888 = vmatprep.subr.mxu0 0.0
    %1889 = vmatpush1.msra.mxu0 0.0
    %1890 = vmatprep.subr.mxu0 0.0
    %1891 = vmatpush1.msra.mxu0 0.0
    %1892 = vmatprep.subr.mxu0 0.0
    %1893 = vmatpush1.msra.mxu0 0.0
    %1894 = vmatprep.subr.mxu0 0.0
    %1895 = vmatpush1.msra.mxu0 0.0
    %1896 = vmatprep.subr.mxu0 0.0
    %1897 = vmatpush1.msra.mxu0 0.0
    %1898 = vmatprep.subr.mxu0 0.0
    %1899 = vmatpush1.msra.mxu0 0.0
    %1900 = vmatprep.subr.mxu0 0.0
    %1901 = vmatpush1.msra.mxu0 0.0
    %1902 = vmatprep.subr.mxu0 0.0
    %1903 = vmatpush1.msra.mxu0 0.0
    %1904 = vmatprep.subr.mxu0 0.0
    %1905 = vmatpush1.msra.mxu0 0.0
    %1906 = vmatprep.subr.mxu0 0.0
    %1907 = vmatpush1.msra.mxu0 0.0
    %1908 = vmatprep.subr.mxu0 0.0
    %1909 = vmatpush1.msra.mxu0 0.0
    %1910 = vmatprep.subr.mxu0 0.0
    %1911 = vmatpush1.msra.mxu0 0.0
    %1912 = vmatprep.subr.mxu0 0.0
    %1913 = vmatpush1.msra.mxu0 0.0
    %1914 = vmatprep.subr.mxu0 0.0
    %1915 = vmatpush1.msra.mxu0 0.0
    %1916 = vmatprep.subr.mxu0 0.0
    %1917 = vmatpush1.msra.mxu0 0.0
    %1918 = vmatprep.subr.mxu0 0.0
    %1919 = vmatpush1.msra.mxu0 0.0
    %1920 = vmatprep.subr.mxu0 0.0
    %1921 = vmatpush1.msra.mxu0 0.0
    %1922 = vmatprep.mubr.f32.mxu0 0.0
    %1923 = vmatmul.mubr.f32.gmra.mrb[0].mxu0 %v1847
    %v1924 = vpop.f32.mrb[0].mxu0
    %v1925 = vadd.f32 %v1844, %v1924
    %v1926 = vpop.f32.mrb[0].mxu0
    %1927 = vmatprep.mubr.f32.mxu0 0.0
    %1928 = vmatmul.mubr.f32.gmra.mrb[0].mxu0 %v1850
    %v1929 = vpop.f32.mrb[0].mxu0
    %v1930 = vadd.f32 %v1844, %v1929
    %v1931 = vpop.f32.mrb[0].mxu0
    %1932 = vmatprep.mubr.f32.mxu0 0.0
    %1933 = vmatmul.mubr.f32.gmra.mrb[0].mxu0 %v1853
    %v1934 = vpop.f32.mrb[0].mxu0
    %v1935 = vadd.f32 %v1844, %v1934
    %v1936 = vpop.f32.mrb[0].mxu0
    %1937 = vmatprep.mubr.f32.mxu0 0.0
    %1938 = vmatmul.mubr.f32.gmra.mrb[0].mxu0 %v1856
    %v1939 = vpop.f32.mrb[0].mxu0
    %v1940 = vadd.f32 %v1844, %v1939
    %v1941 = vpop.f32.mrb[0].mxu0
    %1942 = vdwg.mxu0
    %v1943 = vadd.f32 %v1711, %v1925
    %v1944 = vadd.f32 %v1712, %v1930
    %v1945 = vadd.f32 %v1713, %v1935
    %v1946 = vadd.f32 %v1714, %v1940
    %s1947 = scalar_lea.vmem %s21, 2
    %v1948 = vld [vmem:[%s1947] sm:$0x1]
    %s1949 = scalar_lea.vmem %s22, 2
    %v1950 = vld [vmem:[%s1949] sm:$0x1]
    %v1951 = vsel %vm488, %v1943, 0.0
    %1952 = vadd.xlane.f32.xlu0 %v1951
    %v1953 = vpop.xlane.xlu0 %1952
    %v1954 = vsel %vm488, %v1944, 0.0
    %1955 = vadd.xlane.f32.xlu0 %v1954
    %v1956 = vpop.xlane.xlu0 %1955
    %v1957 = vsel %vm488, %v1945, 0.0
    %1958 = vadd.xlane.f32.xlu0 %v1957
    %v1959 = vpop.xlane.xlu0 %1958
    %v1960 = vsel %vm488, %v1946, 0.0
    %1961 = vadd.xlane.f32.xlu0 %v1960
    %v1962 = vpop.xlane.xlu0 %1961
    %v1963 = vmul.f32 %v1953, %v604
    %v1964 = vmul.f32 %v1956, %v604
    %v1965 = vmul.f32 %v1959, %v604
    %v1966 = vmul.f32 %v1962, %v604
    %v1967 = vmul.f32 %v1943, %v1943
    %v1968 = vmul.f32 %v1944, %v1944
    %v1969 = vmul.f32 %v1945, %v1945
    %v1970 = vmul.f32 %v1946, %v1946
    %v1971 = vsel %vm488, %v1967, 0.0
    %1972 = vadd.xlane.f32.xlu0 %v1971
    %v1973 = vpop.xlane.xlu0 %1972
    %v1974 = vsel %vm488, %v1968, 0.0
    %1975 = vadd.xlane.f32.xlu0 %v1974
    %v1976 = vpop.xlane.xlu0 %1975
    %v1977 = vsel %vm488, %v1969, 0.0
    %1978 = vadd.xlane.f32.xlu0 %v1977
    %v1979 = vpop.xlane.xlu0 %1978
    %v1980 = vsel %vm488, %v1970, 0.0
    %1981 = vadd.xlane.f32.xlu0 %v1980
    %v1982 = vpop.xlane.xlu0 %1981
    %v1983 = vmul.f32 %v1973, %v604
    %v1984 = vmul.f32 %v1976, %v604
    %v1985 = vmul.f32 %v1979, %v604
    %v1986 = vmul.f32 %v1982, %v604
    %v1987 = vmul.f32 %v1963, %v1963
    %v1988 = vmul.f32 %v1964, %v1964
    %v1989 = vmul.f32 %v1965, %v1965
    %v1990 = vmul.f32 %v1966, %v1966
    %v1991 = vsub.f32 %v1983, %v1987
    %v1992 = vsub.f32 %v1984, %v1988
    %v1993 = vsub.f32 %v1985, %v1989
    %v1994 = vsub.f32 %v1986, %v1990
    %v1995 = vmax.f32 %v1991, 0.0
    %v1996 = vmax.f32 %v1992, 0.0
    %v1997 = vmax.f32 %v1993, 0.0
    %v1998 = vmax.f32 %v1994, 0.0
    %v1999 = vsub.f32 %v1943, %v1963
    %v2000 = vsub.f32 %v1944, %v1964
    %v2001 = vsub.f32 %v1945, %v1965
    %v2002 = vsub.f32 %v1946, %v1966
    %v2003 = vadd.f32 %v1995, 1e-05
    %v2004 = vadd.f32 %v1996, 1e-05
    %v2005 = vadd.f32 %v1997, 1e-05
    %v2006 = vadd.f32 %v1998, 1e-05
    %v2007 = vrsqrt.pop %v2003
    %v2008 = vrsqrt.pop %v2004
    %v2009 = vrsqrt.pop %v2005
    %v2010 = vrsqrt.pop %v2006
    %v2011 = vmul.f32 %v1999, %v2007
    %v2012 = vmul.f32 %v2000, %v2008
    %v2013 = vmul.f32 %v2001, %v2009
    %v2014 = vmul.f32 %v2002, %v2010
    %v2016 = vlaneseq
    %v2017 = vshrl.u32 %v2016, 7
    %v2018 = vsub.s32 0, %v2017
    %v2019 = vrot.slane %v1948, %v2018
    %v2021 = vmul.f32 %v2011, %v2019
    %v2022 = vmul.f32 %v2012, %v2019
    %v2023 = vmul.f32 %v2013, %v2019
    %v2024 = vmul.f32 %v2014, %v2019
    %v2026 = vlaneseq
    %v2027 = vshrl.u32 %v2026, 7
    %v2028 = vsub.s32 0, %v2027
    %v2029 = vrot.slane %v1950, %v2028
    %v2031 = vadd.f32 %v2021, %v2029
    %v2032 = vadd.f32 %v2022, %v2029
    %v2033 = vadd.f32 %v2023, %v2029
    %v2034 = vadd.f32 %v2024, %v2029
    %s2035 = scalar_lea.vmem [#allocation11], 96
    %v2036 = vld [vmem:[%s2035] sm:$0xff]
    %v2037 = vld [vmem:[%s2035 + $0x8] sm:$0xff]
    %v2038 = vld [vmem:[%s2035 + $0x10] sm:$0xff]
    %v2039 = vld [vmem:[%s2035 + $0x18] sm:$0xff]
    %s2040 = scalar_lea.vmem %s14, 3
    %v2041 = vld [vmem:[%s2040] sm:$0x1]
    %v2043 = vlaneseq
    %v2044 = vshrl.u32 %v2043, 7
    %v2045 = vsub.s32 0, %v2044
    %v2046 = vrot.slane %v2041, %v2045
    %v2049 = vsel %vm488, %v2031, 0
    %v2052 = vsel %vm488, %v2032, 0
    %v2055 = vsel %vm488, %v2033, 0
    %v2058 = vsel %vm488, %v2034, 0
    %2060 = vmatprep.subr.mxu0 0.0
    %2061 = vmatpush1.msra.mxu0 %v2036
    %2062 = vmatprep.subr.mxu0 0.0
    %2063 = vmatpush1.msra.mxu0 %v2037
    %2064 = vmatprep.subr.mxu0 0.0
    %2065 = vmatpush1.msra.mxu0 %v2038
    %2066 = vmatprep.subr.mxu0 0.0
    %2067 = vmatpush1.msra.mxu0 %v2039
    %2068 = vmatprep.subr.mxu0 0.0
    %2069 = vmatpush1.msra.mxu0 0.0
    %2070 = vmatprep.subr.mxu0 0.0
    %2071 = vmatpush1.msra.mxu0 0.0
    %2072 = vmatprep.subr.mxu0 0.0
    %2073 = vmatpush1.msra.mxu0 0.0
    %2074 = vmatprep.subr.mxu0 0.0
    %2075 = vmatpush1.msra.mxu0 0.0
    %2076 = vmatprep.subr.mxu0 0.0
    %2077 = vmatpush1.msra.mxu0 0.0
    %2078 = vmatprep.subr.mxu0 0.0
    %2079 = vmatpush1.msra.mxu0 0.0
    %2080 = vmatprep.subr.mxu0 0.0
    %2081 = vmatpush1.msra.mxu0 0.0
    %2082 = vmatprep.subr.mxu0 0.0
    %2083 = vmatpush1.msra.mxu0 0.0
    %2084 = vmatprep.subr.mxu0 0.0
    %2085 = vmatpush1.msra.mxu0 0.0
    %2086 = vmatprep.subr.mxu0 0.0
    %2087 = vmatpush1.msra.mxu0 0.0
    %2088 = vmatprep.subr.mxu0 0.0
    %2089 = vmatpush1.msra.mxu0 0.0
    %2090 = vmatprep.subr.mxu0 0.0
    %2091 = vmatpush1.msra.mxu0 0.0
    %2092 = vmatprep.subr.mxu0 0.0
    %2093 = vmatpush1.msra.mxu0 0.0
    %2094 = vmatprep.subr.mxu0 0.0
    %2095 = vmatpush1.msra.mxu0 0.0
    %2096 = vmatprep.subr.mxu0 0.0
    %2097 = vmatpush1.msra.mxu0 0.0
    %2098 = vmatprep.subr.mxu0 0.0
    %2099 = vmatpush1.msra.mxu0 0.0
    %2100 = vmatprep.subr.mxu0 0.0
    %2101 = vmatpush1.msra.mxu0 0.0
    %2102 = vmatprep.subr.mxu0 0.0
    %2103 = vmatpush1.msra.mxu0 0.0
    %2104 = vmatprep.subr.mxu0 0.0
    %2105 = vmatpush1.msra.mxu0 0.0
    %2106 = vmatprep.subr.mxu0 0.0
    %2107 = vmatpush1.msra.mxu0 0.0
    %2108 = vmatprep.subr.mxu0 0.0
    %2109 = vmatpush1.msra.mxu0 0.0
    %2110 = vmatprep.subr.mxu0 0.0
    %2111 = vmatpush1.msra.mxu0 0.0
    %2112 = vmatprep.subr.mxu0 0.0
    %2113 = vmatpush1.msra.mxu0 0.0
    %2114 = vmatprep.subr.mxu0 0.0
    %2115 = vmatpush1.msra.mxu0 0.0
    %2116 = vmatprep.subr.mxu0 0.0
    %2117 = vmatpush1.msra.mxu0 0.0
    %2118 = vmatprep.subr.mxu0 0.0
    %2119 = vmatpush1.msra.mxu0 0.0
    %2120 = vmatprep.subr.mxu0 0.0
    %2121 = vmatpush1.msra.mxu0 0.0
    %2122 = vmatprep.subr.mxu0 0.0
    %2123 = vmatpush1.msra.mxu0 0.0
    %2124 = vmatprep.mubr.f32.mxu0 0.0
    %2125 = vmatmul.mubr.f32.gmra.mrb[0].mxu0 %v2049
    %v2126 = vpop.f32.mrb[0].mxu0
    %v2127 = vadd.f32 %v2046, %v2126
    %v2128 = vpop.f32.mrb[0].mxu0
    %2129 = vmatprep.mubr.f32.mxu0 0.0
    %2130 = vmatmul.mubr.f32.gmra.mrb[0].mxu0 %v2052
    %v2131 = vpop.f32.mrb[0].mxu0
    %v2132 = vadd.f32 %v2046, %v2131
    %v2133 = vpop.f32.mrb[0].mxu0
    %2134 = vmatprep.mubr.f32.mxu0 0.0
    %2135 = vmatmul.mubr.f32.gmra.mrb[0].mxu0 %v2055
    %v2136 = vpop.f32.mrb[0].mxu0
    %v2137 = vadd.f32 %v2046, %v2136
    %v2138 = vpop.f32.mrb[0].mxu0
    %2139 = vmatprep.mubr.f32.mxu0 0.0
    %2140 = vmatmul.mubr.f32.gmra.mrb[0].mxu0 %v2058
    %v2141 = vpop.f32.mrb[0].mxu0
    %v2142 = vadd.f32 %v2046, %v2141
    %v2143 = vpop.f32.mrb[0].mxu0
    %2144 = vdwg.mxu0
    %v2145 = vadd.f32 %v2031, %v2127
    %v2146 = vadd.f32 %v2032, %v2132
    %v2147 = vadd.f32 %v2033, %v2137
    %v2148 = vadd.f32 %v2034, %v2142
    %s2149 = scalar_lea.vmem %s15, 3
    %v2150 = vld [vmem:[%s2149] sm:$0x1]
    %s2151 = scalar_lea.vmem %s16, 3
    %v2152 = vld [vmem:[%s2151] sm:$0x1]
    %v2153 = vsel %vm488, %v2145, 0.0
    %2154 = vadd.xlane.f32.xlu0 %v2153
    %v2155 = vpop.xlane.xlu0 %2154
    %v2156 = vsel %vm488, %v2146, 0.0
    %2157 = vadd.xlane.f32.xlu0 %v2156
    %v2158 = vpop.xlane.xlu0 %2157
    %v2159 = vsel %vm488, %v2147, 0.0
    %2160 = vadd.xlane.f32.xlu0 %v2159
    %v2161 = vpop.xlane.xlu0 %2160
    %v2162 = vsel %vm488, %v2148, 0.0
    %2163 = vadd.xlane.f32.xlu0 %v2162
    %v2164 = vpop.xlane.xlu0 %2163
    %v2165 = vmul.f32 %v2155, %v604
    %v2166 = vmul.f32 %v2158, %v604
    %v2167 = vmul.f32 %v2161, %v604
    %v2168 = vmul.f32 %v2164, %v604
    %v2169 = vmul.f32 %v2145, %v2145
    %v2170 = vmul.f32 %v2146, %v2146
    %v2171 = vmul.f32 %v2147, %v2147
    %v2172 = vmul.f32 %v2148, %v2148
    %v2173 = vsel %vm488, %v2169, 0.0
    %2174 = vadd.xlane.f32.xlu0 %v2173
    %v2175 = vpop.xlane.xlu0 %2174
    %v2176 = vsel %vm488, %v2170, 0.0
    %2177 = vadd.xlane.f32.xlu0 %v2176
    %v2178 = vpop.xlane.xlu0 %2177
    %v2179 = vsel %vm488, %v2171, 0.0
    %2180 = vadd.xlane.f32.xlu0 %v2179
    %v2181 = vpop.xlane.xlu0 %2180
    %v2182 = vsel %vm488, %v2172, 0.0
    %2183 = vadd.xlane.f32.xlu0 %v2182
    %v2184 = vpop.xlane.xlu0 %2183
    %v2185 = vmul.f32 %v2175, %v604
    %v2186 = vmul.f32 %v2178, %v604
    %v2187 = vmul.f32 %v2181, %v604
    %v2188 = vmul.f32 %v2184, %v604
    %v2189 = vmul.f32 %v2165, %v2165
    %v2190 = vmul.f32 %v2166, %v2166
    %v2191 = vmul.f32 %v2167, %v2167
    %v2192 = vmul.f32 %v2168, %v2168
    %v2193 = vsub.f32 %v2185, %v2189
    %v2194 = vsub.f32 %v2186, %v2190
    %v2195 = vsub.f32 %v2187, %v2191
    %v2196 = vsub.f32 %v2188, %v2192
    %v2197 = vmax.f32 %v2193, 0.0
    %v2198 = vmax.f32 %v2194, 0.0
    %v2199 = vmax.f32 %v2195, 0.0
    %v2200 = vmax.f32 %v2196, 0.0
    %v2201 = vsub.f32 %v2145, %v2165
    %v2202 = vsub.f32 %v2146, %v2166
    %v2203 = vsub.f32 %v2147, %v2167
    %v2204 = vsub.f32 %v2148, %v2168
    %v2205 = vadd.f32 %v2197, 1e-05
    %v2206 = vadd.f32 %v2198, 1e-05
    %v2207 = vadd.f32 %v2199, 1e-05
    %v2208 = vadd.f32 %v2200, 1e-05
    %v2209 = vrsqrt.pop %v2205
    %v2210 = vrsqrt.pop %v2206
    %v2211 = vrsqrt.pop %v2207
    %v2212 = vrsqrt.pop %v2208
    %v2213 = vmul.f32 %v2201, %v2209
    %v2214 = vmul.f32 %v2202, %v2210
    %v2215 = vmul.f32 %v2203, %v2211
    %v2216 = vmul.f32 %v2204, %v2212
    %v2218 = vlaneseq
    %v2219 = vshrl.u32 %v2218, 7
    %v2220 = vsub.s32 0, %v2219
    %v2221 = vrot.slane %v2150, %v2220
    %v2223 = vmul.f32 %v2213, %v2221
    %v2224 = vmul.f32 %v2214, %v2221
    %v2225 = vmul.f32 %v2215, %v2221
    %v2226 = vmul.f32 %v2216, %v2221
    %v2228 = vlaneseq
    %v2229 = vshrl.u32 %v2228, 7
    %v2230 = vsub.s32 0, %v2229
    %v2231 = vrot.slane %v2152, %v2230
    %v2233 = vadd.f32 %v2223, %v2231
    %v2234 = vadd.f32 %v2224, %v2231
    %v2235 = vadd.f32 %v2225, %v2231
    %v2236 = vadd.f32 %v2226, %v2231
    %s2237 = scalar_lea.vmem [#allocation13], 96
    %v2238 = vld [vmem:[%s2237] sm:$0xff]
    %v2239 = vld [vmem:[%s2237 + $0x8] sm:$0xff]
    %v2240 = vld [vmem:[%s2237 + $0x10] sm:$0xff]
    %v2241 = vld [vmem:[%s2237 + $0x18] sm:$0xff]
    %s2242 = scalar_lea.vmem %s18, 3
    %v2243 = vld [vmem:[%s2242] sm:$0x1]
    %v2245 = vlaneseq
    %v2246 = vshrl.u32 %v2245, 7
    %v2247 = vsub.s32 0, %v2246
    %v2248 = vrot.slane %v2243, %v2247
    %v2251 = vsel %vm488, %v2233, 0
    %v2254 = vsel %vm488, %v2234, 0
    %v2257 = vsel %vm488, %v2235, 0
    %v2260 = vsel %vm488, %v2236, 0
    %2262 = vmatprep.subr.mxu0 0.0
    %2263 = vmatpush1.msra.mxu0 %v2238
    %2264 = vmatprep.subr.mxu0 0.0
    %2265 = vmatpush1.msra.mxu0 %v2239
    %2266 = vmatprep.subr.mxu0 0.0
    %2267 = vmatpush1.msra.mxu0 %v2240
    %2268 = vmatprep.subr.mxu0 0.0
    %2269 = vmatpush1.msra.mxu0 %v2241
    %2270 = vmatprep.subr.mxu0 0.0
    %2271 = vmatpush1.msra.mxu0 0.0
    %2272 = vmatprep.subr.mxu0 0.0
    %2273 = vmatpush1.msra.mxu0 0.0
    %2274 = vmatprep.subr.mxu0 0.0
    %2275 = vmatpush1.msra.mxu0 0.0
    %2276 = vmatprep.subr.mxu0 0.0
    %2277 = vmatpush1.msra.mxu0 0.0
    %2278 = vmatprep.subr.mxu0 0.0
    %2279 = vmatpush1.msra.mxu0 0.0
    %2280 = vmatprep.subr.mxu0 0.0
    %2281 = vmatpush1.msra.mxu0 0.0
    %2282 = vmatprep.subr.mxu0 0.0
    %2283 = vmatpush1.msra.mxu0 0.0
    %2284 = vmatprep.subr.mxu0 0.0
    %2285 = vmatpush1.msra.mxu0 0.0
    %2286 = vmatprep.subr.mxu0 0.0
    %2287 = vmatpush1.msra.mxu0 0.0
    %2288 = vmatprep.subr.mxu0 0.0
    %2289 = vmatpush1.msra.mxu0 0.0
    %2290 = vmatprep.subr.mxu0 0.0
    %2291 = vmatpush1.msra.mxu0 0.0
    %2292 = vmatprep.subr.mxu0 0.0
    %2293 = vmatpush1.msra.mxu0 0.0
    %2294 = vmatprep.subr.mxu0 0.0
    %2295 = vmatpush1.msra.mxu0 0.0
    %2296 = vmatprep.subr.mxu0 0.0
    %2297 = vmatpush1.msra.mxu0 0.0
    %2298 = vmatprep.subr.mxu0 0.0
    %2299 = vmatpush1.msra.mxu0 0.0
    %2300 = vmatprep.subr.mxu0 0.0
    %2301 = vmatpush1.msra.mxu0 0.0
    %2302 = vmatprep.subr.mxu0 0.0
    %2303 = vmatpush1.msra.mxu0 0.0
    %2304 = vmatprep.subr.mxu0 0.0
    %2305 = vmatpush1.msra.mxu0 0.0
    %2306 = vmatprep.subr.mxu0 0.0
    %2307 = vmatpush1.msra.mxu0 0.0
    %2308 = vmatprep.subr.mxu0 0.0
    %2309 = vmatpush1.msra.mxu0 0.0
    %2310 = vmatprep.subr.mxu0 0.0
    %2311 = vmatpush1.msra.mxu0 0.0
    %2312 = vmatprep.subr.mxu0 0.0
    %2313 = vmatpush1.msra.mxu0 0.0
    %2314 = vmatprep.subr.mxu0 0.0
    %2315 = vmatpush1.msra.mxu0 0.0
    %2316 = vmatprep.subr.mxu0 0.0
    %2317 = vmatpush1.msra.mxu0 0.0
    %2318 = vmatprep.subr.mxu0 0.0
    %2319 = vmatpush1.msra.mxu0 0.0
    %2320 = vmatprep.subr.mxu0 0.0
    %2321 = vmatpush1.msra.mxu0 0.0
    %2322 = vmatprep.subr.mxu0 0.0
    %2323 = vmatpush1.msra.mxu0 0.0
    %2324 = vmatprep.subr.mxu0 0.0
    %2325 = vmatpush1.msra.mxu0 0.0
    %2326 = vmatprep.mubr.f32.mxu0 0.0
    %2327 = vmatmul.mubr.f32.gmra.mrb[0].mxu0 %v2251
    %v2328 = vpop.f32.mrb[0].mxu0
    %v2329 = vadd.f32 %v2248, %v2328
    %v2330 = vpop.f32.mrb[0].mxu0
    %2331 = vmatprep.mubr.f32.mxu0 0.0
    %2332 = vmatmul.mubr.f32.gmra.mrb[0].mxu0 %v2254
    %v2333 = vpop.f32.mrb[0].mxu0
    %v2334 = vadd.f32 %v2248, %v2333
    %v2335 = vpop.f32.mrb[0].mxu0
    %2336 = vmatprep.mubr.f32.mxu0 0.0
    %2337 = vmatmul.mubr.f32.gmra.mrb[0].mxu0 %v2257
    %v2338 = vpop.f32.mrb[0].mxu0
    %v2339 = vadd.f32 %v2248, %v2338
    %v2340 = vpop.f32.mrb[0].mxu0
    %2341 = vmatprep.mubr.f32.mxu0 0.0
    %2342 = vmatmul.mubr.f32.gmra.mrb[0].mxu0 %v2260
    %v2343 = vpop.f32.mrb[0].mxu0
    %v2344 = vadd.f32 %v2248, %v2343
    %v2345 = vpop.f32.mrb[0].mxu0
    %2346 = vdwg.mxu0
    %v2347 = vmax.f32 %v2329, 0.0
    %v2348 = vmax.f32 %v2334, 0.0
    %v2349 = vmax.f32 %v2339, 0.0
    %v2350 = vmax.f32 %v2344, 0.0
    %s2351 = scalar_lea.vmem %s19, 192
    %v2352 = vld [vmem:[%s2351] sm:$0xff]
    %v2353 = vld [vmem:[%s2351 + $0x8] sm:$0xff]
    %v2354 = vld [vmem:[%s2351 + $0x10] sm:$0xff]
    %v2355 = vld [vmem:[%s2351 + $0x18] sm:$0xff]
    %v2356 = vld [vmem:[%s2351 + $0x20] sm:$0xff]
    %v2357 = vld [vmem:[%s2351 + $0x28] sm:$0xff]
    %v2358 = vld [vmem:[%s2351 + $0x30] sm:$0xff]
    %v2359 = vld [vmem:[%s2351 + $0x38] sm:$0xff]
    %s2360 = scalar_lea.vmem %s20, 3
    %v2361 = vld [vmem:[%s2360] sm:$0x1]
    %v2363 = vlaneseq
    %v2364 = vshrl.u32 %v2363, 7
    %v2365 = vsub.s32 0, %v2364
    %v2366 = vrot.slane %v2361, %v2365
    %v2369 = vsel %vm188, %v2347, 0
    %v2372 = vsel %vm188, %v2348, 0
    %v2375 = vsel %vm188, %v2349, 0
    %v2378 = vsel %vm188, %v2350, 0
    %2380 = vmatprep.subr.mxu0 0.0
    %2381 = vmatpush1.msra.mxu0 %v2352
    %2382 = vmatprep.subr.mxu0 0.0
    %2383 = vmatpush1.msra.mxu0 %v2353
    %2384 = vmatprep.subr.mxu0 0.0
    %2385 = vmatpush1.msra.mxu0 %v2354
    %2386 = vmatprep.subr.mxu0 0.0
    %2387 = vmatpush1.msra.mxu0 %v2355
    %2388 = vmatprep.subr.mxu0 0.0
    %2389 = vmatpush1.msra.mxu0 %v2356
    %2390 = vmatprep.subr.mxu0 0.0
    %2391 = vmatpush1.msra.mxu0 %v2357
    %2392 = vmatprep.subr.mxu0 0.0
    %2393 = vmatpush1.msra.mxu0 %v2358
    %2394 = vmatprep.subr.mxu0 0.0
    %2395 = vmatpush1.msra.mxu0 %v2359
    %2396 = vmatprep.subr.mxu0 0.0
    %2397 = vmatpush1.msra.mxu0 0.0
    %2398 = vmatprep.subr.mxu0 0.0
    %2399 = vmatpush1.msra.mxu0 0.0
    %2400 = vmatprep.subr.mxu0 0.0
    %2401 = vmatpush1.msra.mxu0 0.0
    %2402 = vmatprep.subr.mxu0 0.0
    %2403 = vmatpush1.msra.mxu0 0.0
    %2404 = vmatprep.subr.mxu0 0.0
    %2405 = vmatpush1.msra.mxu0 0.0
    %2406 = vmatprep.subr.mxu0 0.0
    %2407 = vmatpush1.msra.mxu0 0.0
    %2408 = vmatprep.subr.mxu0 0.0
    %2409 = vmatpush1.msra.mxu0 0.0
    %2410 = vmatprep.subr.mxu0 0.0
    %2411 = vmatpush1.msra.mxu0 0.0
    %2412 = vmatprep.subr.mxu0 0.0
    %2413 = vmatpush1.msra.mxu0 0.0
    %2414 = vmatprep.subr.mxu0 0.0
    %2415 = vmatpush1.msra.mxu0 0.0
    %2416 = vmatprep.subr.mxu0 0.0
    %2417 = vmatpush1.msra.mxu0 0.0
    %2418 = vmatprep.subr.mxu0 0.0
    %2419 = vmatpush1.msra.mxu0 0.0
    %2420 = vmatprep.subr.mxu0 0.0
    %2421 = vmatpush1.msra.mxu0 0.0
    %2422 = vmatprep.subr.mxu0 0.0
    %2423 = vmatpush1.msra.mxu0 0.0
    %2424 = vmatprep.subr.mxu0 0.0
    %2425 = vmatpush1.msra.mxu0 0.0
    %2426 = vmatprep.subr.mxu0 0.0
    %2427 = vmatpush1.msra.mxu0 0.0
    %2428 = vmatprep.subr.mxu0 0.0
    %2429 = vmatpush1.msra.mxu0 0.0
    %2430 = vmatprep.subr.mxu0 0.0
    %2431 = vmatpush1.msra.mxu0 0.0
    %2432 = vmatprep.subr.mxu0 0.0
    %2433 = vmatpush1.msra.mxu0 0.0
    %2434 = vmatprep.subr.mxu0 0.0
    %2435 = vmatpush1.msra.mxu0 0.0
    %2436 = vmatprep.subr.mxu0 0.0
    %2437 = vmatpush1.msra.mxu0 0.0
    %2438 = vmatprep.subr.mxu0 0.0
    %2439 = vmatpush1.msra.mxu0 0.0
    %2440 = vmatprep.subr.mxu0 0.0
    %2441 = vmatpush1.msra.mxu0 0.0
    %2442 = vmatprep.subr.mxu0 0.0
    %2443 = vmatpush1.msra.mxu0 0.0
    %2444 = vmatprep.mubr.f32.mxu0 0.0
    %2445 = vmatmul.mubr.f32.gmra.mrb[0].mxu0 %v2369
    %v2446 = vpop.f32.mrb[0].mxu0
    %v2447 = vadd.f32 %v2366, %v2446
    %v2448 = vpop.f32.mrb[0].mxu0
    %2449 = vmatprep.mubr.f32.mxu0 0.0
    %2450 = vmatmul.mubr.f32.gmra.mrb[0].mxu0 %v2372
    %v2451 = vpop.f32.mrb[0].mxu0
    %v2452 = vadd.f32 %v2366, %v2451
    %v2453 = vpop.f32.mrb[0].mxu0
    %2454 = vmatprep.mubr.f32.mxu0 0.0
    %2455 = vmatmul.mubr.f32.gmra.mrb[0].mxu0 %v2375
    %v2456 = vpop.f32.mrb[0].mxu0
    %v2457 = vadd.f32 %v2366, %v2456
    %v2458 = vpop.f32.mrb[0].mxu0
    %2459 = vmatprep.mubr.f32.mxu0 0.0
    %2460 = vmatmul.mubr.f32.gmra.mrb[0].mxu0 %v2378
    %v2461 = vpop.f32.mrb[0].mxu0
    %v2462 = vadd.f32 %v2366, %v2461
    %v2463 = vpop.f32.mrb[0].mxu0
    %2464 = vdwg.mxu0
    %v2465 = vadd.f32 %v2233, %v2447
    %v2466 = vadd.f32 %v2234, %v2452
    %v2467 = vadd.f32 %v2235, %v2457
    %v2468 = vadd.f32 %v2236, %v2462
    %s2469 = scalar_lea.vmem %s21, 3
    %v2470 = vld [vmem:[%s2469] sm:$0x1]
    %s2471 = scalar_lea.vmem %s22, 3
    %v2472 = vld [vmem:[%s2471] sm:$0x1]
    %v2473 = vsel %vm488, %v2465, 0.0
    %2474 = vadd.xlane.f32.xlu0 %v2473
    %v2475 = vpop.xlane.xlu0 %2474
    %v2476 = vsel %vm488, %v2466, 0.0
    %2477 = vadd.xlane.f32.xlu0 %v2476
    %v2478 = vpop.xlane.xlu0 %2477
    %v2479 = vsel %vm488, %v2467, 0.0
    %2480 = vadd.xlane.f32.xlu0 %v2479
    %v2481 = vpop.xlane.xlu0 %2480
    %v2482 = vsel %vm488, %v2468, 0.0
    %2483 = vadd.xlane.f32.xlu0 %v2482
    %v2484 = vpop.xlane.xlu0 %2483
    %v2485 = vmul.f32 %v2475, %v604
    %v2486 = vmul.f32 %v2478, %v604
    %v2487 = vmul.f32 %v2481, %v604
    %v2488 = vmul.f32 %v2484, %v604
    %v2489 = vmul.f32 %v2465, %v2465
    %v2490 = vmul.f32 %v2466, %v2466
    %v2491 = vmul.f32 %v2467, %v2467
    %v2492 = vmul.f32 %v2468, %v2468
    %v2493 = vsel %vm488, %v2489, 0.0
    %2494 = vadd.xlane.f32.xlu0 %v2493
    %v2495 = vpop.xlane.xlu0 %2494
    %v2496 = vsel %vm488, %v2490, 0.0
    %2497 = vadd.xlane.f32.xlu0 %v2496
    %v2498 = vpop.xlane.xlu0 %2497
    %v2499 = vsel %vm488, %v2491, 0.0
    %2500 = vadd.xlane.f32.xlu0 %v2499
    %v2501 = vpop.xlane.xlu0 %2500
    %v2502 = vsel %vm488, %v2492, 0.0
    %2503 = vadd.xlane.f32.xlu0 %v2502
    %v2504 = vpop.xlane.xlu0 %2503
    %v2505 = vmul.f32 %v2495, %v604
    %v2506 = vmul.f32 %v2498, %v604
    %v2507 = vmul.f32 %v2501, %v604
    %v2508 = vmul.f32 %v2504, %v604
    %v2509 = vmul.f32 %v2485, %v2485
    %v2510 = vmul.f32 %v2486, %v2486
    %v2511 = vmul.f32 %v2487, %v2487
    %v2512 = vmul.f32 %v2488, %v2488
    %v2513 = vsub.f32 %v2505, %v2509
    %v2514 = vsub.f32 %v2506, %v2510
    %v2515 = vsub.f32 %v2507, %v2511
    %v2516 = vsub.f32 %v2508, %v2512
    %v2517 = vmax.f32 %v2513, 0.0
    %v2518 = vmax.f32 %v2514, 0.0
    %v2519 = vmax.f32 %v2515, 0.0
    %v2520 = vmax.f32 %v2516, 0.0
    %v2521 = vsub.f32 %v2465, %v2485
    %v2522 = vsub.f32 %v2466, %v2486
    %v2523 = vsub.f32 %v2467, %v2487
    %v2524 = vsub.f32 %v2468, %v2488
    %v2525 = vadd.f32 %v2517, 1e-05
    %v2526 = vadd.f32 %v2518, 1e-05
    %v2527 = vadd.f32 %v2519, 1e-05
    %v2528 = vadd.f32 %v2520, 1e-05
    %v2529 = vrsqrt.pop %v2525
    %v2530 = vrsqrt.pop %v2526
    %v2531 = vrsqrt.pop %v2527
    %v2532 = vrsqrt.pop %v2528
    %v2533 = vmul.f32 %v2521, %v2529
    %v2534 = vmul.f32 %v2522, %v2530
    %v2535 = vmul.f32 %v2523, %v2531
    %v2536 = vmul.f32 %v2524, %v2532
    %v2538 = vlaneseq
    %v2539 = vshrl.u32 %v2538, 7
    %v2540 = vsub.s32 0, %v2539
    %v2541 = vrot.slane %v2470, %v2540
    %v2543 = vmul.f32 %v2533, %v2541
    %v2544 = vmul.f32 %v2534, %v2541
    %v2545 = vmul.f32 %v2535, %v2541
    %v2546 = vmul.f32 %v2536, %v2541
    %v2548 = vlaneseq
    %v2549 = vshrl.u32 %v2548, 7
    %v2550 = vsub.s32 0, %v2549
    %v2551 = vrot.slane %v2472, %v2550
    %v2553 = vadd.f32 %v2543, %v2551
    %v2554 = vadd.f32 %v2544, %v2551
    %v2555 = vadd.f32 %v2545, %v2551
    %v2556 = vadd.f32 %v2546, %v2551
    %v2557 = vld [vmem:[%s24] sm:$0x3]
    %v2558 = vld [vmem:[%s23] sm:$0xff]
    %v2559 = vld [vmem:[%s23 + $0x8] sm:$0xff]
    %v2560 = vld [vmem:[%s23 + $0x10] sm:$0xff]
    %v2561 = vld [vmem:[%s23 + $0x18] sm:$0xff]
    %v2562 = vld [vmem:[%s23 + $0x20] sm:$0xff]
    %v2563 = vld [vmem:[%s23 + $0x28] sm:$0xff]
    %v2564 = vld [vmem:[%s23 + $0x30] sm:$0xff]
    %v2565 = vld [vmem:[%s23 + $0x38] sm:$0xff]
    %v2567 = vsel %vm488, %v2553, 0
    %2569 = vmatprep.subr.mxu0 %v2559
    %2570 = vmatpush1.msra.mxu0 %v2558
    %2571 = vmatprep.subr.mxu0 %v2561
    %2572 = vmatpush1.msra.mxu0 %v2560
    %2573 = vmatprep.subr.mxu0 %v2563
    %2574 = vmatpush1.msra.mxu0 %v2562
    %2575 = vmatprep.subr.mxu0 %v2565
    %2576 = vmatpush1.msra.mxu0 %v2564
    %2577 = vmatprep.subr.mxu0 0.0
    %2578 = vmatpush1.msra.mxu0 0.0
    %2579 = vmatprep.subr.mxu0 0.0
    %2580 = vmatpush1.msra.mxu0 0.0
    %2581 = vmatprep.subr.mxu0 0.0
    %2582 = vmatpush1.msra.mxu0 0.0
    %2583 = vmatprep.subr.mxu0 0.0
    %2584 = vmatpush1.msra.mxu0 0.0
    %2585 = vmatprep.subr.mxu0 0.0
    %2586 = vmatpush1.msra.mxu0 0.0
    %2587 = vmatprep.subr.mxu0 0.0
    %2588 = vmatpush1.msra.mxu0 0.0
    %2589 = vmatprep.subr.mxu0 0.0
    %2590 = vmatpush1.msra.mxu0 0.0
    %2591 = vmatprep.subr.mxu0 0.0
    %2592 = vmatpush1.msra.mxu0 0.0
    %2593 = vmatprep.subr.mxu0 0.0
    %2594 = vmatpush1.msra.mxu0 0.0
    %2595 = vmatprep.subr.mxu0 0.0
    %2596 = vmatpush1.msra.mxu0 0.0
    %2597 = vmatprep.subr.mxu0 0.0
    %2598 = vmatpush1.msra.mxu0 0.0
    %2599 = vmatprep.subr.mxu0 0.0
    %2600 = vmatpush1.msra.mxu0 0.0
    %2601 = vmatprep.subr.mxu0 0.0
    %2602 = vmatpush1.msra.mxu0 0.0
    %2603 = vmatprep.subr.mxu0 0.0
    %2604 = vmatpush1.msra.mxu0 0.0
    %2605 = vmatprep.subr.mxu0 0.0
    %2606 = vmatpush1.msra.mxu0 0.0
    %2607 = vmatprep.subr.mxu0 0.0
    %2608 = vmatpush1.msra.mxu0 0.0
    %2609 = vmatprep.subr.mxu0 0.0
    %2610 = vmatpush1.msra.mxu0 0.0
    %2611 = vmatprep.subr.mxu0 0.0
    %2612 = vmatpush1.msra.mxu0 0.0
    %2613 = vmatprep.subr.mxu0 0.0
    %2614 = vmatpush1.msra.mxu0 0.0
    %2615 = vmatprep.subr.mxu0 0.0
    %2616 = vmatpush1.msra.mxu0 0.0
    %2617 = vmatprep.subr.mxu0 0.0
    %2618 = vmatpush1.msra.mxu0 0.0
    %2619 = vmatprep.subr.mxu0 0.0
    %2620 = vmatpush1.msra.mxu0 0.0
    %2621 = vmatprep.subr.mxu0 0.0
    %2622 = vmatpush1.msra.mxu0 0.0
    %2623 = vmatprep.subr.mxu0 0.0
    %2624 = vmatpush1.msra.mxu0 0.0
    %2625 = vmatprep.subr.mxu0 0.0
    %2626 = vmatpush1.msra.mxu0 0.0
    %2627 = vmatprep.subr.mxu0 0.0
    %2628 = vmatpush1.msra.mxu0 0.0
    %2629 = vmatprep.subr.mxu0 0.0
    %2630 = vmatpush1.msra.mxu0 0.0
    %2631 = vmatprep.subr.mxu0 0.0
    %2632 = vmatpush1.msra.mxu0 0.0
    %2633 = vmatprep.mubr.f32.mxu0 0.0
    %2634 = vmatmul.mubr.f32.gmra.mrb[0].mxu0 %v2567
    %v2635 = vpop.f32.mrb[0].mxu0
    %v2636 = vadd.f32 0.0, %v2635
    %v2637 = vpop.f32.mrb[0].mxu0
    %v2638 = vadd.f32 0.0, %v2637
    %2639 = vdwg.mxu0
    %v2641 = vlaneseq
    %v2642 = vshrl.u32 %v2641, 7
    %v2643 = vsub.s32 0, %v2642
    %v2644 = vrot.slane %v2557, %v2643
    %v2645 = vlaneseq
    %v2646 = vshrl.u32 %v2645, 7
    %v2647 = vsub.s32 1, %v2646
    %v2648 = vrot.slane %v2557, %v2647
    %v2651 = vadd.f32 %v2644, %v2636
    %v2652 = vadd.f32 %v2648, %v2638
    %v2653 = vld [vmem:[%s23 + $0x40] sm:$0xff]
    %v2654 = vld [vmem:[%s23 + $0x48] sm:$0xff]
    %v2655 = vld [vmem:[%s23 + $0x50] sm:$0xff]
    %v2656 = vld [vmem:[%s23 + $0x58] sm:$0xff]
    %v2657 = vld [vmem:[%s23 + $0x60] sm:$0xff]
    %v2658 = vld [vmem:[%s23 + $0x68] sm:$0xff]
    %v2659 = vld [vmem:[%s23 + $0x70] sm:$0xff]
    %v2660 = vld [vmem:[%s23 + $0x78] sm:$0xff]
    %v2662 = vsel %vm488, %v2554, 0
    %2664 = vmatprep.subr.mxu0 %v2654
    %2665 = vmatpush1.msra.mxu0 %v2653
    %2666 = vmatprep.subr.mxu0 %v2656
    %2667 = vmatpush1.msra.mxu0 %v2655
    %2668 = vmatprep.subr.mxu0 %v2658
    %2669 = vmatpush1.msra.mxu0 %v2657
    %2670 = vmatprep.subr.mxu0 %v2660
    %2671 = vmatpush1.msra.mxu0 %v2659
    %2672 = vmatprep.subr.mxu0 0.0
    %2673 = vmatpush1.msra.mxu0 0.0
    %2674 = vmatprep.subr.mxu0 0.0
    %2675 = vmatpush1.msra.mxu0 0.0
    %2676 = vmatprep.subr.mxu0 0.0
    %2677 = vmatpush1.msra.mxu0 0.0
    %2678 = vmatprep.subr.mxu0 0.0
    %2679 = vmatpush1.msra.mxu0 0.0
    %2680 = vmatprep.subr.mxu0 0.0
    %2681 = vmatpush1.msra.mxu0 0.0
    %2682 = vmatprep.subr.mxu0 0.0
    %2683 = vmatpush1.msra.mxu0 0.0
    %2684 = vmatprep.subr.mxu0 0.0
    %2685 = vmatpush1.msra.mxu0 0.0
    %2686 = vmatprep.subr.mxu0 0.0
    %2687 = vmatpush1.msra.mxu0 0.0
    %2688 = vmatprep.subr.mxu0 0.0
    %2689 = vmatpush1.msra.mxu0 0.0
    %2690 = vmatprep.subr.mxu0 0.0
    %2691 = vmatpush1.msra.mxu0 0.0
    %2692 = vmatprep.subr.mxu0 0.0
    %2693 = vmatpush1.msra.mxu0 0.0
    %2694 = vmatprep.subr.mxu0 0.0
    %2695 = vmatpush1.msra.mxu0 0.0
    %2696 = vmatprep.subr.mxu0 0.0
    %2697 = vmatpush1.msra.mxu0 0.0
    %2698 = vmatprep.subr.mxu0 0.0
    %2699 = vmatpush1.msra.mxu0 0.0
    %2700 = vmatprep.subr.mxu0 0.0
    %2701 = vmatpush1.msra.mxu0 0.0
    %2702 = vmatprep.subr.mxu0 0.0
    %2703 = vmatpush1.msra.mxu0 0.0
    %2704 = vmatprep.subr.mxu0 0.0
    %2705 = vmatpush1.msra.mxu0 0.0
    %2706 = vmatprep.subr.mxu0 0.0
    %2707 = vmatpush1.msra.mxu0 0.0
    %2708 = vmatprep.subr.mxu0 0.0
    %2709 = vmatpush1.msra.mxu0 0.0
    %2710 = vmatprep.subr.mxu0 0.0
    %2711 = vmatpush1.msra.mxu0 0.0
    %2712 = vmatprep.subr.mxu0 0.0
    %2713 = vmatpush1.msra.mxu0 0.0
    %2714 = vmatprep.subr.mxu0 0.0
    %2715 = vmatpush1.msra.mxu0 0.0
    %2716 = vmatprep.subr.mxu0 0.0
    %2717 = vmatpush1.msra.mxu0 0.0
    %2718 = vmatprep.subr.mxu0 0.0
    %2719 = vmatpush1.msra.mxu0 0.0
    %2720 = vmatprep.subr.mxu0 0.0
    %2721 = vmatpush1.msra.mxu0 0.0
    %2722 = vmatprep.subr.mxu0 0.0
    %2723 = vmatpush1.msra.mxu0 0.0
    %2724 = vmatprep.subr.mxu0 0.0
    %2725 = vmatpush1.msra.mxu0 0.0
    %2726 = vmatprep.subr.mxu0 0.0
    %2727 = vmatpush1.msra.mxu0 0.0
    %2728 = vmatprep.mubr.f32.mxu0 0.0
    %2729 = vmatmul.mubr.f32.gmra.mrb[0].mxu0 %v2662
    %v2730 = vpop.f32.mrb[0].mxu0
    %v2731 = vadd.f32 0.0, %v2730
    %v2732 = vpop.f32.mrb[0].mxu0
    %v2733 = vadd.f32 0.0, %v2732
    %2734 = vdwg.mxu0
    %v2735 = vadd.f32 %v2651, %v2731
    %v2736 = vadd.f32 %v2652, %v2733
    %v2737 = vld [vmem:[%s23 + $0x80] sm:$0xff]
    %v2738 = vld [vmem:[%s23 + $0x88] sm:$0xff]
    %v2739 = vld [vmem:[%s23 + $0x90] sm:$0xff]
    %v2740 = vld [vmem:[%s23 + $0x98] sm:$0xff]
    %v2741 = vld [vmem:[%s23 + $0xa0] sm:$0xff]
    %v2742 = vld [vmem:[%s23 + $0xa8] sm:$0xff]
    %v2743 = vld [vmem:[%s23 + $0xb0] sm:$0xff]
    %v2744 = vld [vmem:[%s23 + $0xb8] sm:$0xff]
    %v2746 = vsel %vm488, %v2555, 0
    %2748 = vmatprep.subr.mxu0 %v2738
    %2749 = vmatpush1.msra.mxu0 %v2737
    %2750 = vmatprep.subr.mxu0 %v2740
    %2751 = vmatpush1.msra.mxu0 %v2739
    %2752 = vmatprep.subr.mxu0 %v2742
    %2753 = vmatpush1.msra.mxu0 %v2741
    %2754 = vmatprep.subr.mxu0 %v2744
    %2755 = vmatpush1.msra.mxu0 %v2743
    %2756 = vmatprep.subr.mxu0 0.0
    %2757 = vmatpush1.msra.mxu0 0.0
    %2758 = vmatprep.subr.mxu0 0.0
    %2759 = vmatpush1.msra.mxu0 0.0
    %2760 = vmatprep.subr.mxu0 0.0
    %2761 = vmatpush1.msra.mxu0 0.0
    %2762 = vmatprep.subr.mxu0 0.0
    %2763 = vmatpush1.msra.mxu0 0.0
    %2764 = vmatprep.subr.mxu0 0.0
    %2765 = vmatpush1.msra.mxu0 0.0
    %2766 = vmatprep.subr.mxu0 0.0
    %2767 = vmatpush1.msra.mxu0 0.0
    %2768 = vmatprep.subr.mxu0 0.0
    %2769 = vmatpush1.msra.mxu0 0.0
    %2770 = vmatprep.subr.mxu0 0.0
    %2771 = vmatpush1.msra.mxu0 0.0
    %2772 = vmatprep.subr.mxu0 0.0
    %2773 = vmatpush1.msra.mxu0 0.0
    %2774 = vmatprep.subr.mxu0 0.0
    %2775 = vmatpush1.msra.mxu0 0.0
    %2776 = vmatprep.subr.mxu0 0.0
    %2777 = vmatpush1.msra.mxu0 0.0
    %2778 = vmatprep.subr.mxu0 0.0
    %2779 = vmatpush1.msra.mxu0 0.0
    %2780 = vmatprep.subr.mxu0 0.0
    %2781 = vmatpush1.msra.mxu0 0.0
    %2782 = vmatprep.subr.mxu0 0.0
    %2783 = vmatpush1.msra.mxu0 0.0
    %2784 = vmatprep.subr.mxu0 0.0
    %2785 = vmatpush1.msra.mxu0 0.0
    %2786 = vmatprep.subr.mxu0 0.0
    %2787 = vmatpush1.msra.mxu0 0.0
    %2788 = vmatprep.subr.mxu0 0.0
    %2789 = vmatpush1.msra.mxu0 0.0
    %2790 = vmatprep.subr.mxu0 0.0
    %2791 = vmatpush1.msra.mxu0 0.0
    %2792 = vmatprep.subr.mxu0 0.0
    %2793 = vmatpush1.msra.mxu0 0.0
    %2794 = vmatprep.subr.mxu0 0.0
    %2795 = vmatpush1.msra.mxu0 0.0
    %2796 = vmatprep.subr.mxu0 0.0
    %2797 = vmatpush1.msra.mxu0 0.0
    %2798 = vmatprep.subr.mxu0 0.0
    %2799 = vmatpush1.msra.mxu0 0.0
    %2800 = vmatprep.subr.mxu0 0.0
    %2801 = vmatpush1.msra.mxu0 0.0
    %2802 = vmatprep.subr.mxu0 0.0
    %2803 = vmatpush1.msra.mxu0 0.0
    %2804 = vmatprep.subr.mxu0 0.0
    %2805 = vmatpush1.msra.mxu0 0.0
    %2806 = vmatprep.subr.mxu0 0.0
    %2807 = vmatpush1.msra.mxu0 0.0
    %2808 = vmatprep.subr.mxu0 0.0
    %2809 = vmatpush1.msra.mxu0 0.0
    %2810 = vmatprep.subr.mxu0 0.0
    %2811 = vmatpush1.msra.mxu0 0.0
    %2812 = vmatprep.mubr.f32.mxu0 0.0
    %2813 = vmatmul.mubr.f32.gmra.mrb[0].mxu0 %v2746
    %v2814 = vpop.f32.mrb[0].mxu0
    %v2815 = vadd.f32 0.0, %v2814
    %v2816 = vpop.f32.mrb[0].mxu0
    %v2817 = vadd.f32 0.0, %v2816
    %2818 = vdwg.mxu0
    %v2819 = vadd.f32 %v2735, %v2815
    %v2820 = vadd.f32 %v2736, %v2817
    %v2821 = vld [vmem:[%s23 + $0xc0] sm:$0xff]
    %v2822 = vld [vmem:[%s23 + $0xc8] sm:$0xff]
    %v2823 = vld [vmem:[%s23 + $0xd0] sm:$0xff]
    %v2824 = vld [vmem:[%s23 + $0xd8] sm:$0xff]
    %v2825 = vld [vmem:[%s23 + $0xe0] sm:$0xff]
    %v2826 = vld [vmem:[%s23 + $0xe8] sm:$0xff]
    %v2827 = vld [vmem:[%s23 + $0xf0] sm:$0xff]
    %v2828 = vld [vmem:[%s23 + $0xf8] sm:$0xff]
    %v2830 = vsel %vm488, %v2556, 0
    %2832 = vmatprep.subr.mxu0 %v2822
    %2833 = vmatpush1.msra.mxu0 %v2821
    %2834 = vmatprep.subr.mxu0 %v2824
    %2835 = vmatpush1.msra.mxu0 %v2823
    %2836 = vmatprep.subr.mxu0 %v2826
    %2837 = vmatpush1.msra.mxu0 %v2825
    %2838 = vmatprep.subr.mxu0 %v2828
    %2839 = vmatpush1.msra.mxu0 %v2827
    %2840 = vmatprep.subr.mxu0 0.0
    %2841 = vmatpush1.msra.mxu0 0.0
    %2842 = vmatprep.subr.mxu0 0.0
    %2843 = vmatpush1.msra.mxu0 0.0
    %2844 = vmatprep.subr.mxu0 0.0
    %2845 = vmatpush1.msra.mxu0 0.0
    %2846 = vmatprep.subr.mxu0 0.0
    %2847 = vmatpush1.msra.mxu0 0.0
    %2848 = vmatprep.subr.mxu0 0.0
    %2849 = vmatpush1.msra.mxu0 0.0
    %2850 = vmatprep.subr.mxu0 0.0
    %2851 = vmatpush1.msra.mxu0 0.0
    %2852 = vmatprep.subr.mxu0 0.0
    %2853 = vmatpush1.msra.mxu0 0.0
    %2854 = vmatprep.subr.mxu0 0.0
    %2855 = vmatpush1.msra.mxu0 0.0
    %2856 = vmatprep.subr.mxu0 0.0
    %2857 = vmatpush1.msra.mxu0 0.0
    %2858 = vmatprep.subr.mxu0 0.0
    %2859 = vmatpush1.msra.mxu0 0.0
    %2860 = vmatprep.subr.mxu0 0.0
    %2861 = vmatpush1.msra.mxu0 0.0
    %2862 = vmatprep.subr.mxu0 0.0
    %2863 = vmatpush1.msra.mxu0 0.0
    %2864 = vmatprep.subr.mxu0 0.0
    %2865 = vmatpush1.msra.mxu0 0.0
    %2866 = vmatprep.subr.mxu0 0.0
    %2867 = vmatpush1.msra.mxu0 0.0
    %2868 = vmatprep.subr.mxu0 0.0
    %2869 = vmatpush1.msra.mxu0 0.0
    %2870 = vmatprep.subr.mxu0 0.0
    %2871 = vmatpush1.msra.mxu0 0.0
    %2872 = vmatprep.subr.mxu0 0.0
    %2873 = vmatpush1.msra.mxu0 0.0
    %2874 = vmatprep.subr.mxu0 0.0
    %2875 = vmatpush1.msra.mxu0 0.0
    %2876 = vmatprep.subr.mxu0 0.0
    %2877 = vmatpush1.msra.mxu0 0.0
    %2878 = vmatprep.subr.mxu0 0.0
    %2879 = vmatpush1.msra.mxu0 0.0
    %2880 = vmatprep.subr.mxu0 0.0
    %2881 = vmatpush1.msra.mxu0 0.0
    %2882 = vmatprep.subr.mxu0 0.0
    %2883 = vmatpush1.msra.mxu0 0.0
    %2884 = vmatprep.subr.mxu0 0.0
    %2885 = vmatpush1.msra.mxu0 0.0
    %2886 = vmatprep.subr.mxu0 0.0
    %2887 = vmatpush1.msra.mxu0 0.0
    %2888 = vmatprep.subr.mxu0 0.0
    %2889 = vmatpush1.msra.mxu0 0.0
    %2890 = vmatprep.subr.mxu0 0.0
    %2891 = vmatpush1.msra.mxu0 0.0
    %2892 = vmatprep.subr.mxu0 0.0
    %2893 = vmatpush1.msra.mxu0 0.0
    %2894 = vmatprep.subr.mxu0 0.0
    %2895 = vmatpush1.msra.mxu0 0.0
    %2896 = vmatprep.mubr.f32.mxu0 0.0
    %2897 = vmatmul.mubr.f32.gmra.mrb[0].mxu0 %v2830
    %v2898 = vpop.f32.mrb[0].mxu0
    %v2899 = vadd.f32 0.0, %v2898
    %v2900 = vpop.f32.mrb[0].mxu0
    %v2901 = vadd.f32 0.0, %v2900
    %2902 = vdwg.mxu0
    %v2903 = vadd.f32 %v2819, %v2899
    %v2904 = vadd.f32 %v2820, %v2901
    %v2905 = vmax.f32 %v2903, 0.0
    %v2906 = vmax.f32 %v2904, 0.0
    %v2907 = vld [vmem:[%s25] sm:$0xff]
    %v2908 = vld [vmem:[%s25 + $0x8] sm:$0xff]
    %v2909 = vld [vmem:[%s25 + $0x10] sm:$0xff]
    %v2910 = vld [vmem:[%s25 + $0x18] sm:$0xff]
    %v2911 = vld [vmem:[%s25 + $0x20] sm:$0xff]
    %v2912 = vld [vmem:[%s25 + $0x28] sm:$0xff]
    %v2913 = vld [vmem:[%s25 + $0x30] sm:$0xff]
    %v2914 = vld [vmem:[%s25 + $0x38] sm:$0xff]
    %v2915 = vld [vmem:[%s25 + $0x40] sm:$0xff]
    %v2916 = vld [vmem:[%s25 + $0x48] sm:$0xff]
    %v2917 = vld [vmem:[%s25 + $0x50] sm:$0xff]
    %v2918 = vld [vmem:[%s25 + $0x58] sm:$0xff]
    %v2919 = vld [vmem:[%s25 + $0x60] sm:$0xff]
    %v2920 = vld [vmem:[%s25 + $0x68] sm:$0xff]
    %v2921 = vld [vmem:[%s25 + $0x70] sm:$0xff]
    %v2922 = vld [vmem:[%s25 + $0x78] sm:$0xff]
    %v2923 = vld [vmem:[%s25 + $0x80] sm:$0xff]
    %v2924 = vld [vmem:[%s25 + $0x88] sm:$0xff]
    %v2925 = vld [vmem:[%s25 + $0x90] sm:$0xff]
    %v2926 = vld [vmem:[%s25 + $0x98] sm:$0xff]
    %v2927 = vld [vmem:[%s25 + $0xa0] sm:$0xff]
    %v2928 = vld [vmem:[%s25 + $0xa8] sm:$0xff]
    %v2929 = vld [vmem:[%s25 + $0xb0] sm:$0xff]
    %v2930 = vld [vmem:[%s25 + $0xb8] sm:$0xff]
    %v2931 = vld [vmem:[%s25 + $0xc0] sm:$0xff]
    %v2932 = vld [vmem:[%s25 + $0xc8] sm:$0xff]
    %v2933 = vld [vmem:[%s25 + $0xd0] sm:$0xff]
    %v2934 = vld [vmem:[%s25 + $0xd8] sm:$0xff]
    %v2935 = vld [vmem:[%s25 + $0xe0] sm:$0xff]
    %v2936 = vld [vmem:[%s25 + $0xe8] sm:$0xff]
    %v2937 = vld [vmem:[%s25 + $0xf0] sm:$0xff]
    %v2938 = vld [vmem:[%s25 + $0xf8] sm:$0xff]
    %v2939 = vld [vmem:[%s26] sm:$0x1]
    %v2941 = vlaneseq
    %v2942 = vshrl.u32 %v2941, 7
    %v2943 = vsub.s32 0, %v2942
    %v2944 = vrot.slane %v2939, %v2943
    %2946 = vmatprep.subr.mxu0 0.0
    %2947 = vmatpush1.msra.mxu0 %v2907
    %2948 = vmatprep.subr.mxu0 0.0
    %2949 = vmatpush1.msra.mxu0 %v2908
    %2950 = vmatprep.subr.mxu0 0.0
    %2951 = vmatpush1.msra.mxu0 %v2909
    %2952 = vmatprep.subr.mxu0 0.0
    %2953 = vmatpush1.msra.mxu0 %v2910
    %2954 = vmatprep.subr.mxu0 0.0
    %2955 = vmatpush1.msra.mxu0 %v2911
    %2956 = vmatprep.subr.mxu0 0.0
    %2957 = vmatpush1.msra.mxu0 %v2912
    %2958 = vmatprep.subr.mxu0 0.0
    %2959 = vmatpush1.msra.mxu0 %v2913
    %2960 = vmatprep.subr.mxu0 0.0
    %2961 = vmatpush1.msra.mxu0 %v2914
    %2962 = vmatprep.subr.mxu0 0.0
    %2963 = vmatpush1.msra.mxu0 %v2915
    %2964 = vmatprep.subr.mxu0 0.0
    %2965 = vmatpush1.msra.mxu0 %v2916
    %2966 = vmatprep.subr.mxu0 0.0
    %2967 = vmatpush1.msra.mxu0 %v2917
    %2968 = vmatprep.subr.mxu0 0.0
    %2969 = vmatpush1.msra.mxu0 %v2918
    %2970 = vmatprep.subr.mxu0 0.0
    %2971 = vmatpush1.msra.mxu0 %v2919
    %2972 = vmatprep.subr.mxu0 0.0
    %2973 = vmatpush1.msra.mxu0 %v2920
    %2974 = vmatprep.subr.mxu0 0.0
    %2975 = vmatpush1.msra.mxu0 %v2921
    %2976 = vmatprep.subr.mxu0 0.0
    %2977 = vmatpush1.msra.mxu0 %v2922
    %2978 = vmatprep.subr.mxu0 0.0
    %2979 = vmatpush1.msra.mxu0 %v2923
    %2980 = vmatprep.subr.mxu0 0.0
    %2981 = vmatpush1.msra.mxu0 %v2924
    %2982 = vmatprep.subr.mxu0 0.0
    %2983 = vmatpush1.msra.mxu0 %v2925
    %2984 = vmatprep.subr.mxu0 0.0
    %2985 = vmatpush1.msra.mxu0 %v2926
    %2986 = vmatprep.subr.mxu0 0.0
    %2987 = vmatpush1.msra.mxu0 %v2927
    %2988 = vmatprep.subr.mxu0 0.0
    %2989 = vmatpush1.msra.mxu0 %v2928
    %2990 = vmatprep.subr.mxu0 0.0
    %2991 = vmatpush1.msra.mxu0 %v2929
    %2992 = vmatprep.subr.mxu0 0.0
    %2993 = vmatpush1.msra.mxu0 %v2930
    %2994 = vmatprep.subr.mxu0 0.0
    %2995 = vmatpush1.msra.mxu0 %v2931
    %2996 = vmatprep.subr.mxu0 0.0
    %2997 = vmatpush1.msra.mxu0 %v2932
    %2998 = vmatprep.subr.mxu0 0.0
    %2999 = vmatpush1.msra.mxu0 %v2933
    %3000 = vmatprep.subr.mxu0 0.0
    %3001 = vmatpush1.msra.mxu0 %v2934
    %3002 = vmatprep.subr.mxu0 0.0
    %3003 = vmatpush1.msra.mxu0 %v2935
    %3004 = vmatprep.subr.mxu0 0.0
    %3005 = vmatpush1.msra.mxu0 %v2936
    %3006 = vmatprep.subr.mxu0 0.0
    %3007 = vmatpush1.msra.mxu0 %v2937
    %3008 = vmatprep.subr.mxu0 0.0
    %3009 = vmatpush1.msra.mxu0 %v2938
    %3010 = vmatprep.mubr.f32.mxu0 %v2906
    %3011 = vmatmul.mubr.f32.gmra.mrb[0].mxu0 %v2905
    %v3012 = vpop.f32.mrb[0].mxu0
    %v3013 = vadd.f32 %v2944, %v3012
    %v3014 = vpop.f32.mrb[0].mxu0
    %3015 = vdwg.mxu0
    %3016 = vst [vmem:[#allocation14] sm:$0xff] %v3013
    // Predicated region
    $region138: #{tpu_custom_call.1} parent=1 // pred_check
      _
    $region139: #{tpu_custom_call.1} parent=1 // pred_check_branch
      %3018 = sbr.rel (0) target = $region141
    $region140: #{tpu_custom_call.1} parent=1 // pred_region
      %s3020 = ssub.s32 128, 128
      %3021 = vsyncadd [#allocation4], %s3020
      %s3023 = sshll.u32 [#allocation14], 4
      %s3024 = int_to_ptr.vmem [resolvable:$true] %s3023
      %3026 = dma.vmem_to_hbm [thread:$0]  %s3024, 128, %s27, [#allocation4]
    $region141: #{tpu_custom_call.1} parent=1 // pred_fallthru
      _
    // Predicated region
    $region142: #{tpu_custom_call.1} parent=1 // pred_check
      _
    $region143: #{tpu_custom_call.1} parent=1 // pred_check_branch
      %3028 = sbr.rel (0) target = $region145
    $region144: #{tpu_custom_call.1} parent=1 // pred_region
      %3029 = dma.done [#allocation4], 128
    $region145: #{tpu_custom_call.1} parent=1 // pred_fallthru
      _
    %3030 = vsyncpa [#allocation3], 1
    %3031 = vsyncpa [#allocation6], 1
    %3032 = vsyncpa [#allocation9], 1
    %3033 = vsyncpa [#allocation12], 1
    %3034 = vsyncpa [#allocation4], 1

</llo_original>
